<compile_context>
chip_gen: v7x
topology: tpu7x:2x2x1
jax: 0.10.0
libtpu: 0.0.40
codegen_flags: <defaults>
</compile_context>

<pallas_src>
import numpy as np
import jax
import jax.numpy as jnp
from jax.experimental import pallas as pl
from jax.experimental.pallas import tpu as pltpu


class Config:
    title_dim = 16            # embed_size of words in a title
    n_filters_title = 32      # hidden size of lstm_titles (2 layers)
    window_len_titles = 4     # window of days
    num_titles = 5            # titles per day
    max_words_in_title = 6
    filter_sz_day = 3
    n_filters_day = 16
    tech_dim = 7              # tech-indicator feature dim
    input_dim_LSTM = n_filters_day + tech_dim  # 23
    n_hidden_LSTM = 32
    num_LSTM_layers = 2       # TODO(synk): fused kernel is written for exactly 2 stacked LSTM layers
    n_outputs = 2


def init_params(cfg, key):
    """Deterministic synthetic weights (no checkpoint load).

    torch nn.LSTM mapping:  wih0 = weight_ih_l0.T, whh0 = weight_hh_l0.T,
    b0 = (bias_ih_l0 + bias_hh_l0)[None, :],  w1 = concat([weight_ih_l1.T, weight_hh_l1.T], 0),
    b1 = (bias_ih_l1 + bias_hh_l1)[None, :].
    conv weight stored as (filter_sz, c_in, c_out) == torch conv weight.permute(2, 1, 0).
    """
    keys = iter(jax.random.split(key, 24))

    def rnd(shape, scale=0.1):
        return (scale * jax.random.normal(next(keys), shape)).astype(jnp.float32)

    H1, H2 = cfg.n_filters_title, cfg.n_hidden_LSTM
    return {
        "lstm_titles": {
            "wih0": rnd((cfg.title_dim, 4 * H1)), "whh0": rnd((H1, 4 * H1)), "b0": rnd((1, 4 * H1)),
            "w1": rnd((2 * H1, 4 * H1)), "b1": rnd((1, 4 * H1)),
        },
        "map_down_embeds_w": rnd((4 * H1, H1)),
        "map_down_embeds_b": rnd((1, H1)),
        "conv_day_w": rnd((cfg.filter_sz_day, H1, cfg.n_filters_day)),
        "conv_day_b": rnd((1, cfg.n_filters_day)),
        "lstm": {
            "wih0": rnd((cfg.input_dim_LSTM, 4 * H2)), "whh0": rnd((H2, 4 * H2)), "b0": rnd((1, 4 * H2)),
            "w1": rnd((2 * H2, 4 * H2)), "b1": rnd((1, 4 * H2)),
        },
        "map_down_w": rnd((2 * cfg.num_LSTM_layers * H2, 64)),
        "map_down_b": rnd((1, 64)),
        "map_to_out_w": rnd((64, cfg.n_outputs)),
        "map_to_out_b": rnd((1, cfg.n_outputs)),
    }


def _pack_weight_slab(blocks):
    """Pack 2-D f32 weight blocks into one lane-dense (rows, 128) bf16 slab.
    Every block starts on an 8-row boundary so every in-kernel slice is tile aligned."""
    offs, bufs, r = {}, [], 0
    for name, a in blocks:
        rows, cols = a.shape
        # TODO(synk): for much larger B*W*T switch the conv selection matrices to pltpu.roll shifts.
        assert cols <= 128, f"{name}: {cols} lanes > 128"
        rpad = ((rows + 7) // 8) * 8
        bufs.append(jnp.zeros((rpad, 128), jnp.float32).at[:rows, :cols].set(a))
        offs[name] = (r, rows, cols)
        r += rpad
    return jnp.concatenate(bufs, axis=0).astype(jnp.bfloat16), offs


def _pack_bias_slab(entries):
    """All (1, c) biases stacked into one (8k, 128) f32 slab."""
    n = len(entries)
    npad = ((n + 7) // 8) * 8
    slab = jnp.zeros((npad, 128), jnp.float32)
    offs = {}
    for i, (name, a) in enumerate(entries):
        c = a.shape[-1]
        slab = slab.at[i, :c].set(jnp.reshape(a, (c,)))
        offs[name] = (i, c)
    return slab, offs


def rcnn_seq_2_forward(params, cfg, titles, tech_indicators):
    B, W, T, E, Lw = titles.shape                       # (batch, days, titles/day, embed, words)
    Wt, Bt, tech_dim = tech_indicators.shape
    assert Wt == W and Bt == B
    H1, H2 = cfg.n_filters_title, cfg.n_hidden_LSTM
    nfd, fsz = cfg.n_filters_day, cfg.filter_sz_day
    NL = cfg.num_LSTM_layers
    assert NL == 2
    n_out = cfg.n_outputs
    N1 = B * W * T                                      # title sequences fed to the first LSTM
    n_days = B * W
    P = T - fsz + 1                                     # conv output length == max-pool window
    Bp = ((B + 7) // 8) * 8                             # day-LSTM batch padded to full sublane tiles
    hid_dim = params["map_down_w"].shape[1]

    # ---------------- host-side prep: cheap XLA views + tiny constant/pack ops ----------------
    # torch: titles.contiguous().view(B*W*T, words, embed) is a RAW reinterpretation of the
    # trailing (embed, words) block as (words, embed); jnp.reshape replicates it exactly.
    titles_seq = jnp.reshape(titles, (B, W, T, Lw, E))
    # word-time-major, sequences ordered (w, b, title) -> every in-kernel slice is aligned.
    titles_tm = jnp.reshape(jnp.transpose(titles_seq, (3, 1, 0, 2, 4)),
                            (Lw * N1, E)).astype(jnp.bfloat16)
    tech_flat = jnp.zeros((W * B, 8), jnp.float32).at[:, :tech_dim].set(
        jnp.reshape(tech_indicators, (W * B, tech_dim))).astype(jnp.bfloat16)

    # tanh(x) == 2*sigmoid(2x) - 1: pre-scale the g-gate columns by 2 so the whole gate slab
    # needs a single sigmoid pass per cell step (halves EUP pushes on the serial recurrence).
    def g2(wb, H):
        return wb.at[..., 2 * H:3 * H].multiply(2.0)

    p1, p2 = params["lstm_titles"], params["lstm"]
    wih0a, whh0a, b0a = g2(p1["wih0"], H1), g2(p1["whh0"], H1), g2(p1["b0"], H1)
    w1a, b1a = g2(p1["w1"], H1), g2(p1["b1"], H1)
    wih0b, whh0b, b0b = g2(p2["wih0"], H2), g2(p2["whh0"], H2), g2(p2["b0"], H2)
    w1b, b1b = g2(p2["w1"], H2), g2(p2["b1"], H2)
    wih0b_tech = jnp.zeros((8, 4 * H2), jnp.float32).at[:tech_dim, :].set(wih0b[nfd:, :])

    # conv "shift" selection matrices: row p*n_days+d of (pad_k @ tap_k) == tap_k[d*T + p + k],
    # so taps combine with plain adds on 8-aligned rows (no unaligned sublane slices in-kernel).
    pads = []
    for k in range(fsz):
        m = np.zeros((P * n_days, N1), np.float32)
        for p in range(P):
            for d in range(n_days):
                m[p * n_days + d, d * T + p + k] = 1.0
        pads.append(jnp.asarray(m))
    # day-LSTM timestep padding (B -> Bp rows per step) done with one constant selection matmul.
    s2 = np.zeros((W * Bp, W * B), np.float32)
    for w in range(W):
        for b in range(B):
            s2[w * Bp + b, w * B + b] = 1.0
    sel2 = jnp.asarray(s2)

    wblocks = [("wih0a", wih0a), ("whh0a", whh0a),
               ("w1a_ih", w1a[:H1]), ("w1a_hh", w1a[H1:]),
               ("wmd_e", params["map_down_embeds_w"])]
    for k in range(fsz):
        wblocks += [(f"wconv{k}", params["conv_day_w"][k]), (f"pad{k}", pads[k])]
    wblocks += [("sel2", sel2), ("wih0b_day", wih0b[:nfd]), ("wih0b_tech", wih0b_tech),
                ("whh0b", whh0b), ("w1b_ih", w1b[:H2]), ("w1b_hh", w1b[H2:]),
                ("wh1", params["map_down_w"]), ("wh2", params["map_to_out_w"])]
    wslab, woffs = _pack_weight_slab(wblocks)

    bslab, boffs = _pack_bias_slab([
        ("b0a", b0a), ("b1a", b1a), ("b_mde", params["map_down_embeds_b"]),
        ("b_conv", params["conv_day_b"]), ("b0b", b0b), ("b1b", b1b),
        ("b_h1", params["map_down_b"]), ("b_h2", params["map_to_out_b"])])

    # --------------------------------------- kernel ---------------------------------------
    def kernel(x1_ref, tech_ref, wpk_ref, bpk_ref, out_ref, gin1_ref):
        f32, bf16 = jnp.float32, jnp.bfloat16

        def wv(name):
            r, rows, cols = woffs[name]
            return wpk_ref[r:r + rows, 0:cols]

        def bv(name):
            r, cols = boffs[name]
            return bpk_ref[r:r + 1, 0:cols]

        def dot(a, b):  # bf16 MXU operands, f32 accumulation
            return jnp.dot(a.astype(bf16), b.astype(bf16), preferred_element_type=f32)

        def gates(g, H):
            # one full-width sigmoid; g-gate columns pre-scaled x2 host-side -> tanh = 2*sig - 1
            sg = jax.nn.sigmoid(g)
            return sg[:, 0:H], sg[:, H:2 * H], 2.0 * sg[:, 2 * H:3 * H] - 1.0, sg[:, 3 * H:4 * H]

        def lstm2(gin_lookup, whh0, w1_ih, w1_hh, b1, n, H, steps):
            """2-layer stacked LSTM; layer-0 input projections are precomputed (gin_lookup)."""
            h0 = jnp.zeros((n, H), f32); c0 = jnp.zeros((n, H), f32)
            h1 = jnp.zeros((n, H), f32); c1 = jnp.zeros((n, H), f32)
            for t in range(steps):                       # static unroll, 4-6 steps
                g0 = gin_lookup(t) + dot(h0, whh0)
                i_g, f_g, g_g, o_g = gates(g0, H)
                c0 = f_g * c0 + i_g * g_g
                h0 = o_g * jnp.tanh(c0)
                # split weights -> no per-step lane concat of [h0 | h1]
                g1 = dot(h0, w1_ih) + dot(h1, w1_hh) + b1
                i_g, f_g, g_g, o_g = gates(g1, H)
                c1 = f_g * c1 + i_g * g_g
                h1 = o_g * jnp.tanh(c1)
            return h0, c0, h1, c1

        # ---- title LSTM: hoisted layer-0 input projection (one MXU pass), parked in scratch ----
        gin1_ref[...] = dot(x1_ref[...], wv("wih0a")) + bv("b0a")
        h0a, c0a, h1a, c1a = lstm2(lambda t: gin1_ref[t * N1:(t + 1) * N1, :],
                                   wv("whh0a"), wv("w1a_ih"), wv("w1a_hh"), bv("b1a"),
                                   N1, H1, Lw)

        # ---- map_down_embeds + ReLU; weight split by row blocks == torch cat(h0,h1,c0,c1) @ W ----
        r0 = woffs["wmd_e"][0]
        mapped = jnp.maximum(
            dot(h0a, wpk_ref[r0:r0 + H1, 0:H1])
            + dot(h1a, wpk_ref[r0 + H1:r0 + 2 * H1, 0:H1])
            + dot(c0a, wpk_ref[r0 + 2 * H1:r0 + 3 * H1, 0:H1])
            + dot(c1a, wpk_ref[r0 + 3 * H1:r0 + 4 * H1, 0:H1])
            + bv("b_mde"), 0.0)                                  # (N1, H1)

        # ---- Conv1d over each day's titles + MaxPool1d + ReLU, fully aligned ----
        conv_rows = bv("b_conv")
        for k in range(fsz):
            tap = dot(mapped, wv(f"wconv{k}"))                   # (N1, nfd), aligned MXU input
            conv_rows = conv_rows + dot(wv(f"pad{k}"), tap)      # (P*n_days, nfd)
        pooled = conv_rows[0:n_days, :]
        for p in range(1, P):
            pooled = jnp.maximum(pooled, conv_rows[p * n_days:(p + 1) * n_days, :])
        day_feats = jnp.maximum(pooled, 0.0)                     # (n_days, nfd), (w,b) day order

        # ---- day LSTM: split input weights (no [day|tech] lane concat), pad steps to 8 rows ----
        gin2_c = (dot(day_feats, wv("wih0b_day"))
                  + dot(tech_ref[...], wv("wih0b_tech")) + bv("b0b"))   # (W*B, 4*H2)
        gin2 = dot(wv("sel2"), gin2_c)                           # (W*Bp, 4*H2), 8-aligned per step
        h0b, c0b, h1b, c1b = lstm2(lambda t: gin2[t * Bp:(t + 1) * Bp, :],
                                   wv("whh0b"), wv("w1b_ih"), wv("w1b_hh"), bv("b1b"),
                                   Bp, H2, W)                    # rows >= B are dead padding

        # ---- torch `hidden.view(B, -1)`: RAW reinterpretation of (NL, B, H2) (mixes batches) ----
        def raw_view(l0, l1):
            pieces = [l0[b:b + 1, :] for b in range(B)] + [l1[b:b + 1, :] for b in range(B)]
            rows = [jnp.concatenate(pieces[i * NL:(i + 1) * NL], axis=1) for i in range(B)]
            return jnp.concatenate(rows, axis=0) if B > 1 else rows[0]

        rv_h = raw_view(h0b, h1b)                                # (B, NL*H2)
        rv_c = raw_view(c0b, c1b)

        # ---- head: map_down (weight split over [hidden|cell]) -> ReLU -> map_to_out -> log_softmax
        rw = woffs["wh1"][0]
        hid = jnp.maximum(dot(rv_h, wpk_ref[rw:rw + NL * H2, 0:hid_dim])
                          + dot(rv_c, wpk_ref[rw + NL * H2:rw + 2 * NL * H2, 0:hid_dim])
                          + bv("b_h1"), 0.0)
        logits = dot(hid, wv("wh2")) + bv("b_h2")
        m = jnp.max(logits, axis=1, keepdims=True)
        out_ref[...] = logits - (m + jnp.log(jnp.sum(jnp.exp(logits - m), axis=1, keepdims=True)))

    vmem = pl.BlockSpec(memory_space=pltpu.MemorySpace.VMEM)
    return pl.pallas_call(
        kernel,
        out_shape=jax.ShapeDtypeStruct((B, n_out), jnp.float32),
        in_specs=[vmem] * 4,
        out_specs=vmem,
        scratch_shapes=[pltpu.VMEM((Lw * N1, 4 * H1), jnp.float32)],   # hoisted layer-0 gates
    )(titles_tm, tech_flat, wslab, bslab)


if __name__ == "__main__":
    cfg = Config()
    key = jax.random.PRNGKey(0)
    k_titles, k_tech, k_params = jax.random.split(key, 3)

    B = 2
    titles = jax.random.normal(
        k_titles,
        (B, cfg.window_len_titles, cfg.num_titles, cfg.title_dim, cfg.max_words_in_title),
        dtype=jnp.float32)
    tech_indicators = jax.random.normal(
        k_tech, (cfg.window_len_titles, B, cfg.tech_dim), dtype=jnp.float32)

    params = init_params(cfg, k_params)

    fwd = jax.jit(lambda p, t, ti: rcnn_seq_2_forward(p, cfg, t, ti))
    out = jax.block_until_ready(fwd(params, titles, tech_indicators))

    assert out.shape == (B, cfg.n_outputs), out.shape
    assert bool(jnp.all(jnp.isfinite(out)))
    # log_softmax rows should exponentiate-sum to ~1.
    assert bool(jnp.allclose(jnp.sum(jnp.exp(out), axis=1), 1.0, atol=1e-4))
    print("KERNEL_OK")
</pallas_src>

<mosaic_0001>
module attributes {stable_mosaic.version = 11 : i64} {
  func.func @kernel(%arg0: memref<240x16xbf16, #tpu.memory_space<vmem>>, %arg1: memref<8x8xbf16, #tpu.memory_space<vmem>>, %arg2: memref<752x128xbf16, #tpu.memory_space<vmem>>, %arg3: memref<8x128xf32, #tpu.memory_space<vmem>>, %arg4: memref<2x2xf32, #tpu.memory_space<vmem>>, %arg5: memref<240x128xf32, #tpu.memory_space<vmem>>) attributes {dimension_semantics = [], scalar_prefetch = 0 : i64, scratch_operands = 1 : i64, tpu.core_type = #tpu.core_type<tc>} {
    %c0 = arith.constant 0 : index
    %c0_0 = arith.constant 0 : index
    %0 = vector.load %arg0[%c0, %c0_0] : memref<240x16xbf16, #tpu.memory_space<vmem>>, vector<240x16xbf16>
    %c0_1 = arith.constant 0 : index
    %c0_2 = arith.constant 0 : index
    %1 = vector.load %arg2[%c0_1, %c0_2] : memref<752x128xbf16, #tpu.memory_space<vmem>>, vector<16x128xbf16>
    %cst = arith.constant dense<0.000000e+00> : vector<240x128xf32>
    %2 = tpu.matmul %0, %1, %cst {dimension_numbers = #tpu.dot_dimension_numbers<[1], [0], [0], [1], [0, 0, 1, 1], [], []>} : vector<240x16xbf16>, vector<16x128xbf16>, vector<240x128xf32> -> vector<240x128xf32>
    %c0_3 = arith.constant 0 : index
    %c0_4 = arith.constant 0 : index
    %3 = vector.load %arg3[%c0_3, %c0_4] : memref<8x128xf32, #tpu.memory_space<vmem>>, vector<1x128xf32>
    %4 = vector.broadcast %3 : vector<1x128xf32> to vector<240x128xf32>
    %5 = arith.addf %2, %4 : vector<240x128xf32>
    %c0_5 = arith.constant 0 : index
    %c0_6 = arith.constant 0 : index
    %6 = vector.load %arg5[%c0_5, %c0_6] : memref<240x128xf32, #tpu.memory_space<vmem>>, vector<240x128xf32>
    tpu.vector_store %arg5[%c0_5, %c0_6], %5 {strides = array<i32>} : memref<240x128xf32, #tpu.memory_space<vmem>>, vector<240x128xf32>,
    %c16 = arith.constant 16 : index
    %c0_7 = arith.constant 0 : index
    %7 = vector.load %arg2[%c16, %c0_7] : memref<752x128xbf16, #tpu.memory_space<vmem>>, vector<32x128xbf16>
    %c48 = arith.constant 48 : index
    %c0_8 = arith.constant 0 : index
    %8 = vector.load %arg2[%c48, %c0_8] : memref<752x128xbf16, #tpu.memory_space<vmem>>, vector<32x128xbf16>
    %c80 = arith.constant 80 : index
    %c0_9 = arith.constant 0 : index
    %9 = vector.load %arg2[%c80, %c0_9] : memref<752x128xbf16, #tpu.memory_space<vmem>>, vector<32x128xbf16>
    %c1 = arith.constant 1 : index
    %c0_10 = arith.constant 0 : index
    %10 = vector.load %arg3[%c1, %c0_10] : memref<8x128xf32, #tpu.memory_space<vmem>>, vector<1x128xf32>
    %cst_11 = arith.constant 0.000000e+00 : f32
    %11 = vector.broadcast %cst_11 : f32 to vector<40x32xf32>
    %cst_12 = arith.constant 0.000000e+00 : f32
    %12 = vector.broadcast %cst_12 : f32 to vector<40x32xf32>
    %cst_13 = arith.constant 0.000000e+00 : f32
    %13 = vector.broadcast %cst_13 : f32 to vector<40x32xf32>
    %cst_14 = arith.constant 0.000000e+00 : f32
    %14 = vector.broadcast %cst_14 : f32 to vector<40x32xf32>
    %c0_15 = arith.constant 0 : index
    %c0_16 = arith.constant 0 : index
    %15 = vector.load %arg5[%c0_15, %c0_16] : memref<240x128xf32, #tpu.memory_space<vmem>>, vector<40x128xf32>
    %16 = arith.truncf %11 : vector<40x32xf32> to vector<40x32xbf16>
    %cst_17 = arith.constant dense<0.000000e+00> : vector<40x128xf32>
    %17 = tpu.matmul %16, %7, %cst_17 {dimension_numbers = #tpu.dot_dimension_numbers<[1], [0], [0], [1], [0, 0, 1, 1], [], []>} : vector<40x32xbf16>, vector<32x128xbf16>, vector<40x128xf32> -> vector<40x128xf32>
    %18 = arith.addf %15, %17 : vector<40x128xf32>
    %19 = arith.negf %18 : vector<40x128xf32>
    %20 = math.exp %19 : vector<40x128xf32>
    %cst_18 = arith.constant 1.000000e+00 : f32
    %21 = vector.broadcast %cst_18 : f32 to vector<40x128xf32>
    %22 = arith.addf %21, %20 : vector<40x128xf32>
    %23 = arith.divf %21, %22 : vector<40x128xf32>
    %24 = vector.extract_strided_slice %23 {offsets = [0, 0], sizes = [40, 32], strides = [1, 1]} : vector<40x128xf32> to vector<40x32xf32>
    %25 = vector.extract_strided_slice %23 {offsets = [0, 32], sizes = [40, 32], strides = [1, 1]} : vector<40x128xf32> to vector<40x32xf32>
    %26 = vector.extract_strided_slice %23 {offsets = [0, 64], sizes = [40, 32], strides = [1, 1]} : vector<40x128xf32> to vector<40x32xf32>
    %cst_19 = arith.constant 2.000000e+00 : f32
    %27 = vector.broadcast %cst_19 : f32 to vector<40x32xf32>
    %28 = arith.mulf %27, %26 : vector<40x32xf32>
    %cst_20 = arith.constant 1.000000e+00 : f32
    %29 = vector.broadcast %cst_20 : f32 to vector<40x32xf32>
    %30 = arith.subf %28, %29 : vector<40x32xf32>
    %31 = vector.extract_strided_slice %23 {offsets = [0, 96], sizes = [40, 32], strides = [1, 1]} : vector<40x128xf32> to vector<40x32xf32>
    %32 = arith.mulf %25, %12 : vector<40x32xf32>
    %33 = arith.mulf %24, %30 : vector<40x32xf32>
    %34 = arith.addf %32, %33 : vector<40x32xf32>
    %35 = math.tanh %34 : vector<40x32xf32>
    %36 = arith.mulf %31, %35 : vector<40x32xf32>
    %37 = arith.truncf %36 : vector<40x32xf32> to vector<40x32xbf16>
    %cst_21 = arith.constant dense<0.000000e+00> : vector<40x128xf32>
    %38 = tpu.matmul %37, %8, %cst_21 {dimension_numbers = #tpu.dot_dimension_numbers<[1], [0], [0], [1], [0, 0, 1, 1], [], []>} : vector<40x32xbf16>, vector<32x128xbf16>, vector<40x128xf32> -> vector<40x128xf32>
    %39 = arith.truncf %13 : vector<40x32xf32> to vector<40x32xbf16>
    %cst_22 = arith.constant dense<0.000000e+00> : vector<40x128xf32>
    %40 = tpu.matmul %39, %9, %cst_22 {dimension_numbers = #tpu.dot_dimension_numbers<[1], [0], [0], [1], [0, 0, 1, 1], [], []>} : vector<40x32xbf16>, vector<32x128xbf16>, vector<40x128xf32> -> vector<40x128xf32>
    %41 = arith.addf %38, %40 : vector<40x128xf32>
    %42 = vector.broadcast %10 : vector<1x128xf32> to vector<40x128xf32>
    %43 = arith.addf %41, %42 : vector<40x128xf32>
    %44 = arith.negf %43 : vector<40x128xf32>
    %45 = math.exp %44 : vector<40x128xf32>
    %cst_23 = arith.constant 1.000000e+00 : f32
    %46 = vector.broadcast %cst_23 : f32 to vector<40x128xf32>
    %47 = arith.addf %46, %45 : vector<40x128xf32>
    %48 = arith.divf %46, %47 : vector<40x128xf32>
    %49 = vector.extract_strided_slice %48 {offsets = [0, 0], sizes = [40, 32], strides = [1, 1]} : vector<40x128xf32> to vector<40x32xf32>
    %50 = vector.extract_strided_slice %48 {offsets = [0, 32], sizes = [40, 32], strides = [1, 1]} : vector<40x128xf32> to vector<40x32xf32>
    %51 = vector.extract_strided_slice %48 {offsets = [0, 64], sizes = [40, 32], strides = [1, 1]} : vector<40x128xf32> to vector<40x32xf32>
    %cst_24 = arith.constant 2.000000e+00 : f32
    %52 = vector.broadcast %cst_24 : f32 to vector<40x32xf32>
    %53 = arith.mulf %52, %51 : vector<40x32xf32>
    %cst_25 = arith.constant 1.000000e+00 : f32
    %54 = vector.broadcast %cst_25 : f32 to vector<40x32xf32>
    %55 = arith.subf %53, %54 : vector<40x32xf32>
    %56 = vector.extract_strided_slice %48 {offsets = [0, 96], sizes = [40, 32], strides = [1, 1]} : vector<40x128xf32> to vector<40x32xf32>
    %57 = arith.mulf %50, %14 : vector<40x32xf32>
    %58 = arith.mulf %49, %55 : vector<40x32xf32>
    %59 = arith.addf %57, %58 : vector<40x32xf32>
    %60 = math.tanh %59 : vector<40x32xf32>
    %61 = arith.mulf %56, %60 : vector<40x32xf32>
    %c40 = arith.constant 40 : index
    %c0_26 = arith.constant 0 : index
    %62 = vector.load %arg5[%c40, %c0_26] : memref<240x128xf32, #tpu.memory_space<vmem>>, vector<40x128xf32>
    %63 = arith.truncf %36 : vector<40x32xf32> to vector<40x32xbf16>
    %cst_27 = arith.constant dense<0.000000e+00> : vector<40x128xf32>
    %64 = tpu.matmul %63, %7, %cst_27 {dimension_numbers = #tpu.dot_dimension_numbers<[1], [0], [0], [1], [0, 0, 1, 1], [], []>} : vector<40x32xbf16>, vector<32x128xbf16>, vector<40x128xf32> -> vector<40x128xf32>
    %65 = arith.addf %62, %64 : vector<40x128xf32>
    %66 = arith.negf %65 : vector<40x128xf32>
    %67 = math.exp %66 : vector<40x128xf32>
    %cst_28 = arith.constant 1.000000e+00 : f32
    %68 = vector.broadcast %cst_28 : f32 to vector<40x128xf32>
    %69 = arith.addf %68, %67 : vector<40x128xf32>
    %70 = arith.divf %68, %69 : vector<40x128xf32>
    %71 = vector.extract_strided_slice %70 {offsets = [0, 0], sizes = [40, 32], strides = [1, 1]} : vector<40x128xf32> to vector<40x32xf32>
    %72 = vector.extract_strided_slice %70 {offsets = [0, 32], sizes = [40, 32], strides = [1, 1]} : vector<40x128xf32> to vector<40x32xf32>
    %73 = vector.extract_strided_slice %70 {offsets = [0, 64], sizes = [40, 32], strides = [1, 1]} : vector<40x128xf32> to vector<40x32xf32>
    %cst_29 = arith.constant 2.000000e+00 : f32
    %74 = vector.broadcast %cst_29 : f32 to vector<40x32xf32>
    %75 = arith.mulf %74, %73 : vector<40x32xf32>
    %cst_30 = arith.constant 1.000000e+00 : f32
    %76 = vector.broadcast %cst_30 : f32 to vector<40x32xf32>
    %77 = arith.subf %75, %76 : vector<40x32xf32>
    %78 = vector.extract_strided_slice %70 {offsets = [0, 96], sizes = [40, 32], strides = [1, 1]} : vector<40x128xf32> to vector<40x32xf32>
    %79 = arith.mulf %72, %34 : vector<40x32xf32>
    %80 = arith.mulf %71, %77 : vector<40x32xf32>
    %81 = arith.addf %79, %80 : vector<40x32xf32>
    %82 = math.tanh %81 : vector<40x32xf32>
    %83 = arith.mulf %78, %82 : vector<40x32xf32>
    %84 = arith.truncf %83 : vector<40x32xf32> to vector<40x32xbf16>
    %cst_31 = arith.constant dense<0.000000e+00> : vector<40x128xf32>
    %85 = tpu.matmul %84, %8, %cst_31 {dimension_numbers = #tpu.dot_dimension_numbers<[1], [0], [0], [1], [0, 0, 1, 1], [], []>} : vector<40x32xbf16>, vector<32x128xbf16>, vector<40x128xf32> -> vector<40x128xf32>
    %86 = arith.truncf %61 : vector<40x32xf32> to vector<40x32xbf16>
    %cst_32 = arith.constant dense<0.000000e+00> : vector<40x128xf32>
    %87 = tpu.matmul %86, %9, %cst_32 {dimension_numbers = #tpu.dot_dimension_numbers<[1], [0], [0], [1], [0, 0, 1, 1], [], []>} : vector<40x32xbf16>, vector<32x128xbf16>, vector<40x128xf32> -> vector<40x128xf32>
    %88 = arith.addf %85, %87 : vector<40x128xf32>
    %89 = vector.broadcast %10 : vector<1x128xf32> to vector<40x128xf32>
    %90 = arith.addf %88, %89 : vector<40x128xf32>
    %91 = arith.negf %90 : vector<40x128xf32>
    %92 = math.exp %91 : vector<40x128xf32>
    %cst_33 = arith.constant 1.000000e+00 : f32
    %93 = vector.broadcast %cst_33 : f32 to vector<40x128xf32>
    %94 = arith.addf %93, %92 : vector<40x128xf32>
    %95 = arith.divf %93, %94 : vector<40x128xf32>
    %96 = vector.extract_strided_slice %95 {offsets = [0, 0], sizes = [40, 32], strides = [1, 1]} : vector<40x128xf32> to vector<40x32xf32>
    %97 = vector.extract_strided_slice %95 {offsets = [0, 32], sizes = [40, 32], strides = [1, 1]} : vector<40x128xf32> to vector<40x32xf32>
    %98 = vector.extract_strided_slice %95 {offsets = [0, 64], sizes = [40, 32], strides = [1, 1]} : vector<40x128xf32> to vector<40x32xf32>
    %cst_34 = arith.constant 2.000000e+00 : f32
    %99 = vector.broadcast %cst_34 : f32 to vector<40x32xf32>
    %100 = arith.mulf %99, %98 : vector<40x32xf32>
    %cst_35 = arith.constant 1.000000e+00 : f32
    %101 = vector.broadcast %cst_35 : f32 to vector<40x32xf32>
    %102 = arith.subf %100, %101 : vector<40x32xf32>
    %103 = vector.extract_strided_slice %95 {offsets = [0, 96], sizes = [40, 32], strides = [1, 1]} : vector<40x128xf32> to vector<40x32xf32>
    %104 = arith.mulf %97, %59 : vector<40x32xf32>
    %105 = arith.mulf %96, %102 : vector<40x32xf32>
    %106 = arith.addf %104, %105 : vector<40x32xf32>
    %107 = math.tanh %106 : vector<40x32xf32>
    %108 = arith.mulf %103, %107 : vector<40x32xf32>
    %c80_36 = arith.constant 80 : index
    %c0_37 = arith.constant 0 : index
    %109 = vector.load %arg5[%c80_36, %c0_37] : memref<240x128xf32, #tpu.memory_space<vmem>>, vector<40x128xf32>
    %110 = arith.truncf %83 : vector<40x32xf32> to vector<40x32xbf16>
    %cst_38 = arith.constant dense<0.000000e+00> : vector<40x128xf32>
    %111 = tpu.matmul %110, %7, %cst_38 {dimension_numbers = #tpu.dot_dimension_numbers<[1], [0], [0], [1], [0, 0, 1, 1], [], []>} : vector<40x32xbf16>, vector<32x128xbf16>, vector<40x128xf32> -> vector<40x128xf32>
    %112 = arith.addf %109, %111 : vector<40x128xf32>
    %113 = arith.negf %112 : vector<40x128xf32>
    %114 = math.exp %113 : vector<40x128xf32>
    %cst_39 = arith.constant 1.000000e+00 : f32
    %115 = vector.broadcast %cst_39 : f32 to vector<40x128xf32>
    %116 = arith.addf %115, %114 : vector<40x128xf32>
    %117 = arith.divf %115, %116 : vector<40x128xf32>
    %118 = vector.extract_strided_slice %117 {offsets = [0, 0], sizes = [40, 32], strides = [1, 1]} : vector<40x128xf32> to vector<40x32xf32>
    %119 = vector.extract_strided_slice %117 {offsets = [0, 32], sizes = [40, 32], strides = [1, 1]} : vector<40x128xf32> to vector<40x32xf32>
    %120 = vector.extract_strided_slice %117 {offsets = [0, 64], sizes = [40, 32], strides = [1, 1]} : vector<40x128xf32> to vector<40x32xf32>
    %cst_40 = arith.constant 2.000000e+00 : f32
    %121 = vector.broadcast %cst_40 : f32 to vector<40x32xf32>
    %122 = arith.mulf %121, %120 : vector<40x32xf32>
    %cst_41 = arith.constant 1.000000e+00 : f32
    %123 = vector.broadcast %cst_41 : f32 to vector<40x32xf32>
    %124 = arith.subf %122, %123 : vector<40x32xf32>
    %125 = vector.extract_strided_slice %117 {offsets = [0, 96], sizes = [40, 32], strides = [1, 1]} : vector<40x128xf32> to vector<40x32xf32>
    %126 = arith.mulf %119, %81 : vector<40x32xf32>
    %127 = arith.mulf %118, %124 : vector<40x32xf32>
    %128 = arith.addf %126, %127 : vector<40x32xf32>
    %129 = math.tanh %128 : vector<40x32xf32>
    %130 = arith.mulf %125, %129 : vector<40x32xf32>
    %131 = arith.truncf %130 : vector<40x32xf32> to vector<40x32xbf16>
    %cst_42 = arith.constant dense<0.000000e+00> : vector<40x128xf32>
    %132 = tpu.matmul %131, %8, %cst_42 {dimension_numbers = #tpu.dot_dimension_numbers<[1], [0], [0], [1], [0, 0, 1, 1], [], []>} : vector<40x32xbf16>, vector<32x128xbf16>, vector<40x128xf32> -> vector<40x128xf32>
    %133 = arith.truncf %108 : vector<40x32xf32> to vector<40x32xbf16>
    %cst_43 = arith.constant dense<0.000000e+00> : vector<40x128xf32>
    %134 = tpu.matmul %133, %9, %cst_43 {dimension_numbers = #tpu.dot_dimension_numbers<[1], [0], [0], [1], [0, 0, 1, 1], [], []>} : vector<40x32xbf16>, vector<32x128xbf16>, vector<40x128xf32> -> vector<40x128xf32>
    %135 = arith.addf %132, %134 : vector<40x128xf32>
    %136 = vector.broadcast %10 : vector<1x128xf32> to vector<40x128xf32>
    %137 = arith.addf %135, %136 : vector<40x128xf32>
    %138 = arith.negf %137 : vector<40x128xf32>
    %139 = math.exp %138 : vector<40x128xf32>
    %cst_44 = arith.constant 1.000000e+00 : f32
    %140 = vector.broadcast %cst_44 : f32 to vector<40x128xf32>
    %141 = arith.addf %140, %139 : vector<40x128xf32>
    %142 = arith.divf %140, %141 : vector<40x128xf32>
    %143 = vector.extract_strided_slice %142 {offsets = [0, 0], sizes = [40, 32], strides = [1, 1]} : vector<40x128xf32> to vector<40x32xf32>
    %144 = vector.extract_strided_slice %142 {offsets = [0, 32], sizes = [40, 32], strides = [1, 1]} : vector<40x128xf32> to vector<40x32xf32>
    %145 = vector.extract_strided_slice %142 {offsets = [0, 64], sizes = [40, 32], strides = [1, 1]} : vector<40x128xf32> to vector<40x32xf32>
    %cst_45 = arith.constant 2.000000e+00 : f32
    %146 = vector.broadcast %cst_45 : f32 to vector<40x32xf32>
    %147 = arith.mulf %146, %145 : vector<40x32xf32>
    %cst_46 = arith.constant 1.000000e+00 : f32
    %148 = vector.broadcast %cst_46 : f32 to vector<40x32xf32>
    %149 = arith.subf %147, %148 : vector<40x32xf32>
    %150 = vector.extract_strided_slice %142 {offsets = [0, 96], sizes = [40, 32], strides = [1, 1]} : vector<40x128xf32> to vector<40x32xf32>
    %151 = arith.mulf %144, %106 : vector<40x32xf32>
    %152 = arith.mulf %143, %149 : vector<40x32xf32>
    %153 = arith.addf %151, %152 : vector<40x32xf32>
    %154 = math.tanh %153 : vector<40x32xf32>
    %155 = arith.mulf %150, %154 : vector<40x32xf32>
    %c120 = arith.constant 120 : index
    %c0_47 = arith.constant 0 : index
    %156 = vector.load %arg5[%c120, %c0_47] : memref<240x128xf32, #tpu.memory_space<vmem>>, vector<40x128xf32>
    %157 = arith.truncf %130 : vector<40x32xf32> to vector<40x32xbf16>
    %cst_48 = arith.constant dense<0.000000e+00> : vector<40x128xf32>
    %158 = tpu.matmul %157, %7, %cst_48 {dimension_numbers = #tpu.dot_dimension_numbers<[1], [0], [0], [1], [0, 0, 1, 1], [], []>} : vector<40x32xbf16>, vector<32x128xbf16>, vector<40x128xf32> -> vector<40x128xf32>
    %159 = arith.addf %156, %158 : vector<40x128xf32>
    %160 = arith.negf %159 : vector<40x128xf32>
    %161 = math.exp %160 : vector<40x128xf32>
    %cst_49 = arith.constant 1.000000e+00 : f32
    %162 = vector.broadcast %cst_49 : f32 to vector<40x128xf32>
    %163 = arith.addf %162, %161 : vector<40x128xf32>
    %164 = arith.divf %162, %163 : vector<40x128xf32>
    %165 = vector.extract_strided_slice %164 {offsets = [0, 0], sizes = [40, 32], strides = [1, 1]} : vector<40x128xf32> to vector<40x32xf32>
    %166 = vector.extract_strided_slice %164 {offsets = [0, 32], sizes = [40, 32], strides = [1, 1]} : vector<40x128xf32> to vector<40x32xf32>
    %167 = vector.extract_strided_slice %164 {offsets = [0, 64], sizes = [40, 32], strides = [1, 1]} : vector<40x128xf32> to vector<40x32xf32>
    %cst_50 = arith.constant 2.000000e+00 : f32
    %168 = vector.broadcast %cst_50 : f32 to vector<40x32xf32>
    %169 = arith.mulf %168, %167 : vector<40x32xf32>
    %cst_51 = arith.constant 1.000000e+00 : f32
    %170 = vector.broadcast %cst_51 : f32 to vector<40x32xf32>
    %171 = arith.subf %169, %170 : vector<40x32xf32>
    %172 = vector.extract_strided_slice %164 {offsets = [0, 96], sizes = [40, 32], strides = [1, 1]} : vector<40x128xf32> to vector<40x32xf32>
    %173 = arith.mulf %166, %128 : vector<40x32xf32>
    %174 = arith.mulf %165, %171 : vector<40x32xf32>
    %175 = arith.addf %173, %174 : vector<40x32xf32>
    %176 = math.tanh %175 : vector<40x32xf32>
    %177 = arith.mulf %172, %176 : vector<40x32xf32>
    %178 = arith.truncf %177 : vector<40x32xf32> to vector<40x32xbf16>
    %cst_52 = arith.constant dense<0.000000e+00> : vector<40x128xf32>
    %179 = tpu.matmul %178, %8, %cst_52 {dimension_numbers = #tpu.dot_dimension_numbers<[1], [0], [0], [1], [0, 0, 1, 1], [], []>} : vector<40x32xbf16>, vector<32x128xbf16>, vector<40x128xf32> -> vector<40x128xf32>
    %180 = arith.truncf %155 : vector<40x32xf32> to vector<40x32xbf16>
    %cst_53 = arith.constant dense<0.000000e+00> : vector<40x128xf32>
    %181 = tpu.matmul %180, %9, %cst_53 {dimension_numbers = #tpu.dot_dimension_numbers<[1], [0], [0], [1], [0, 0, 1, 1], [], []>} : vector<40x32xbf16>, vector<32x128xbf16>, vector<40x128xf32> -> vector<40x128xf32>
    %182 = arith.addf %179, %181 : vector<40x128xf32>
    %183 = vector.broadcast %10 : vector<1x128xf32> to vector<40x128xf32>
    %184 = arith.addf %182, %183 : vector<40x128xf32>
    %185 = arith.negf %184 : vector<40x128xf32>
    %186 = math.exp %185 : vector<40x128xf32>
    %cst_54 = arith.constant 1.000000e+00 : f32
    %187 = vector.broadcast %cst_54 : f32 to vector<40x128xf32>
    %188 = arith.addf %187, %186 : vector<40x128xf32>
    %189 = arith.divf %187, %188 : vector<40x128xf32>
    %190 = vector.extract_strided_slice %189 {offsets = [0, 0], sizes = [40, 32], strides = [1, 1]} : vector<40x128xf32> to vector<40x32xf32>
    %191 = vector.extract_strided_slice %189 {offsets = [0, 32], sizes = [40, 32], strides = [1, 1]} : vector<40x128xf32> to vector<40x32xf32>
    %192 = vector.extract_strided_slice %189 {offsets = [0, 64], sizes = [40, 32], strides = [1, 1]} : vector<40x128xf32> to vector<40x32xf32>
    %cst_55 = arith.constant 2.000000e+00 : f32
    %193 = vector.broadcast %cst_55 : f32 to vector<40x32xf32>
    %194 = arith.mulf %193, %192 : vector<40x32xf32>
    %cst_56 = arith.constant 1.000000e+00 : f32
    %195 = vector.broadcast %cst_56 : f32 to vector<40x32xf32>
    %196 = arith.subf %194, %195 : vector<40x32xf32>
    %197 = vector.extract_strided_slice %189 {offsets = [0, 96], sizes = [40, 32], strides = [1, 1]} : vector<40x128xf32> to vector<40x32xf32>
    %198 = arith.mulf %191, %153 : vector<40x32xf32>
    %199 = arith.mulf %190, %196 : vector<40x32xf32>
    %200 = arith.addf %198, %199 : vector<40x32xf32>
    %201 = math.tanh %200 : vector<40x32xf32>
    %202 = arith.mulf %197, %201 : vector<40x32xf32>
    %c160 = arith.constant 160 : index
    %c0_57 = arith.constant 0 : index
    %203 = vector.load %arg5[%c160, %c0_57] : memref<240x128xf32, #tpu.memory_space<vmem>>, vector<40x128xf32>
    %204 = arith.truncf %177 : vector<40x32xf32> to vector<40x32xbf16>
    %cst_58 = arith.constant dense<0.000000e+00> : vector<40x128xf32>
    %205 = tpu.matmul %204, %7, %cst_58 {dimension_numbers = #tpu.dot_dimension_numbers<[1], [0], [0], [1], [0, 0, 1, 1], [], []>} : vector<40x32xbf16>, vector<32x128xbf16>, vector<40x128xf32> -> vector<40x128xf32>
    %206 = arith.addf %203, %205 : vector<40x128xf32>
    %207 = arith.negf %206 : vector<40x128xf32>
    %208 = math.exp %207 : vector<40x128xf32>
    %cst_59 = arith.constant 1.000000e+00 : f32
    %209 = vector.broadcast %cst_59 : f32 to vector<40x128xf32>
    %210 = arith.addf %209, %208 : vector<40x128xf32>
    %211 = arith.divf %209, %210 : vector<40x128xf32>
    %212 = vector.extract_strided_slice %211 {offsets = [0, 0], sizes = [40, 32], strides = [1, 1]} : vector<40x128xf32> to vector<40x32xf32>
    %213 = vector.extract_strided_slice %211 {offsets = [0, 32], sizes = [40, 32], strides = [1, 1]} : vector<40x128xf32> to vector<40x32xf32>
    %214 = vector.extract_strided_slice %211 {offsets = [0, 64], sizes = [40, 32], strides = [1, 1]} : vector<40x128xf32> to vector<40x32xf32>
    %cst_60 = arith.constant 2.000000e+00 : f32
    %215 = vector.broadcast %cst_60 : f32 to vector<40x32xf32>
    %216 = arith.mulf %215, %214 : vector<40x32xf32>
    %cst_61 = arith.constant 1.000000e+00 : f32
    %217 = vector.broadcast %cst_61 : f32 to vector<40x32xf32>
    %218 = arith.subf %216, %217 : vector<40x32xf32>
    %219 = vector.extract_strided_slice %211 {offsets = [0, 96], sizes = [40, 32], strides = [1, 1]} : vector<40x128xf32> to vector<40x32xf32>
    %220 = arith.mulf %213, %175 : vector<40x32xf32>
    %221 = arith.mulf %212, %218 : vector<40x32xf32>
    %222 = arith.addf %220, %221 : vector<40x32xf32>
    %223 = math.tanh %222 : vector<40x32xf32>
    %224 = arith.mulf %219, %223 : vector<40x32xf32>
    %225 = arith.truncf %224 : vector<40x32xf32> to vector<40x32xbf16>
    %cst_62 = arith.constant dense<0.000000e+00> : vector<40x128xf32>
    %226 = tpu.matmul %225, %8, %cst_62 {dimension_numbers = #tpu.dot_dimension_numbers<[1], [0], [0], [1], [0, 0, 1, 1], [], []>} : vector<40x32xbf16>, vector<32x128xbf16>, vector<40x128xf32> -> vector<40x128xf32>
    %227 = arith.truncf %202 : vector<40x32xf32> to vector<40x32xbf16>
    %cst_63 = arith.constant dense<0.000000e+00> : vector<40x128xf32>
    %228 = tpu.matmul %227, %9, %cst_63 {dimension_numbers = #tpu.dot_dimension_numbers<[1], [0], [0], [1], [0, 0, 1, 1], [], []>} : vector<40x32xbf16>, vector<32x128xbf16>, vector<40x128xf32> -> vector<40x128xf32>
    %229 = arith.addf %226, %228 : vector<40x128xf32>
    %230 = vector.broadcast %10 : vector<1x128xf32> to vector<40x128xf32>
    %231 = arith.addf %229, %230 : vector<40x128xf32>
    %232 = arith.negf %231 : vector<40x128xf32>
    %233 = math.exp %232 : vector<40x128xf32>
    %cst_64 = arith.constant 1.000000e+00 : f32
    %234 = vector.broadcast %cst_64 : f32 to vector<40x128xf32>
    %235 = arith.addf %234, %233 : vector<40x128xf32>
    %236 = arith.divf %234, %235 : vector<40x128xf32>
    %237 = vector.extract_strided_slice %236 {offsets = [0, 0], sizes = [40, 32], strides = [1, 1]} : vector<40x128xf32> to vector<40x32xf32>
    %238 = vector.extract_strided_slice %236 {offsets = [0, 32], sizes = [40, 32], strides = [1, 1]} : vector<40x128xf32> to vector<40x32xf32>
    %239 = vector.extract_strided_slice %236 {offsets = [0, 64], sizes = [40, 32], strides = [1, 1]} : vector<40x128xf32> to vector<40x32xf32>
    %cst_65 = arith.constant 2.000000e+00 : f32
    %240 = vector.broadcast %cst_65 : f32 to vector<40x32xf32>
    %241 = arith.mulf %240, %239 : vector<40x32xf32>
    %cst_66 = arith.constant 1.000000e+00 : f32
    %242 = vector.broadcast %cst_66 : f32 to vector<40x32xf32>
    %243 = arith.subf %241, %242 : vector<40x32xf32>
    %244 = vector.extract_strided_slice %236 {offsets = [0, 96], sizes = [40, 32], strides = [1, 1]} : vector<40x128xf32> to vector<40x32xf32>
    %245 = arith.mulf %238, %200 : vector<40x32xf32>
    %246 = arith.mulf %237, %243 : vector<40x32xf32>
    %247 = arith.addf %245, %246 : vector<40x32xf32>
    %248 = math.tanh %247 : vector<40x32xf32>
    %249 = arith.mulf %244, %248 : vector<40x32xf32>
    %c200 = arith.constant 200 : index
    %c0_67 = arith.constant 0 : index
    %250 = vector.load %arg5[%c200, %c0_67] : memref<240x128xf32, #tpu.memory_space<vmem>>, vector<40x128xf32>
    %251 = arith.truncf %224 : vector<40x32xf32> to vector<40x32xbf16>
    %cst_68 = arith.constant dense<0.000000e+00> : vector<40x128xf32>
    %252 = tpu.matmul %251, %7, %cst_68 {dimension_numbers = #tpu.dot_dimension_numbers<[1], [0], [0], [1], [0, 0, 1, 1], [], []>} : vector<40x32xbf16>, vector<32x128xbf16>, vector<40x128xf32> -> vector<40x128xf32>
    %253 = arith.addf %250, %252 : vector<40x128xf32>
    %254 = arith.negf %253 : vector<40x128xf32>
    %255 = math.exp %254 : vector<40x128xf32>
    %cst_69 = arith.constant 1.000000e+00 : f32
    %256 = vector.broadcast %cst_69 : f32 to vector<40x128xf32>
    %257 = arith.addf %256, %255 : vector<40x128xf32>
    %258 = arith.divf %256, %257 : vector<40x128xf32>
    %259 = vector.extract_strided_slice %258 {offsets = [0, 0], sizes = [40, 32], strides = [1, 1]} : vector<40x128xf32> to vector<40x32xf32>
    %260 = vector.extract_strided_slice %258 {offsets = [0, 32], sizes = [40, 32], strides = [1, 1]} : vector<40x128xf32> to vector<40x32xf32>
    %261 = vector.extract_strided_slice %258 {offsets = [0, 64], sizes = [40, 32], strides = [1, 1]} : vector<40x128xf32> to vector<40x32xf32>
    %cst_70 = arith.constant 2.000000e+00 : f32
    %262 = vector.broadcast %cst_70 : f32 to vector<40x32xf32>
    %263 = arith.mulf %262, %261 : vector<40x32xf32>
    %cst_71 = arith.constant 1.000000e+00 : f32
    %264 = vector.broadcast %cst_71 : f32 to vector<40x32xf32>
    %265 = arith.subf %263, %264 : vector<40x32xf32>
    %266 = vector.extract_strided_slice %258 {offsets = [0, 96], sizes = [40, 32], strides = [1, 1]} : vector<40x128xf32> to vector<40x32xf32>
    %267 = arith.mulf %260, %222 : vector<40x32xf32>
    %268 = arith.mulf %259, %265 : vector<40x32xf32>
    %269 = arith.addf %267, %268 : vector<40x32xf32>
    %270 = math.tanh %269 : vector<40x32xf32>
    %271 = arith.mulf %266, %270 : vector<40x32xf32>
    %272 = arith.truncf %271 : vector<40x32xf32> to vector<40x32xbf16>
    %cst_72 = arith.constant dense<0.000000e+00> : vector<40x128xf32>
    %273 = tpu.matmul %272, %8, %cst_72 {dimension_numbers = #tpu.dot_dimension_numbers<[1], [0], [0], [1], [0, 0, 1, 1], [], []>} : vector<40x32xbf16>, vector<32x128xbf16>, vector<40x128xf32> -> vector<40x128xf32>
    %274 = arith.truncf %249 : vector<40x32xf32> to vector<40x32xbf16>
    %cst_73 = arith.constant dense<0.000000e+00> : vector<40x128xf32>
    %275 = tpu.matmul %274, %9, %cst_73 {dimension_numbers = #tpu.dot_dimension_numbers<[1], [0], [0], [1], [0, 0, 1, 1], [], []>} : vector<40x32xbf16>, vector<32x128xbf16>, vector<40x128xf32> -> vector<40x128xf32>
    %276 = arith.addf %273, %275 : vector<40x128xf32>
    %277 = vector.broadcast %10 : vector<1x128xf32> to vector<40x128xf32>
    %278 = arith.addf %276, %277 : vector<40x128xf32>
    %279 = arith.negf %278 : vector<40x128xf32>
    %280 = math.exp %279 : vector<40x128xf32>
    %cst_74 = arith.constant 1.000000e+00 : f32
    %281 = vector.broadcast %cst_74 : f32 to vector<40x128xf32>
    %282 = arith.addf %281, %280 : vector<40x128xf32>
    %283 = arith.divf %281, %282 : vector<40x128xf32>
    %284 = vector.extract_strided_slice %283 {offsets = [0, 0], sizes = [40, 32], strides = [1, 1]} : vector<40x128xf32> to vector<40x32xf32>
    %285 = vector.extract_strided_slice %283 {offsets = [0, 32], sizes = [40, 32], strides = [1, 1]} : vector<40x128xf32> to vector<40x32xf32>
    %286 = vector.extract_strided_slice %283 {offsets = [0, 64], sizes = [40, 32], strides = [1, 1]} : vector<40x128xf32> to vector<40x32xf32>
    %cst_75 = arith.constant 2.000000e+00 : f32
    %287 = vector.broadcast %cst_75 : f32 to vector<40x32xf32>
    %288 = arith.mulf %287, %286 : vector<40x32xf32>
    %cst_76 = arith.constant 1.000000e+00 : f32
    %289 = vector.broadcast %cst_76 : f32 to vector<40x32xf32>
    %290 = arith.subf %288, %289 : vector<40x32xf32>
    %291 = vector.extract_strided_slice %283 {offsets = [0, 96], sizes = [40, 32], strides = [1, 1]} : vector<40x128xf32> to vector<40x32xf32>
    %292 = arith.mulf %285, %247 : vector<40x32xf32>
    %293 = arith.mulf %284, %290 : vector<40x32xf32>
    %294 = arith.addf %292, %293 : vector<40x32xf32>
    %295 = math.tanh %294 : vector<40x32xf32>
    %296 = arith.mulf %291, %295 : vector<40x32xf32>
    %c112 = arith.constant 112 : index
    %c0_77 = arith.constant 0 : index
    %297 = vector.load %arg2[%c112, %c0_77] : memref<752x128xbf16, #tpu.memory_space<vmem>>, vector<32x32xbf16>
    %298 = arith.truncf %271 : vector<40x32xf32> to vector<40x32xbf16>
    %cst_78 = arith.constant dense<0.000000e+00> : vector<40x32xf32>
    %299 = tpu.matmul %298, %297, %cst_78 {dimension_numbers = #tpu.dot_dimension_numbers<[1], [0], [0], [1], [0, 0, 1, 1], [], []>} : vector<40x32xbf16>, vector<32x32xbf16>, vector<40x32xf32> -> vector<40x32xf32>
    %c144 = arith.constant 144 : index
    %c0_79 = arith.constant 0 : index
    %300 = vector.load %arg2[%c144, %c0_79] : memref<752x128xbf16, #tpu.memory_space<vmem>>, vector<32x32xbf16>
    %301 = arith.truncf %296 : vector<40x32xf32> to vector<40x32xbf16>
    %cst_80 = arith.constant dense<0.000000e+00> : vector<40x32xf32>
    %302 = tpu.matmul %301, %300, %cst_80 {dimension_numbers = #tpu.dot_dimension_numbers<[1], [0], [0], [1], [0, 0, 1, 1], [], []>} : vector<40x32xbf16>, vector<32x32xbf16>, vector<40x32xf32> -> vector<40x32xf32>
    %303 = arith.addf %299, %302 : vector<40x32xf32>
    %c176 = arith.constant 176 : index
    %c0_81 = arith.constant 0 : index
    %304 = vector.load %arg2[%c176, %c0_81] : memref<752x128xbf16, #tpu.memory_space<vmem>>, vector<32x32xbf16>
    %305 = arith.truncf %269 : vector<40x32xf32> to vector<40x32xbf16>
    %cst_82 = arith.constant dense<0.000000e+00> : vector<40x32xf32>
    %306 = tpu.matmul %305, %304, %cst_82 {dimension_numbers = #tpu.dot_dimension_numbers<[1], [0], [0], [1], [0, 0, 1, 1], [], []>} : vector<40x32xbf16>, vector<32x32xbf16>, vector<40x32xf32> -> vector<40x32xf32>
    %307 = arith.addf %303, %306 : vector<40x32xf32>
    %c208 = arith.constant 208 : index
    %c0_83 = arith.constant 0 : index
    %308 = vector.load %arg2[%c208, %c0_83] : memref<752x128xbf16, #tpu.memory_space<vmem>>, vector<32x32xbf16>
    %309 = arith.truncf %294 : vector<40x32xf32> to vector<40x32xbf16>
    %cst_84 = arith.constant dense<0.000000e+00> : vector<40x32xf32>
    %310 = tpu.matmul %309, %308, %cst_84 {dimension_numbers = #tpu.dot_dimension_numbers<[1], [0], [0], [1], [0, 0, 1, 1], [], []>} : vector<40x32xbf16>, vector<32x32xbf16>, vector<40x32xf32> -> vector<40x32xf32>
    %311 = arith.addf %307, %310 : vector<40x32xf32>
    %c2 = arith.constant 2 : index
    %c0_85 = arith.constant 0 : index
    %312 = vector.load %arg3[%c2, %c0_85] : memref<8x128xf32, #tpu.memory_space<vmem>>, vector<1x32xf32>
    %313 = vector.broadcast %312 : vector<1x32xf32> to vector<40x32xf32>
    %314 = arith.addf %311, %313 : vector<40x32xf32>
    %cst_86 = arith.constant 0.000000e+00 : f32
    %315 = vector.broadcast %cst_86 : f32 to vector<40x32xf32>
    %316 = arith.maximumf %314, %315 : vector<40x32xf32>
    %c3 = arith.constant 3 : index
    %c0_87 = arith.constant 0 : index
    %317 = vector.load %arg3[%c3, %c0_87] : memref<8x128xf32, #tpu.memory_space<vmem>>, vector<1x16xf32>
    %c240 = arith.constant 240 : index
    %c0_88 = arith.constant 0 : index
    %318 = vector.load %arg2[%c240, %c0_88] : memref<752x128xbf16, #tpu.memory_space<vmem>>, vector<32x16xbf16>
    %319 = arith.truncf %316 : vector<40x32xf32> to vector<40x32xbf16>
    %cst_89 = arith.constant dense<0.000000e+00> : vector<40x16xf32>
    %320 = tpu.matmul %319, %318, %cst_89 {dimension_numbers = #tpu.dot_dimension_numbers<[1], [0], [0], [1], [0, 0, 1, 1], [], []>} : vector<40x32xbf16>, vector<32x16xbf16>, vector<40x16xf32> -> vector<40x16xf32>
    %c272 = arith.constant 272 : index
    %c0_90 = arith.constant 0 : index
    %321 = vector.load %arg2[%c272, %c0_90] : memref<752x128xbf16, #tpu.memory_space<vmem>>, vector<24x40xbf16>
    %322 = arith.truncf %320 : vector<40x16xf32> to vector<40x16xbf16>
    %cst_91 = arith.constant dense<0.000000e+00> : vector<24x16xf32>
    %323 = tpu.matmul %321, %322, %cst_91 {dimension_numbers = #tpu.dot_dimension_numbers<[1], [0], [0], [1], [0, 0, 1, 1], [], []>} : vector<24x40xbf16>, vector<40x16xbf16>, vector<24x16xf32> -> vector<24x16xf32>
    %324 = vector.broadcast %317 : vector<1x16xf32> to vector<24x16xf32>
    %325 = arith.addf %324, %323 : vector<24x16xf32>
    %c296 = arith.constant 296 : index
    %c0_92 = arith.constant 0 : index
    %326 = vector.load %arg2[%c296, %c0_92] : memref<752x128xbf16, #tpu.memory_space<vmem>>, vector<32x16xbf16>
    %327 = arith.truncf %316 : vector<40x32xf32> to vector<40x32xbf16>
    %cst_93 = arith.constant dense<0.000000e+00> : vector<40x16xf32>
    %328 = tpu.matmul %327, %326, %cst_93 {dimension_numbers = #tpu.dot_dimension_numbers<[1], [0], [0], [1], [0, 0, 1, 1], [], []>} : vector<40x32xbf16>, vector<32x16xbf16>, vector<40x16xf32> -> vector<40x16xf32>
    %c328 = arith.constant 328 : index
    %c0_94 = arith.constant 0 : index
    %329 = vector.load %arg2[%c328, %c0_94] : memref<752x128xbf16, #tpu.memory_space<vmem>>, vector<24x40xbf16>
    %330 = arith.truncf %328 : vector<40x16xf32> to vector<40x16xbf16>
    %cst_95 = arith.constant dense<0.000000e+00> : vector<24x16xf32>
    %331 = tpu.matmul %329, %330, %cst_95 {dimension_numbers = #tpu.dot_dimension_numbers<[1], [0], [0], [1], [0, 0, 1, 1], [], []>} : vector<24x40xbf16>, vector<40x16xbf16>, vector<24x16xf32> -> vector<24x16xf32>
    %332 = arith.addf %325, %331 : vector<24x16xf32>
    %c352 = arith.constant 352 : index
    %c0_96 = arith.constant 0 : index
    %333 = vector.load %arg2[%c352, %c0_96] : memref<752x128xbf16, #tpu.memory_space<vmem>>, vector<32x16xbf16>
    %334 = arith.truncf %316 : vector<40x32xf32> to vector<40x32xbf16>
    %cst_97 = arith.constant dense<0.000000e+00> : vector<40x16xf32>
    %335 = tpu.matmul %334, %333, %cst_97 {dimension_numbers = #tpu.dot_dimension_numbers<[1], [0], [0], [1], [0, 0, 1, 1], [], []>} : vector<40x32xbf16>, vector<32x16xbf16>, vector<40x16xf32> -> vector<40x16xf32>
    %c384 = arith.constant 384 : index
    %c0_98 = arith.constant 0 : index
    %336 = vector.load %arg2[%c384, %c0_98] : memref<752x128xbf16, #tpu.memory_space<vmem>>, vector<24x40xbf16>
    %337 = arith.truncf %335 : vector<40x16xf32> to vector<40x16xbf16>
    %cst_99 = arith.constant dense<0.000000e+00> : vector<24x16xf32>
    %338 = tpu.matmul %336, %337, %cst_99 {dimension_numbers = #tpu.dot_dimension_numbers<[1], [0], [0], [1], [0, 0, 1, 1], [], []>} : vector<24x40xbf16>, vector<40x16xbf16>, vector<24x16xf32> -> vector<24x16xf32>
    %339 = arith.addf %332, %338 : vector<24x16xf32>
    %340 = vector.extract_strided_slice %339 {offsets = [0, 0], sizes = [8, 16], strides = [1, 1]} : vector<24x16xf32> to vector<8x16xf32>
    %341 = vector.extract_strided_slice %339 {offsets = [8, 0], sizes = [8, 16], strides = [1, 1]} : vector<24x16xf32> to vector<8x16xf32>
    %342 = arith.maximumf %340, %341 : vector<8x16xf32>
    %343 = vector.extract_strided_slice %339 {offsets = [16, 0], sizes = [8, 16], strides = [1, 1]} : vector<24x16xf32> to vector<8x16xf32>
    %344 = arith.maximumf %342, %343 : vector<8x16xf32>
    %cst_100 = arith.constant 0.000000e+00 : f32
    %345 = vector.broadcast %cst_100 : f32 to vector<8x16xf32>
    %346 = arith.maximumf %344, %345 : vector<8x16xf32>
    %c440 = arith.constant 440 : index
    %c0_101 = arith.constant 0 : index
    %347 = vector.load %arg2[%c440, %c0_101] : memref<752x128xbf16, #tpu.memory_space<vmem>>, vector<16x128xbf16>
    %348 = arith.truncf %346 : vector<8x16xf32> to vector<8x16xbf16>
    %cst_102 = arith.constant dense<0.000000e+00> : vector<8x128xf32>
    %349 = tpu.matmul %348, %347, %cst_102 {dimension_numbers = #tpu.dot_dimension_numbers<[1], [0], [0], [1], [0, 0, 1, 1], [], []>} : vector<8x16xbf16>, vector<16x128xbf16>, vector<8x128xf32> -> vector<8x128xf32>
    %c0_103 = arith.constant 0 : index
    %c0_104 = arith.constant 0 : index
    %350 = vector.load %arg1[%c0_103, %c0_104] : memref<8x8xbf16, #tpu.memory_space<vmem>>, vector<8x8xbf16>
    %c456 = arith.constant 456 : index
    %c0_105 = arith.constant 0 : index
    %351 = vector.load %arg2[%c456, %c0_105] : memref<752x128xbf16, #tpu.memory_space<vmem>>, vector<8x128xbf16>
    %cst_106 = arith.constant dense<0.000000e+00> : vector<8x128xf32>
    %352 = tpu.matmul %350, %351, %cst_106 {dimension_numbers = #tpu.dot_dimension_numbers<[1], [0], [0], [1], [0, 0, 1, 1], [], []>} : vector<8x8xbf16>, vector<8x128xbf16>, vector<8x128xf32> -> vector<8x128xf32>
    %353 = arith.addf %349, %352 : vector<8x128xf32>
    %c4 = arith.constant 4 : index
    %c0_107 = arith.constant 0 : index
    %354 = vector.load %arg3[%c4, %c0_107] : memref<8x128xf32, #tpu.memory_space<vmem>>, vector<1x128xf32>
    %355 = vector.broadcast %354 : vector<1x128xf32> to vector<8x128xf32>
    %356 = arith.addf %353, %355 : vector<8x128xf32>
    %c408 = arith.constant 408 : index
    %c0_108 = arith.constant 0 : index
    %357 = vector.load %arg2[%c408, %c0_108] : memref<752x128xbf16, #tpu.memory_space<vmem>>, vector<32x8xbf16>
    %358 = arith.truncf %356 : vector<8x128xf32> to vector<8x128xbf16>
    %cst_109 = arith.constant dense<0.000000e+00> : vector<32x128xf32>
    %359 = tpu.matmul %357, %358, %cst_109 {dimension_numbers = #tpu.dot_dimension_numbers<[1], [0], [0], [1], [0, 0, 1, 1], [], []>} : vector<32x8xbf16>, vector<8x128xbf16>, vector<32x128xf32> -> vector<32x128xf32>
    %c464 = arith.constant 464 : index
    %c0_110 = arith.constant 0 : index
    %360 = vector.load %arg2[%c464, %c0_110] : memref<752x128xbf16, #tpu.memory_space<vmem>>, vector<32x128xbf16>
    %c496 = arith.constant 496 : index
    %c0_111 = arith.constant 0 : index
    %361 = vector.load %arg2[%c496, %c0_111] : memref<752x128xbf16, #tpu.memory_space<vmem>>, vector<32x128xbf16>
    %c528 = arith.constant 528 : index
    %c0_112 = arith.constant 0 : index
    %362 = vector.load %arg2[%c528, %c0_112] : memref<752x128xbf16, #tpu.memory_space<vmem>>, vector<32x128xbf16>
    %c5 = arith.constant 5 : index
    %c0_113 = arith.constant 0 : index
    %363 = vector.load %arg3[%c5, %c0_113] : memref<8x128xf32, #tpu.memory_space<vmem>>, vector<1x128xf32>
    %cst_114 = arith.constant 0.000000e+00 : f32
    %364 = vector.broadcast %cst_114 : f32 to vector<8x32xf32>
    %cst_115 = arith.constant 0.000000e+00 : f32
    %365 = vector.broadcast %cst_115 : f32 to vector<8x32xf32>
    %cst_116 = arith.constant 0.000000e+00 : f32
    %366 = vector.broadcast %cst_116 : f32 to vector<8x32xf32>
    %cst_117 = arith.constant 0.000000e+00 : f32
    %367 = vector.broadcast %cst_117 : f32 to vector<8x32xf32>
    %368 = vector.extract_strided_slice %359 {offsets = [0, 0], sizes = [8, 128], strides = [1, 1]} : vector<32x128xf32> to vector<8x128xf32>
    %369 = arith.truncf %364 : vector<8x32xf32> to vector<8x32xbf16>
    %cst_118 = arith.constant dense<0.000000e+00> : vector<8x128xf32>
    %370 = tpu.matmul %369, %360, %cst_118 {dimension_numbers = #tpu.dot_dimension_numbers<[1], [0], [0], [1], [0, 0, 1, 1], [], []>} : vector<8x32xbf16>, vector<32x128xbf16>, vector<8x128xf32> -> vector<8x128xf32>
    %371 = arith.addf %368, %370 : vector<8x128xf32>
    %372 = arith.negf %371 : vector<8x128xf32>
    %373 = math.exp %372 : vector<8x128xf32>
    %cst_119 = arith.constant 1.000000e+00 : f32
    %374 = vector.broadcast %cst_119 : f32 to vector<8x128xf32>
    %375 = arith.addf %374, %373 : vector<8x128xf32>
    %376 = arith.divf %374, %375 : vector<8x128xf32>
    %377 = vector.extract_strided_slice %376 {offsets = [0, 0], sizes = [8, 32], strides = [1, 1]} : vector<8x128xf32> to vector<8x32xf32>
    %378 = vector.extract_strided_slice %376 {offsets = [0, 32], sizes = [8, 32], strides = [1, 1]} : vector<8x128xf32> to vector<8x32xf32>
    %379 = vector.extract_strided_slice %376 {offsets = [0, 64], sizes = [8, 32], strides = [1, 1]} : vector<8x128xf32> to vector<8x32xf32>
    %cst_120 = arith.constant 2.000000e+00 : f32
    %380 = vector.broadcast %cst_120 : f32 to vector<8x32xf32>
    %381 = arith.mulf %380, %379 : vector<8x32xf32>
    %cst_121 = arith.constant 1.000000e+00 : f32
    %382 = vector.broadcast %cst_121 : f32 to vector<8x32xf32>
    %383 = arith.subf %381, %382 : vector<8x32xf32>
    %384 = vector.extract_strided_slice %376 {offsets = [0, 96], sizes = [8, 32], strides = [1, 1]} : vector<8x128xf32> to vector<8x32xf32>
    %385 = arith.mulf %378, %365 : vector<8x32xf32>
    %386 = arith.mulf %377, %383 : vector<8x32xf32>
    %387 = arith.addf %385, %386 : vector<8x32xf32>
    %388 = math.tanh %387 : vector<8x32xf32>
    %389 = arith.mulf %384, %388 : vector<8x32xf32>
    %390 = arith.truncf %389 : vector<8x32xf32> to vector<8x32xbf16>
    %cst_122 = arith.constant dense<0.000000e+00> : vector<8x128xf32>
    %391 = tpu.matmul %390, %361, %cst_122 {dimension_numbers = #tpu.dot_dimension_numbers<[1], [0], [0], [1], [0, 0, 1, 1], [], []>} : vector<8x32xbf16>, vector<32x128xbf16>, vector<8x128xf32> -> vector<8x128xf32>
    %392 = arith.truncf %366 : vector<8x32xf32> to vector<8x32xbf16>
    %cst_123 = arith.constant dense<0.000000e+00> : vector<8x128xf32>
    %393 = tpu.matmul %392, %362, %cst_123 {dimension_numbers = #tpu.dot_dimension_numbers<[1], [0], [0], [1], [0, 0, 1, 1], [], []>} : vector<8x32xbf16>, vector<32x128xbf16>, vector<8x128xf32> -> vector<8x128xf32>
    %394 = arith.addf %391, %393 : vector<8x128xf32>
    %395 = vector.broadcast %363 : vector<1x128xf32> to vector<8x128xf32>
    %396 = arith.addf %394, %395 : vector<8x128xf32>
    %397 = arith.negf %396 : vector<8x128xf32>
    %398 = math.exp %397 : vector<8x128xf32>
    %cst_124 = arith.constant 1.000000e+00 : f32
    %399 = vector.broadcast %cst_124 : f32 to vector<8x128xf32>
    %400 = arith.addf %399, %398 : vector<8x128xf32>
    %401 = arith.divf %399, %400 : vector<8x128xf32>
    %402 = vector.extract_strided_slice %401 {offsets = [0, 0], sizes = [8, 32], strides = [1, 1]} : vector<8x128xf32> to vector<8x32xf32>
    %403 = vector.extract_strided_slice %401 {offsets = [0, 32], sizes = [8, 32], strides = [1, 1]} : vector<8x128xf32> to vector<8x32xf32>
    %404 = vector.extract_strided_slice %401 {offsets = [0, 64], sizes = [8, 32], strides = [1, 1]} : vector<8x128xf32> to vector<8x32xf32>
    %cst_125 = arith.constant 2.000000e+00 : f32
    %405 = vector.broadcast %cst_125 : f32 to vector<8x32xf32>
    %406 = arith.mulf %405, %404 : vector<8x32xf32>
    %cst_126 = arith.constant 1.000000e+00 : f32
    %407 = vector.broadcast %cst_126 : f32 to vector<8x32xf32>
    %408 = arith.subf %406, %407 : vector<8x32xf32>
    %409 = vector.extract_strided_slice %401 {offsets = [0, 96], sizes = [8, 32], strides = [1, 1]} : vector<8x128xf32> to vector<8x32xf32>
    %410 = arith.mulf %403, %367 : vector<8x32xf32>
    %411 = arith.mulf %402, %408 : vector<8x32xf32>
    %412 = arith.addf %410, %411 : vector<8x32xf32>
    %413 = math.tanh %412 : vector<8x32xf32>
    %414 = arith.mulf %409, %413 : vector<8x32xf32>
    %415 = vector.extract_strided_slice %359 {offsets = [8, 0], sizes = [8, 128], strides = [1, 1]} : vector<32x128xf32> to vector<8x128xf32>
    %416 = arith.truncf %389 : vector<8x32xf32> to vector<8x32xbf16>
    %cst_127 = arith.constant dense<0.000000e+00> : vector<8x128xf32>
    %417 = tpu.matmul %416, %360, %cst_127 {dimension_numbers = #tpu.dot_dimension_numbers<[1], [0], [0], [1], [0, 0, 1, 1], [], []>} : vector<8x32xbf16>, vector<32x128xbf16>, vector<8x128xf32> -> vector<8x128xf32>
    %418 = arith.addf %415, %417 : vector<8x128xf32>
    %419 = arith.negf %418 : vector<8x128xf32>
    %420 = math.exp %419 : vector<8x128xf32>
    %cst_128 = arith.constant 1.000000e+00 : f32
    %421 = vector.broadcast %cst_128 : f32 to vector<8x128xf32>
    %422 = arith.addf %421, %420 : vector<8x128xf32>
    %423 = arith.divf %421, %422 : vector<8x128xf32>
    %424 = vector.extract_strided_slice %423 {offsets = [0, 0], sizes = [8, 32], strides = [1, 1]} : vector<8x128xf32> to vector<8x32xf32>
    %425 = vector.extract_strided_slice %423 {offsets = [0, 32], sizes = [8, 32], strides = [1, 1]} : vector<8x128xf32> to vector<8x32xf32>
    %426 = vector.extract_strided_slice %423 {offsets = [0, 64], sizes = [8, 32], strides = [1, 1]} : vector<8x128xf32> to vector<8x32xf32>
    %cst_129 = arith.constant 2.000000e+00 : f32
    %427 = vector.broadcast %cst_129 : f32 to vector<8x32xf32>
    %428 = arith.mulf %427, %426 : vector<8x32xf32>
    %cst_130 = arith.constant 1.000000e+00 : f32
    %429 = vector.broadcast %cst_130 : f32 to vector<8x32xf32>
    %430 = arith.subf %428, %429 : vector<8x32xf32>
    %431 = vector.extract_strided_slice %423 {offsets = [0, 96], sizes = [8, 32], strides = [1, 1]} : vector<8x128xf32> to vector<8x32xf32>
    %432 = arith.mulf %425, %387 : vector<8x32xf32>
    %433 = arith.mulf %424, %430 : vector<8x32xf32>
    %434 = arith.addf %432, %433 : vector<8x32xf32>
    %435 = math.tanh %434 : vector<8x32xf32>
    %436 = arith.mulf %431, %435 : vector<8x32xf32>
    %437 = arith.truncf %436 : vector<8x32xf32> to vector<8x32xbf16>
    %cst_131 = arith.constant dense<0.000000e+00> : vector<8x128xf32>
    %438 = tpu.matmul %437, %361, %cst_131 {dimension_numbers = #tpu.dot_dimension_numbers<[1], [0], [0], [1], [0, 0, 1, 1], [], []>} : vector<8x32xbf16>, vector<32x128xbf16>, vector<8x128xf32> -> vector<8x128xf32>
    %439 = arith.truncf %414 : vector<8x32xf32> to vector<8x32xbf16>
    %cst_132 = arith.constant dense<0.000000e+00> : vector<8x128xf32>
    %440 = tpu.matmul %439, %362, %cst_132 {dimension_numbers = #tpu.dot_dimension_numbers<[1], [0], [0], [1], [0, 0, 1, 1], [], []>} : vector<8x32xbf16>, vector<32x128xbf16>, vector<8x128xf32> -> vector<8x128xf32>
    %441 = arith.addf %438, %440 : vector<8x128xf32>
    %442 = vector.broadcast %363 : vector<1x128xf32> to vector<8x128xf32>
    %443 = arith.addf %441, %442 : vector<8x128xf32>
    %444 = arith.negf %443 : vector<8x128xf32>
    %445 = math.exp %444 : vector<8x128xf32>
    %cst_133 = arith.constant 1.000000e+00 : f32
    %446 = vector.broadcast %cst_133 : f32 to vector<8x128xf32>
    %447 = arith.addf %446, %445 : vector<8x128xf32>
    %448 = arith.divf %446, %447 : vector<8x128xf32>
    %449 = vector.extract_strided_slice %448 {offsets = [0, 0], sizes = [8, 32], strides = [1, 1]} : vector<8x128xf32> to vector<8x32xf32>
    %450 = vector.extract_strided_slice %448 {offsets = [0, 32], sizes = [8, 32], strides = [1, 1]} : vector<8x128xf32> to vector<8x32xf32>
    %451 = vector.extract_strided_slice %448 {offsets = [0, 64], sizes = [8, 32], strides = [1, 1]} : vector<8x128xf32> to vector<8x32xf32>
    %cst_134 = arith.constant 2.000000e+00 : f32
    %452 = vector.broadcast %cst_134 : f32 to vector<8x32xf32>
    %453 = arith.mulf %452, %451 : vector<8x32xf32>
    %cst_135 = arith.constant 1.000000e+00 : f32
    %454 = vector.broadcast %cst_135 : f32 to vector<8x32xf32>
    %455 = arith.subf %453, %454 : vector<8x32xf32>
    %456 = vector.extract_strided_slice %448 {offsets = [0, 96], sizes = [8, 32], strides = [1, 1]} : vector<8x128xf32> to vector<8x32xf32>
    %457 = arith.mulf %450, %412 : vector<8x32xf32>
    %458 = arith.mulf %449, %455 : vector<8x32xf32>
    %459 = arith.addf %457, %458 : vector<8x32xf32>
    %460 = math.tanh %459 : vector<8x32xf32>
    %461 = arith.mulf %456, %460 : vector<8x32xf32>
    %462 = vector.extract_strided_slice %359 {offsets = [16, 0], sizes = [8, 128], strides = [1, 1]} : vector<32x128xf32> to vector<8x128xf32>
    %463 = arith.truncf %436 : vector<8x32xf32> to vector<8x32xbf16>
    %cst_136 = arith.constant dense<0.000000e+00> : vector<8x128xf32>
    %464 = tpu.matmul %463, %360, %cst_136 {dimension_numbers = #tpu.dot_dimension_numbers<[1], [0], [0], [1], [0, 0, 1, 1], [], []>} : vector<8x32xbf16>, vector<32x128xbf16>, vector<8x128xf32> -> vector<8x128xf32>
    %465 = arith.addf %462, %464 : vector<8x128xf32>
    %466 = arith.negf %465 : vector<8x128xf32>
    %467 = math.exp %466 : vector<8x128xf32>
    %cst_137 = arith.constant 1.000000e+00 : f32
    %468 = vector.broadcast %cst_137 : f32 to vector<8x128xf32>
    %469 = arith.addf %468, %467 : vector<8x128xf32>
    %470 = arith.divf %468, %469 : vector<8x128xf32>
    %471 = vector.extract_strided_slice %470 {offsets = [0, 0], sizes = [8, 32], strides = [1, 1]} : vector<8x128xf32> to vector<8x32xf32>
    %472 = vector.extract_strided_slice %470 {offsets = [0, 32], sizes = [8, 32], strides = [1, 1]} : vector<8x128xf32> to vector<8x32xf32>
    %473 = vector.extract_strided_slice %470 {offsets = [0, 64], sizes = [8, 32], strides = [1, 1]} : vector<8x128xf32> to vector<8x32xf32>
    %cst_138 = arith.constant 2.000000e+00 : f32
    %474 = vector.broadcast %cst_138 : f32 to vector<8x32xf32>
    %475 = arith.mulf %474, %473 : vector<8x32xf32>
    %cst_139 = arith.constant 1.000000e+00 : f32
    %476 = vector.broadcast %cst_139 : f32 to vector<8x32xf32>
    %477 = arith.subf %475, %476 : vector<8x32xf32>
    %478 = vector.extract_strided_slice %470 {offsets = [0, 96], sizes = [8, 32], strides = [1, 1]} : vector<8x128xf32> to vector<8x32xf32>
    %479 = arith.mulf %472, %434 : vector<8x32xf32>
    %480 = arith.mulf %471, %477 : vector<8x32xf32>
    %481 = arith.addf %479, %480 : vector<8x32xf32>
    %482 = math.tanh %481 : vector<8x32xf32>
    %483 = arith.mulf %478, %482 : vector<8x32xf32>
    %484 = arith.truncf %483 : vector<8x32xf32> to vector<8x32xbf16>
    %cst_140 = arith.constant dense<0.000000e+00> : vector<8x128xf32>
    %485 = tpu.matmul %484, %361, %cst_140 {dimension_numbers = #tpu.dot_dimension_numbers<[1], [0], [0], [1], [0, 0, 1, 1], [], []>} : vector<8x32xbf16>, vector<32x128xbf16>, vector<8x128xf32> -> vector<8x128xf32>
    %486 = arith.truncf %461 : vector<8x32xf32> to vector<8x32xbf16>
    %cst_141 = arith.constant dense<0.000000e+00> : vector<8x128xf32>
    %487 = tpu.matmul %486, %362, %cst_141 {dimension_numbers = #tpu.dot_dimension_numbers<[1], [0], [0], [1], [0, 0, 1, 1], [], []>} : vector<8x32xbf16>, vector<32x128xbf16>, vector<8x128xf32> -> vector<8x128xf32>
    %488 = arith.addf %485, %487 : vector<8x128xf32>
    %489 = vector.broadcast %363 : vector<1x128xf32> to vector<8x128xf32>
    %490 = arith.addf %488, %489 : vector<8x128xf32>
    %491 = arith.negf %490 : vector<8x128xf32>
    %492 = math.exp %491 : vector<8x128xf32>
    %cst_142 = arith.constant 1.000000e+00 : f32
    %493 = vector.broadcast %cst_142 : f32 to vector<8x128xf32>
    %494 = arith.addf %493, %492 : vector<8x128xf32>
    %495 = arith.divf %493, %494 : vector<8x128xf32>
    %496 = vector.extract_strided_slice %495 {offsets = [0, 0], sizes = [8, 32], strides = [1, 1]} : vector<8x128xf32> to vector<8x32xf32>
    %497 = vector.extract_strided_slice %495 {offsets = [0, 32], sizes = [8, 32], strides = [1, 1]} : vector<8x128xf32> to vector<8x32xf32>
    %498 = vector.extract_strided_slice %495 {offsets = [0, 64], sizes = [8, 32], strides = [1, 1]} : vector<8x128xf32> to vector<8x32xf32>
    %cst_143 = arith.constant 2.000000e+00 : f32
    %499 = vector.broadcast %cst_143 : f32 to vector<8x32xf32>
    %500 = arith.mulf %499, %498 : vector<8x32xf32>
    %cst_144 = arith.constant 1.000000e+00 : f32
    %501 = vector.broadcast %cst_144 : f32 to vector<8x32xf32>
    %502 = arith.subf %500, %501 : vector<8x32xf32>
    %503 = vector.extract_strided_slice %495 {offsets = [0, 96], sizes = [8, 32], strides = [1, 1]} : vector<8x128xf32> to vector<8x32xf32>
    %504 = arith.mulf %497, %459 : vector<8x32xf32>
    %505 = arith.mulf %496, %502 : vector<8x32xf32>
    %506 = arith.addf %504, %505 : vector<8x32xf32>
    %507 = math.tanh %506 : vector<8x32xf32>
    %508 = arith.mulf %503, %507 : vector<8x32xf32>
    %509 = vector.extract_strided_slice %359 {offsets = [24, 0], sizes = [8, 128], strides = [1, 1]} : vector<32x128xf32> to vector<8x128xf32>
    %510 = arith.truncf %483 : vector<8x32xf32> to vector<8x32xbf16>
    %cst_145 = arith.constant dense<0.000000e+00> : vector<8x128xf32>
    %511 = tpu.matmul %510, %360, %cst_145 {dimension_numbers = #tpu.dot_dimension_numbers<[1], [0], [0], [1], [0, 0, 1, 1], [], []>} : vector<8x32xbf16>, vector<32x128xbf16>, vector<8x128xf32> -> vector<8x128xf32>
    %512 = arith.addf %509, %511 : vector<8x128xf32>
    %513 = arith.negf %512 : vector<8x128xf32>
    %514 = math.exp %513 : vector<8x128xf32>
    %cst_146 = arith.constant 1.000000e+00 : f32
    %515 = vector.broadcast %cst_146 : f32 to vector<8x128xf32>
    %516 = arith.addf %515, %514 : vector<8x128xf32>
    %517 = arith.divf %515, %516 : vector<8x128xf32>
    %518 = vector.extract_strided_slice %517 {offsets = [0, 0], sizes = [8, 32], strides = [1, 1]} : vector<8x128xf32> to vector<8x32xf32>
    %519 = vector.extract_strided_slice %517 {offsets = [0, 32], sizes = [8, 32], strides = [1, 1]} : vector<8x128xf32> to vector<8x32xf32>
    %520 = vector.extract_strided_slice %517 {offsets = [0, 64], sizes = [8, 32], strides = [1, 1]} : vector<8x128xf32> to vector<8x32xf32>
    %cst_147 = arith.constant 2.000000e+00 : f32
    %521 = vector.broadcast %cst_147 : f32 to vector<8x32xf32>
    %522 = arith.mulf %521, %520 : vector<8x32xf32>
    %cst_148 = arith.constant 1.000000e+00 : f32
    %523 = vector.broadcast %cst_148 : f32 to vector<8x32xf32>
    %524 = arith.subf %522, %523 : vector<8x32xf32>
    %525 = vector.extract_strided_slice %517 {offsets = [0, 96], sizes = [8, 32], strides = [1, 1]} : vector<8x128xf32> to vector<8x32xf32>
    %526 = arith.mulf %519, %481 : vector<8x32xf32>
    %527 = arith.mulf %518, %524 : vector<8x32xf32>
    %528 = arith.addf %526, %527 : vector<8x32xf32>
    %529 = math.tanh %528 : vector<8x32xf32>
    %530 = arith.mulf %525, %529 : vector<8x32xf32>
    %531 = arith.truncf %530 : vector<8x32xf32> to vector<8x32xbf16>
    %cst_149 = arith.constant dense<0.000000e+00> : vector<8x128xf32>
    %532 = tpu.matmul %531, %361, %cst_149 {dimension_numbers = #tpu.dot_dimension_numbers<[1], [0], [0], [1], [0, 0, 1, 1], [], []>} : vector<8x32xbf16>, vector<32x128xbf16>, vector<8x128xf32> -> vector<8x128xf32>
    %533 = arith.truncf %508 : vector<8x32xf32> to vector<8x32xbf16>
    %cst_150 = arith.constant dense<0.000000e+00> : vector<8x128xf32>
    %534 = tpu.matmul %533, %362, %cst_150 {dimension_numbers = #tpu.dot_dimension_numbers<[1], [0], [0], [1], [0, 0, 1, 1], [], []>} : vector<8x32xbf16>, vector<32x128xbf16>, vector<8x128xf32> -> vector<8x128xf32>
    %535 = arith.addf %532, %534 : vector<8x128xf32>
    %536 = vector.broadcast %363 : vector<1x128xf32> to vector<8x128xf32>
    %537 = arith.addf %535, %536 : vector<8x128xf32>
    %538 = arith.negf %537 : vector<8x128xf32>
    %539 = math.exp %538 : vector<8x128xf32>
    %cst_151 = arith.constant 1.000000e+00 : f32
    %540 = vector.broadcast %cst_151 : f32 to vector<8x128xf32>
    %541 = arith.addf %540, %539 : vector<8x128xf32>
    %542 = arith.divf %540, %541 : vector<8x128xf32>
    %543 = vector.extract_strided_slice %542 {offsets = [0, 0], sizes = [8, 32], strides = [1, 1]} : vector<8x128xf32> to vector<8x32xf32>
    %544 = vector.extract_strided_slice %542 {offsets = [0, 32], sizes = [8, 32], strides = [1, 1]} : vector<8x128xf32> to vector<8x32xf32>
    %545 = vector.extract_strided_slice %542 {offsets = [0, 64], sizes = [8, 32], strides = [1, 1]} : vector<8x128xf32> to vector<8x32xf32>
    %cst_152 = arith.constant 2.000000e+00 : f32
    %546 = vector.broadcast %cst_152 : f32 to vector<8x32xf32>
    %547 = arith.mulf %546, %545 : vector<8x32xf32>
    %cst_153 = arith.constant 1.000000e+00 : f32
    %548 = vector.broadcast %cst_153 : f32 to vector<8x32xf32>
    %549 = arith.subf %547, %548 : vector<8x32xf32>
    %550 = vector.extract_strided_slice %542 {offsets = [0, 96], sizes = [8, 32], strides = [1, 1]} : vector<8x128xf32> to vector<8x32xf32>
    %551 = arith.mulf %544, %506 : vector<8x32xf32>
    %552 = arith.mulf %543, %549 : vector<8x32xf32>
    %553 = arith.addf %551, %552 : vector<8x32xf32>
    %554 = math.tanh %553 : vector<8x32xf32>
    %555 = arith.mulf %550, %554 : vector<8x32xf32>
    %556 = vector.extract_strided_slice %530 {offsets = [0, 0], sizes = [1, 32], strides = [1, 1]} : vector<8x32xf32> to vector<1x32xf32>
    %557 = vector.extract_strided_slice %530 {offsets = [1, 0], sizes = [1, 32], strides = [1, 1]} : vector<8x32xf32> to vector<1x32xf32>
    %558 = vector.extract_strided_slice %555 {offsets = [0, 0], sizes = [1, 32], strides = [1, 1]} : vector<8x32xf32> to vector<1x32xf32>
    %559 = vector.extract_strided_slice %555 {offsets = [1, 0], sizes = [1, 32], strides = [1, 1]} : vector<8x32xf32> to vector<1x32xf32>
    %560 = tpu.concatenate %556, %557 in 1 : vector<1x32xf32>, vector<1x32xf32> -> vector<1x64xf32>
    %561 = tpu.concatenate %558, %559 in 1 : vector<1x32xf32>, vector<1x32xf32> -> vector<1x64xf32>
    %562 = tpu.concatenate %560, %561 in 0 : vector<1x64xf32>, vector<1x64xf32> -> vector<2x64xf32>
    %563 = vector.extract_strided_slice %528 {offsets = [0, 0], sizes = [1, 32], strides = [1, 1]} : vector<8x32xf32> to vector<1x32xf32>
    %564 = vector.extract_strided_slice %528 {offsets = [1, 0], sizes = [1, 32], strides = [1, 1]} : vector<8x32xf32> to vector<1x32xf32>
    %565 = vector.extract_strided_slice %553 {offsets = [0, 0], sizes = [1, 32], strides = [1, 1]} : vector<8x32xf32> to vector<1x32xf32>
    %566 = vector.extract_strided_slice %553 {offsets = [1, 0], sizes = [1, 32], strides = [1, 1]} : vector<8x32xf32> to vector<1x32xf32>
    %567 = tpu.concatenate %563, %564 in 1 : vector<1x32xf32>, vector<1x32xf32> -> vector<1x64xf32>
    %568 = tpu.concatenate %565, %566 in 1 : vector<1x32xf32>, vector<1x32xf32> -> vector<1x64xf32>
    %569 = tpu.concatenate %567, %568 in 0 : vector<1x64xf32>, vector<1x64xf32> -> vector<2x64xf32>
    %c560 = arith.constant 560 : index
    %c0_154 = arith.constant 0 : index
    %570 = vector.load %arg2[%c560, %c0_154] : memref<752x128xbf16, #tpu.memory_space<vmem>>, vector<64x64xbf16>
    %571 = arith.truncf %562 : vector<2x64xf32> to vector<2x64xbf16>
    %cst_155 = arith.constant dense<0.000000e+00> : vector<2x64xf32>
    %572 = tpu.matmul %571, %570, %cst_155 {dimension_numbers = #tpu.dot_dimension_numbers<[1], [0], [0], [1], [0, 0, 1, 1], [], []>} : vector<2x64xbf16>, vector<64x64xbf16>, vector<2x64xf32> -> vector<2x64xf32>
    %c624 = arith.constant 624 : index
    %c0_156 = arith.constant 0 : index
    %573 = vector.load %arg2[%c624, %c0_156] : memref<752x128xbf16, #tpu.memory_space<vmem>>, vector<64x64xbf16>
    %574 = arith.truncf %569 : vector<2x64xf32> to vector<2x64xbf16>
    %cst_157 = arith.constant dense<0.000000e+00> : vector<2x64xf32>
    %575 = tpu.matmul %574, %573, %cst_157 {dimension_numbers = #tpu.dot_dimension_numbers<[1], [0], [0], [1], [0, 0, 1, 1], [], []>} : vector<2x64xbf16>, vector<64x64xbf16>, vector<2x64xf32> -> vector<2x64xf32>
    %576 = arith.addf %572, %575 : vector<2x64xf32>
    %c6 = arith.constant 6 : index
    %c0_158 = arith.constant 0 : index
    %577 = vector.load %arg3[%c6, %c0_158] : memref<8x128xf32, #tpu.memory_space<vmem>>, vector<1x64xf32>
    %578 = vector.broadcast %577 : vector<1x64xf32> to vector<2x64xf32>
    %579 = arith.addf %576, %578 : vector<2x64xf32>
    %cst_159 = arith.constant 0.000000e+00 : f32
    %580 = vector.broadcast %cst_159 : f32 to vector<2x64xf32>
    %581 = arith.maximumf %579, %580 : vector<2x64xf32>
    %c688 = arith.constant 688 : index
    %c0_160 = arith.constant 0 : index
    %582 = vector.load %arg2[%c688, %c0_160] : memref<752x128xbf16, #tpu.memory_space<vmem>>, vector<64x2xbf16>
    %583 = arith.truncf %581 : vector<2x64xf32> to vector<2x64xbf16>
    %cst_161 = arith.constant dense<0.000000e+00> : vector<2x2xf32>
    %584 = tpu.matmul %583, %582, %cst_161 {dimension_numbers = #tpu.dot_dimension_numbers<[1], [0], [0], [1], [0, 0, 1, 1], [], []>} : vector<2x64xbf16>, vector<64x2xbf16>, vector<2x2xf32> -> vector<2x2xf32>
    %c7 = arith.constant 7 : index
    %c0_162 = arith.constant 0 : index
    %585 = vector.load %arg3[%c7, %c0_162] : memref<8x128xf32, #tpu.memory_space<vmem>>, vector<1x2xf32>
    %586 = vector.broadcast %585 : vector<1x2xf32> to vector<2x2xf32>
    %587 = arith.addf %584, %586 : vector<2x2xf32>
    %cst_163 = arith.constant dense<0xFF800000> : vector<2xf32>
    %588 = vector.multi_reduction <maximumf>, %587, %cst_163 [1] : vector<2x2xf32> to vector<2xf32>
    %589 = vector.shape_cast %588 : vector<2xf32> to vector<2x1xf32>
    %590 = vector.broadcast %589 : vector<2x1xf32> to vector<2x2xf32>
    %591 = arith.subf %587, %590 : vector<2x2xf32>
    %592 = math.exp %591 : vector<2x2xf32>
    %cst_164 = arith.constant dense<0.000000e+00> : vector<2xf32>
    %593 = vector.multi_reduction <add>, %592, %cst_164 [1] : vector<2x2xf32> to vector<2xf32>
    %594 = vector.shape_cast %593 : vector<2xf32> to vector<2x1xf32>
    %595 = math.log %594 : vector<2x1xf32>
    %596 = arith.addf %589, %595 : vector<2x1xf32>
    %597 = vector.broadcast %596 : vector<2x1xf32> to vector<2x2xf32>
    %598 = arith.subf %587, %597 : vector<2x2xf32>
    %c0_165 = arith.constant 0 : index
    %c0_166 = arith.constant 0 : index
    %599 = vector.load %arg4[%c0_165, %c0_166] : memref<2x2xf32, #tpu.memory_space<vmem>>, vector<2x2xf32>
    tpu.vector_store %arg4[%c0_165, %c0_166], %598 {strides = array<i32>} : memref<2x2xf32, #tpu.memory_space<vmem>>, vector<2x2xf32>,
    return
  }
}

</mosaic_0001>

<llo_original>
// kernel: _lambda_.1
$region0: #{_lambda_.1}
  #allocation0 [shape = 'u32[]', space=smem, size = 0x4, offset = 0x4, fixed_abs, tag = 'smem constant byte address 0x4 - core index']
  #allocation1 [shape = 'u32[144,128]{1,0:T(1,128)}', space=vmem, size = 0x12000, scoped, tag = 'internal scratch']
  #allocation2 [shape = 'f32[240,128]{1,0:T(8,128)}', space=vmem, size = 0x1e000, scoped, tag = 'scratch operand']
  %s0 = inlined_call_operand.vmem [shape: bf16[240,16], index: 0, kind: input, shape index: {}]
  %s1 = inlined_call_operand.vmem [shape: bf16[8,8], index: 1, kind: input, shape index: {}]
  %s2 = inlined_call_operand.vmem [shape: bf16[752,128], index: 2, kind: input, shape index: {}]
  %s3 = inlined_call_operand.vmem [shape: f32[8,128], index: 3, kind: input, shape index: {}]
  %s4 = inlined_call_operand.hbm [shape: f32[2,2], index: 4, kind: output, shape index: {}]
  %s5 = sld [smem:[#allocation0]]
  $region26: #{_lambda_.1} parent=0
    _
  %s7 = ssub.s32 1, %s5
  %s8 = scalar_select 0, %s7, %s5
  $region1: #{_lambda_.1} parent=0
    #allocation3 [shape = 'u8[1024]{0}', space=vmem, size = 0x400, scoped, tag = 'output window, operand 0, single buffered']
    #allocation4 [shape = 's32[1]{0}', space=sflag, size = 0x4, scoped, tag = 'scoped memory for _lambda_.1']
    %9 = vsyncpa [#allocation4], 0
    // Predicated region
    $region2: #{_lambda_.1} parent=1 // pred_check
      _
    $region3: #{_lambda_.1} parent=1 // pred_check_branch
      %11 = sbr.rel (0) target = $region5
    $region4: #{_lambda_.1} parent=1 // pred_region
      _
    $region5: #{_lambda_.1} parent=1 // pred_fallthru
      _
    // Predicated region
    $region6: #{_lambda_.1} parent=1 // pred_check
      _
    $region7: #{_lambda_.1} parent=1 // pred_check_branch
      %13 = sbr.rel (0) target = $region9
    $region8: #{_lambda_.1} parent=1 // pred_region
      _
    $region9: #{_lambda_.1} parent=1 // pred_fallthru
      _
    // Predicated region
    $region10: #{_lambda_.1} parent=1 // pred_check
      _
    $region11: #{_lambda_.1} parent=1 // pred_check_branch
      %15 = sbr.rel (0) target = $region13
    $region12: #{_lambda_.1} parent=1 // pred_region
      _
    $region13: #{_lambda_.1} parent=1 // pred_fallthru
      _
    // Predicated region
    $region14: #{_lambda_.1} parent=1 // pred_check
      _
    $region15: #{_lambda_.1} parent=1 // pred_check_branch
      %17 = sbr.rel (0) target = $region17
    $region16: #{_lambda_.1} parent=1 // pred_region
      _
    $region17: #{_lambda_.1} parent=1 // pred_fallthru
      _
    %v19 = vld [vmem:[%s0] sm:$0xf]
    %v20 = vld [vmem:[%s0 + $0x4] sm:$0xf]
    %v21 = vld [vmem:[%s0 + $0x8] sm:$0xf]
    %v22 = vld [vmem:[%s0 + $0xc] sm:$0xf]
    %v23 = vld [vmem:[%s0 + $0x10] sm:$0xf]
    %v24 = vld [vmem:[%s0 + $0x14] sm:$0xf]
    %v25 = vld [vmem:[%s0 + $0x18] sm:$0xf]
    %v26 = vld [vmem:[%s0 + $0x1c] sm:$0xf]
    %v27 = vld [vmem:[%s0 + $0x20] sm:$0xf]
    %v28 = vld [vmem:[%s0 + $0x24] sm:$0xf]
    %v29 = vld [vmem:[%s0 + $0x28] sm:$0xf]
    %v30 = vld [vmem:[%s0 + $0x2c] sm:$0xf]
    %v31 = vld [vmem:[%s0 + $0x30] sm:$0xf]
    %v32 = vld [vmem:[%s0 + $0x34] sm:$0xf]
    %v33 = vld [vmem:[%s0 + $0x38] sm:$0xf]
    %v34 = vld [vmem:[%s0 + $0x3c] sm:$0xf]
    %v35 = vld [vmem:[%s0 + $0x40] sm:$0xf]
    %v36 = vld [vmem:[%s0 + $0x44] sm:$0xf]
    %v37 = vld [vmem:[%s0 + $0x48] sm:$0xf]
    %v38 = vld [vmem:[%s0 + $0x4c] sm:$0xf]
    %v39 = vld [vmem:[%s0 + $0x50] sm:$0xf]
    %v40 = vld [vmem:[%s0 + $0x54] sm:$0xf]
    %v41 = vld [vmem:[%s0 + $0x58] sm:$0xf]
    %v42 = vld [vmem:[%s0 + $0x5c] sm:$0xf]
    %v43 = vld [vmem:[%s0 + $0x60] sm:$0xf]
    %v44 = vld [vmem:[%s0 + $0x64] sm:$0xf]
    %v45 = vld [vmem:[%s0 + $0x68] sm:$0xf]
    %v46 = vld [vmem:[%s0 + $0x6c] sm:$0xf]
    %v47 = vld [vmem:[%s0 + $0x70] sm:$0xf]
    %v48 = vld [vmem:[%s0 + $0x74] sm:$0xf]
    %v49 = vld [vmem:[%s2] sm:$0xf]
    %v50 = vld [vmem:[%s2 + $0x4] sm:$0xf]
    %v51 = vld [vmem:[%s3] sm:$0x1]
    %v52 = vlaneseq
    %v53 = vshrl.u32 %v52, 7
    %v54 = vsub.s32 0, %v53
    %v55 = vrot.slane %v51, %v54
    %v86 = vunpack.c.l.b16 %v19
    %v87 = vunpack.c.l.b16 %v20
    %v88 = vunpack.c.l.b16 %v21
    %v89 = vunpack.c.l.b16 %v22
    %v90 = vunpack.c.l.b16 %v23
    %v91 = vunpack.c.l.b16 %v24
    %v92 = vunpack.c.l.b16 %v25
    %v93 = vunpack.c.l.b16 %v26
    %v94 = vunpack.c.l.b16 %v27
    %v95 = vunpack.c.l.b16 %v28
    %v96 = vunpack.c.l.b16 %v29
    %v97 = vunpack.c.l.b16 %v30
    %v98 = vunpack.c.l.b16 %v31
    %v99 = vunpack.c.l.b16 %v32
    %v100 = vunpack.c.l.b16 %v33
    %v101 = vunpack.c.l.b16 %v34
    %v102 = vunpack.c.l.b16 %v35
    %v103 = vunpack.c.l.b16 %v36
    %v104 = vunpack.c.l.b16 %v37
    %v105 = vunpack.c.l.b16 %v38
    %v106 = vunpack.c.l.b16 %v39
    %v107 = vunpack.c.l.b16 %v40
    %v108 = vunpack.c.l.b16 %v41
    %v109 = vunpack.c.l.b16 %v42
    %v110 = vunpack.c.l.b16 %v43
    %v111 = vunpack.c.l.b16 %v44
    %v112 = vunpack.c.l.b16 %v45
    %v113 = vunpack.c.l.b16 %v46
    %v114 = vunpack.c.l.b16 %v47
    %v115 = vunpack.c.l.b16 %v48
    %v116 = vpack.c.b16 %v87, %v86
    %v117 = vpack.c.b16 %v89, %v88
    %v118 = vpack.c.b16 %v91, %v90
    %v119 = vpack.c.b16 %v93, %v92
    %v120 = vpack.c.b16 %v95, %v94
    %v121 = vpack.c.b16 %v97, %v96
    %v122 = vpack.c.b16 %v99, %v98
    %v123 = vpack.c.b16 %v101, %v100
    %v124 = vpack.c.b16 %v103, %v102
    %v125 = vpack.c.b16 %v105, %v104
    %v126 = vpack.c.b16 %v107, %v106
    %v127 = vpack.c.b16 %v109, %v108
    %v128 = vpack.c.b16 %v111, %v110
    %v129 = vpack.c.b16 %v113, %v112
    %v130 = vpack.c.b16 %v115, %v114
    %v133 = vunpack.c.l.b16 %v49
    %v134 = vunpack.c.l.b16 %v50
    %v135 = vpack.c.b16 %v134, %v133
    %vm137 = vcmask 130048
    %v139 = vsel %vm137, %v116, 0
    %v142 = vsel %vm137, %v117, 0
    %v145 = vsel %vm137, %v118, 0
    %v148 = vsel %vm137, %v119, 0
    %v151 = vsel %vm137, %v120, 0
    %v154 = vsel %vm137, %v121, 0
    %v157 = vsel %vm137, %v122, 0
    %v160 = vsel %vm137, %v123, 0
    %v163 = vsel %vm137, %v124, 0
    %v166 = vsel %vm137, %v125, 0
    %v169 = vsel %vm137, %v126, 0
    %v172 = vsel %vm137, %v127, 0
    %v175 = vsel %vm137, %v128, 0
    %v178 = vsel %vm137, %v129, 0
    %v181 = vsel %vm137, %v130, 0
    %183 = vmatprep.subr.bf16.mxu0 0
    %184 = vmatpush1.bf16.msra.mxu0 %v135
    %185 = vmatprep.subr.bf16.mxu0 0
    %186 = vmatpush1.bf16.msra.mxu0 0
    %187 = vmatprep.subr.bf16.mxu0 0
    %188 = vmatpush1.bf16.msra.mxu0 0
    %189 = vmatprep.subr.bf16.mxu0 0
    %190 = vmatpush1.bf16.msra.mxu0 0
    %191 = vmatprep.subr.bf16.mxu0 0
    %192 = vmatpush1.bf16.msra.mxu0 0
    %193 = vmatprep.subr.bf16.mxu0 0
    %194 = vmatpush1.bf16.msra.mxu0 0
    %195 = vmatprep.subr.bf16.mxu0 0
    %196 = vmatpush1.bf16.msra.mxu0 0
    %197 = vmatprep.subr.bf16.mxu0 0
    %198 = vmatpush1.bf16.msra.mxu0 0
    %199 = vmatprep.subr.bf16.mxu0 0
    %200 = vmatpush1.bf16.msra.mxu0 0
    %201 = vmatprep.subr.bf16.mxu0 0
    %202 = vmatpush1.bf16.msra.mxu0 0
    %203 = vmatprep.subr.bf16.mxu0 0
    %204 = vmatpush1.bf16.msra.mxu0 0
    %205 = vmatprep.subr.bf16.mxu0 0
    %206 = vmatpush1.bf16.msra.mxu0 0
    %207 = vmatprep.subr.bf16.mxu0 0
    %208 = vmatpush1.bf16.msra.mxu0 0
    %209 = vmatprep.subr.bf16.mxu0 0
    %210 = vmatpush1.bf16.msra.mxu0 0
    %211 = vmatprep.subr.bf16.mxu0 0
    %212 = vmatpush1.bf16.msra.mxu0 0
    %213 = vmatprep.subr.bf16.mxu0 0
    %214 = vmatpush1.bf16.msra.mxu0 0
    %215 = vmatprep.mubr.bf16.mxu0 0
    %216 = vmatmul.mubr.bf16.gmra.mrb[0].mxu0 %v139
    %v217 = vpop.f32.mrb[0].mxu0
    %v218 = vadd.f32 %v55, %v217
    %v219 = vpop.f32.mrb[0].mxu0
    %v220 = vpop.f32.mrb[0].mxu0
    %v221 = vadd.f32 %v55, %v220
    %v222 = vpop.f32.mrb[0].mxu0
    %223 = vmatprep.mubr.bf16.mxu0 0
    %224 = vmatmul.mubr.bf16.gmra.mrb[0].mxu0 %v142
    %v225 = vpop.f32.mrb[0].mxu0
    %v226 = vadd.f32 %v55, %v225
    %v227 = vpop.f32.mrb[0].mxu0
    %v228 = vpop.f32.mrb[0].mxu0
    %v229 = vadd.f32 %v55, %v228
    %v230 = vpop.f32.mrb[0].mxu0
    %231 = vmatprep.mubr.bf16.mxu0 0
    %232 = vmatmul.mubr.bf16.gmra.mrb[0].mxu0 %v145
    %v233 = vpop.f32.mrb[0].mxu0
    %v234 = vadd.f32 %v55, %v233
    %v235 = vpop.f32.mrb[0].mxu0
    %v236 = vpop.f32.mrb[0].mxu0
    %v237 = vadd.f32 %v55, %v236
    %v238 = vpop.f32.mrb[0].mxu0
    %239 = vmatprep.mubr.bf16.mxu0 0
    %240 = vmatmul.mubr.bf16.gmra.mrb[0].mxu0 %v148
    %v241 = vpop.f32.mrb[0].mxu0
    %v242 = vadd.f32 %v55, %v241
    %v243 = vpop.f32.mrb[0].mxu0
    %v244 = vpop.f32.mrb[0].mxu0
    %v245 = vadd.f32 %v55, %v244
    %v246 = vpop.f32.mrb[0].mxu0
    %247 = vmatprep.mubr.bf16.mxu0 0
    %248 = vmatmul.mubr.bf16.gmra.mrb[0].mxu0 %v151
    %v249 = vpop.f32.mrb[0].mxu0
    %v250 = vadd.f32 %v55, %v249
    %v251 = vpop.f32.mrb[0].mxu0
    %v252 = vpop.f32.mrb[0].mxu0
    %v253 = vadd.f32 %v55, %v252
    %v254 = vpop.f32.mrb[0].mxu0
    %255 = vmatprep.mubr.bf16.mxu0 0
    %256 = vmatmul.mubr.bf16.gmra.mrb[0].mxu0 %v154
    %v257 = vpop.f32.mrb[0].mxu0
    %v258 = vadd.f32 %v55, %v257
    %v259 = vpop.f32.mrb[0].mxu0
    %v260 = vpop.f32.mrb[0].mxu0
    %v261 = vadd.f32 %v55, %v260
    %v262 = vpop.f32.mrb[0].mxu0
    %263 = vmatprep.mubr.bf16.mxu0 0
    %264 = vmatmul.mubr.bf16.gmra.mrb[0].mxu0 %v157
    %v265 = vpop.f32.mrb[0].mxu0
    %v266 = vadd.f32 %v55, %v265
    %v267 = vpop.f32.mrb[0].mxu0
    %v268 = vpop.f32.mrb[0].mxu0
    %v269 = vadd.f32 %v55, %v268
    %v270 = vpop.f32.mrb[0].mxu0
    %271 = vmatprep.mubr.bf16.mxu0 0
    %272 = vmatmul.mubr.bf16.gmra.mrb[0].mxu0 %v160
    %v273 = vpop.f32.mrb[0].mxu0
    %v274 = vadd.f32 %v55, %v273
    %v275 = vpop.f32.mrb[0].mxu0
    %v276 = vpop.f32.mrb[0].mxu0
    %v277 = vadd.f32 %v55, %v276
    %v278 = vpop.f32.mrb[0].mxu0
    %279 = vmatprep.mubr.bf16.mxu0 0
    %280 = vmatmul.mubr.bf16.gmra.mrb[0].mxu0 %v163
    %v281 = vpop.f32.mrb[0].mxu0
    %v282 = vadd.f32 %v55, %v281
    %v283 = vpop.f32.mrb[0].mxu0
    %v284 = vpop.f32.mrb[0].mxu0
    %v285 = vadd.f32 %v55, %v284
    %v286 = vpop.f32.mrb[0].mxu0
    %287 = vmatprep.mubr.bf16.mxu0 0
    %288 = vmatmul.mubr.bf16.gmra.mrb[0].mxu0 %v166
    %v289 = vpop.f32.mrb[0].mxu0
    %v290 = vadd.f32 %v55, %v289
    %v291 = vpop.f32.mrb[0].mxu0
    %v292 = vpop.f32.mrb[0].mxu0
    %v293 = vadd.f32 %v55, %v292
    %v294 = vpop.f32.mrb[0].mxu0
    %295 = vmatprep.mubr.bf16.mxu0 0
    %296 = vmatmul.mubr.bf16.gmra.mrb[0].mxu0 %v169
    %v297 = vpop.f32.mrb[0].mxu0
    %v298 = vadd.f32 %v55, %v297
    %v299 = vpop.f32.mrb[0].mxu0
    %v300 = vpop.f32.mrb[0].mxu0
    %v301 = vadd.f32 %v55, %v300
    %v302 = vpop.f32.mrb[0].mxu0
    %303 = vmatprep.mubr.bf16.mxu0 0
    %304 = vmatmul.mubr.bf16.gmra.mrb[0].mxu0 %v172
    %v305 = vpop.f32.mrb[0].mxu0
    %v306 = vadd.f32 %v55, %v305
    %v307 = vpop.f32.mrb[0].mxu0
    %v308 = vpop.f32.mrb[0].mxu0
    %v309 = vadd.f32 %v55, %v308
    %v310 = vpop.f32.mrb[0].mxu0
    %311 = vmatprep.mubr.bf16.mxu0 0
    %312 = vmatmul.mubr.bf16.gmra.mrb[0].mxu0 %v175
    %v313 = vpop.f32.mrb[0].mxu0
    %v314 = vadd.f32 %v55, %v313
    %v315 = vpop.f32.mrb[0].mxu0
    %v316 = vpop.f32.mrb[0].mxu0
    %v317 = vadd.f32 %v55, %v316
    %v318 = vpop.f32.mrb[0].mxu0
    %319 = vmatprep.mubr.bf16.mxu0 0
    %320 = vmatmul.mubr.bf16.gmra.mrb[0].mxu0 %v178
    %v321 = vpop.f32.mrb[0].mxu0
    %v322 = vadd.f32 %v55, %v321
    %v323 = vpop.f32.mrb[0].mxu0
    %v324 = vpop.f32.mrb[0].mxu0
    %v325 = vadd.f32 %v55, %v324
    %v326 = vpop.f32.mrb[0].mxu0
    %327 = vmatprep.mubr.bf16.mxu0 0
    %328 = vmatmul.mubr.bf16.gmra.mrb[0].mxu0 %v181
    %v329 = vpop.f32.mrb[0].mxu0
    %v330 = vadd.f32 %v55, %v329
    %v331 = vpop.f32.mrb[0].mxu0
    %v332 = vpop.f32.mrb[0].mxu0
    %v333 = vadd.f32 %v55, %v332
    %v334 = vpop.f32.mrb[0].mxu0
    %335 = vdwg.mxu0
    %336 = vst [vmem:[#allocation2] sm:$0xff] %v218
    %337 = vst [vmem:[#allocation2 + $0x8] sm:$0xff] %v221
    %338 = vst [vmem:[#allocation2 + $0x10] sm:$0xff] %v226
    %339 = vst [vmem:[#allocation2 + $0x18] sm:$0xff] %v229
    %340 = vst [vmem:[#allocation2 + $0x20] sm:$0xff] %v234
    %341 = vst [vmem:[#allocation2 + $0x28] sm:$0xff] %v237
    %342 = vst [vmem:[#allocation2 + $0x30] sm:$0xff] %v242
    %343 = vst [vmem:[#allocation2 + $0x38] sm:$0xff] %v245
    %344 = vst [vmem:[#allocation2 + $0x40] sm:$0xff] %v250
    %345 = vst [vmem:[#allocation2 + $0x48] sm:$0xff] %v253
    %346 = vst [vmem:[#allocation2 + $0x50] sm:$0xff] %v258
    %347 = vst [vmem:[#allocation2 + $0x58] sm:$0xff] %v261
    %348 = vst [vmem:[#allocation2 + $0x60] sm:$0xff] %v266
    %349 = vst [vmem:[#allocation2 + $0x68] sm:$0xff] %v269
    %350 = vst [vmem:[#allocation2 + $0x70] sm:$0xff] %v274
    %351 = vst [vmem:[#allocation2 + $0x78] sm:$0xff] %v277
    %352 = vst [vmem:[#allocation2 + $0x80] sm:$0xff] %v282
    %353 = vst [vmem:[#allocation2 + $0x88] sm:$0xff] %v285
    %354 = vst [vmem:[#allocation2 + $0x90] sm:$0xff] %v290
    %355 = vst [vmem:[#allocation2 + $0x98] sm:$0xff] %v293
    %356 = vst [vmem:[#allocation2 + $0xa0] sm:$0xff] %v298
    %357 = vst [vmem:[#allocation2 + $0xa8] sm:$0xff] %v301
    %358 = vst [vmem:[#allocation2 + $0xb0] sm:$0xff] %v306
    %359 = vst [vmem:[#allocation2 + $0xb8] sm:$0xff] %v309
    %360 = vst [vmem:[#allocation2 + $0xc0] sm:$0xff] %v314
    %361 = vst [vmem:[#allocation2 + $0xc8] sm:$0xff] %v317
    %362 = vst [vmem:[#allocation2 + $0xd0] sm:$0xff] %v322
    %363 = vst [vmem:[#allocation2 + $0xd8] sm:$0xff] %v325
    %364 = vst [vmem:[#allocation2 + $0xe0] sm:$0xff] %v330
    %365 = vst [vmem:[#allocation2 + $0xe8] sm:$0xff] %v333
    %v366 = vld [vmem:[%s2 + $0x8] sm:$0xf]
    %v367 = vld [vmem:[%s2 + $0xc] sm:$0xf]
    %v368 = vld [vmem:[%s2 + $0x10] sm:$0xf]
    %v369 = vld [vmem:[%s2 + $0x14] sm:$0xf]
    %v370 = vld [vmem:[%s2 + $0x18] sm:$0xf]
    %v371 = vld [vmem:[%s2 + $0x1c] sm:$0xf]
    %v372 = vld [vmem:[%s2 + $0x20] sm:$0xf]
    %v373 = vld [vmem:[%s2 + $0x24] sm:$0xf]
    %v374 = vld [vmem:[%s2 + $0x28] sm:$0xf]
    %v375 = vld [vmem:[%s2 + $0x2c] sm:$0xf]
    %v376 = vld [vmem:[%s2 + $0x30] sm:$0xf]
    %v377 = vld [vmem:[%s2 + $0x34] sm:$0xf]
    %v378 = vld [vmem:[%s3 + $0x1] sm:$0x1]
    %v379 = vld [vmem:[#allocation2] sm:$0xff]
    %v380 = vld [vmem:[#allocation2 + $0x8] sm:$0xff]
    %v381 = vld [vmem:[#allocation2 + $0x10] sm:$0xff]
    %v382 = vld [vmem:[#allocation2 + $0x18] sm:$0xff]
    %v383 = vld [vmem:[#allocation2 + $0x20] sm:$0xff]
    %v388 = vunpack.c.l.b16 %v366
    %v389 = vunpack.c.l.b16 %v367
    %v390 = vunpack.c.l.b16 %v368
    %v391 = vunpack.c.l.b16 %v369
    %v392 = vpack.c.b16 %v389, %v388
    %v393 = vpack.c.b16 %v391, %v390
    %vm396 = vcmask 261120
    %v398 = vsel %vm396, 0, 0
    %400 = vmatprep.subr.bf16.mxu0 0
    %401 = vmatpush1.bf16.msra.mxu0 %v392
    %402 = vmatprep.subr.bf16.mxu0 0
    %403 = vmatpush1.bf16.msra.mxu0 %v393
    %404 = vmatprep.subr.bf16.mxu0 0
    %405 = vmatpush1.bf16.msra.mxu0 0
    %406 = vmatprep.subr.bf16.mxu0 0
    %407 = vmatpush1.bf16.msra.mxu0 0
    %408 = vmatprep.subr.bf16.mxu0 0
    %409 = vmatpush1.bf16.msra.mxu0 0
    %410 = vmatprep.subr.bf16.mxu0 0
    %411 = vmatpush1.bf16.msra.mxu0 0
    %412 = vmatprep.subr.bf16.mxu0 0
    %413 = vmatpush1.bf16.msra.mxu0 0
    %414 = vmatprep.subr.bf16.mxu0 0
    %415 = vmatpush1.bf16.msra.mxu0 0
    %416 = vmatprep.subr.bf16.mxu0 0
    %417 = vmatpush1.bf16.msra.mxu0 0
    %418 = vmatprep.subr.bf16.mxu0 0
    %419 = vmatpush1.bf16.msra.mxu0 0
    %420 = vmatprep.subr.bf16.mxu0 0
    %421 = vmatpush1.bf16.msra.mxu0 0
    %422 = vmatprep.subr.bf16.mxu0 0
    %423 = vmatpush1.bf16.msra.mxu0 0
    %424 = vmatprep.subr.bf16.mxu0 0
    %425 = vmatpush1.bf16.msra.mxu0 0
    %426 = vmatprep.subr.bf16.mxu0 0
    %427 = vmatpush1.bf16.msra.mxu0 0
    %428 = vmatprep.subr.bf16.mxu0 0
    %429 = vmatpush1.bf16.msra.mxu0 0
    %430 = vmatprep.subr.bf16.mxu0 0
    %431 = vmatpush1.bf16.msra.mxu0 0
    %432 = vmatprep.mubr.bf16.mxu0 0
    %433 = vmatmul.mubr.bf16.gmra.mrb[0].mxu0 %v398
    %v434 = vpop.f32.mrb[0].mxu0
    %v435 = vadd.f32 0.0, %v434
    %v436 = vpop.f32.mrb[0].mxu0
    %v437 = vpop.f32.mrb[0].mxu0
    %v438 = vadd.f32 0.0, %v437
    %v439 = vpop.f32.mrb[0].mxu0
    %440 = vmatprep.mubr.bf16.mxu0 0
    %441 = vmatmul.mubr.bf16.gmra.mrb[0].mxu0 %v398
    %v442 = vpop.f32.mrb[0].mxu0
    %v443 = vadd.f32 0.0, %v442
    %v444 = vpop.f32.mrb[0].mxu0
    %v445 = vpop.f32.mrb[0].mxu0
    %v446 = vadd.f32 0.0, %v445
    %v447 = vpop.f32.mrb[0].mxu0
    %448 = vmatprep.mubr.bf16.mxu0 0
    %449 = vmatmul.mubr.bf16.gmra.mrb[0].mxu0 %v398
    %v450 = vpop.f32.mrb[0].mxu0
    %v451 = vadd.f32 0.0, %v450
    %v452 = vpop.f32.mrb[0].mxu0
    %v453 = vpop.f32.mrb[0].mxu0
    %v454 = vpop.f32.mrb[0].mxu0
    %455 = vdwg.mxu0
    %v456 = vadd.f32 %v379, %v435
    %v457 = vadd.f32 %v380, %v438
    %v458 = vadd.f32 %v381, %v443
    %v459 = vadd.f32 %v382, %v446
    %v460 = vadd.f32 %v383, %v451
    %v461 = vxor.u32 %v456, 2147483648
    %v462 = vxor.u32 %v457, 2147483648
    %v463 = vxor.u32 %v458, 2147483648
    %v464 = vxor.u32 %v459, 2147483648
    %v465 = vxor.u32 %v460, 2147483648
    %v466 = vmul.f32 %v461, 1.442695
    %v467 = vpow.pop %v466
    %v468 = vmul.f32 %v462, 1.442695
    %v469 = vpow.pop %v468
    %v470 = vmul.f32 %v463, 1.442695
    %v471 = vpow.pop %v470
    %v472 = vmul.f32 %v464, 1.442695
    %v473 = vpow.pop %v472
    %v474 = vmul.f32 %v465, 1.442695
    %v475 = vpow.pop %v474
    %v476 = vadd.f32 %v467, 1.0
    %v477 = vadd.f32 %v469, 1.0
    %v478 = vadd.f32 %v471, 1.0
    %v479 = vadd.f32 %v473, 1.0
    %v480 = vadd.f32 %v475, 1.0
    %v481 = vrcp.pop %v476
    %v482 = vmul.f32 1.0, %v481
    %v483 = vrcp.pop %v477
    %v484 = vmul.f32 1.0, %v483
    %v485 = vrcp.pop %v478
    %v486 = vmul.f32 1.0, %v485
    %v487 = vrcp.pop %v479
    %v488 = vmul.f32 1.0, %v487
    %v489 = vrcp.pop %v480
    %v490 = vmul.f32 1.0, %v489
    %v491 = vmul.f32 %v482, 2.0
    %v492 = vmul.f32 %v484, 2.0
    %v493 = vmul.f32 %v486, 2.0
    %v494 = vmul.f32 %v488, 2.0
    %v495 = vmul.f32 %v490, 2.0
    %v496 = vsub.f32 %v491, 1.0
    %v497 = vsub.f32 %v492, 1.0
    %v498 = vsub.f32 %v493, 1.0
    %v499 = vsub.f32 %v494, 1.0
    %v500 = vsub.f32 %v495, 1.0
    %v501 = vmul.f32 %v482, 0.0
    %v502 = vmul.f32 %v484, 0.0
    %v503 = vmul.f32 %v486, 0.0
    %v504 = vmul.f32 %v488, 0.0
    %v505 = vmul.f32 %v490, 0.0
    %511 = vrot.lane.b32.xlu0 %v496, 64
    %v512 = vpop.permute.xlu0 %511
    %513 = vrot.lane.b32.xlu0 %v497, 64
    %v514 = vpop.permute.xlu0 %513
    %515 = vrot.lane.b32.xlu0 %v498, 64
    %v516 = vpop.permute.xlu0 %515
    %517 = vrot.lane.b32.xlu0 %v499, 64
    %v518 = vpop.permute.xlu0 %517
    %519 = vrot.lane.b32.xlu0 %v500, 64
    %v520 = vpop.permute.xlu0 %519
    %v526 = vmul.f32 %v482, %v512
    %v527 = vmul.f32 %v484, %v514
    %v528 = vmul.f32 %v486, %v516
    %v529 = vmul.f32 %v488, %v518
    %v530 = vmul.f32 %v490, %v520
    %536 = vrot.lane.b32.xlu0 %v526, 32
    %v537 = vpop.permute.xlu0 %536
    %538 = vrot.lane.b32.xlu0 %v527, 32
    %v539 = vpop.permute.xlu0 %538
    %540 = vrot.lane.b32.xlu0 %v528, 32
    %v541 = vpop.permute.xlu0 %540
    %542 = vrot.lane.b32.xlu0 %v529, 32
    %v543 = vpop.permute.xlu0 %542
    %544 = vrot.lane.b32.xlu0 %v530, 32
    %v545 = vpop.permute.xlu0 %544
    %v551 = vadd.f32 %v501, %v537
    %v552 = vadd.f32 %v502, %v539
    %v553 = vadd.f32 %v503, %v541
    %v554 = vadd.f32 %v504, %v543
    %v555 = vadd.f32 %v505, %v545
    %v556 = vtanh.pop %v551
    %v557 = vtanh.pop %v552
    %v558 = vtanh.pop %v553
    %v559 = vtanh.pop %v554
    %v560 = vtanh.pop %v555
    %566 = vrot.lane.b32.xlu0 %v556, 64
    %v567 = vpop.permute.xlu0 %566
    %568 = vrot.lane.b32.xlu0 %v557, 64
    %v569 = vpop.permute.xlu0 %568
    %570 = vrot.lane.b32.xlu0 %v558, 64
    %v571 = vpop.permute.xlu0 %570
    %572 = vrot.lane.b32.xlu0 %v559, 64
    %v573 = vpop.permute.xlu0 %572
    %574 = vrot.lane.b32.xlu0 %v560, 64
    %v575 = vpop.permute.xlu0 %574
    %v581 = vmul.f32 %v482, %v567
    %v582 = vmul.f32 %v484, %v569
    %v583 = vmul.f32 %v486, %v571
    %v584 = vmul.f32 %v488, %v573
    %v585 = vmul.f32 %v490, %v575
    %v586 = vpack.c.bf16 %v582, %v581
    %v587 = vpack.c.bf16 %v584, %v583
    %v588 = vpack.c.bf16 %v585, %v585
    %v593 = vunpack.c.l.b16 %v374
    %v594 = vunpack.c.l.b16 %v375
    %v595 = vunpack.c.l.b16 %v376
    %v596 = vunpack.c.l.b16 %v377
    %v597 = vpack.c.b16 %v594, %v593
    %v598 = vpack.c.b16 %v596, %v595
    %601 = vmatprep.subr.bf16.mxu0 0
    %602 = vmatpush1.bf16.msra.mxu0 %v597
    %603 = vmatprep.subr.bf16.mxu0 0
    %604 = vmatpush1.bf16.msra.mxu0 %v598
    %605 = vmatprep.subr.bf16.mxu0 0
    %606 = vmatpush1.bf16.msra.mxu0 0
    %607 = vmatprep.subr.bf16.mxu0 0
    %608 = vmatpush1.bf16.msra.mxu0 0
    %609 = vmatprep.subr.bf16.mxu0 0
    %610 = vmatpush1.bf16.msra.mxu0 0
    %611 = vmatprep.subr.bf16.mxu0 0
    %612 = vmatpush1.bf16.msra.mxu0 0
    %613 = vmatprep.subr.bf16.mxu0 0
    %614 = vmatpush1.bf16.msra.mxu0 0
    %615 = vmatprep.subr.bf16.mxu0 0
    %616 = vmatpush1.bf16.msra.mxu0 0
    %617 = vmatprep.subr.bf16.mxu0 0
    %618 = vmatpush1.bf16.msra.mxu0 0
    %619 = vmatprep.subr.bf16.mxu0 0
    %620 = vmatpush1.bf16.msra.mxu0 0
    %621 = vmatprep.subr.bf16.mxu0 0
    %622 = vmatpush1.bf16.msra.mxu0 0
    %623 = vmatprep.subr.bf16.mxu0 0
    %624 = vmatpush1.bf16.msra.mxu0 0
    %625 = vmatprep.subr.bf16.mxu0 0
    %626 = vmatpush1.bf16.msra.mxu0 0
    %627 = vmatprep.subr.bf16.mxu0 0
    %628 = vmatpush1.bf16.msra.mxu0 0
    %629 = vmatprep.subr.bf16.mxu0 0
    %630 = vmatpush1.bf16.msra.mxu0 0
    %631 = vmatprep.subr.bf16.mxu0 0
    %632 = vmatpush1.bf16.msra.mxu0 0
    %633 = vmatprep.mubr.bf16.mxu0 0
    %634 = vmatmul.mubr.bf16.gmra.mrb[0].mxu0 %v398
    %v635 = vpop.f32.mrb[0].mxu0
    %v636 = vadd.f32 0.0, %v635
    %v637 = vpop.f32.mrb[0].mxu0
    %v638 = vpop.f32.mrb[0].mxu0
    %v639 = vadd.f32 0.0, %v638
    %v640 = vpop.f32.mrb[0].mxu0
    %641 = vmatprep.mubr.bf16.mxu0 0
    %642 = vmatmul.mubr.bf16.gmra.mrb[0].mxu0 %v398
    %v643 = vpop.f32.mrb[0].mxu0
    %v644 = vadd.f32 0.0, %v643
    %v645 = vpop.f32.mrb[0].mxu0
    %v646 = vpop.f32.mrb[0].mxu0
    %v647 = vadd.f32 0.0, %v646
    %v648 = vpop.f32.mrb[0].mxu0
    %649 = vmatprep.mubr.bf16.mxu0 0
    %650 = vmatmul.mubr.bf16.gmra.mrb[0].mxu0 %v398
    %v651 = vpop.f32.mrb[0].mxu0
    %v652 = vadd.f32 0.0, %v651
    %v653 = vpop.f32.mrb[0].mxu0
    %v654 = vpop.f32.mrb[0].mxu0
    %v655 = vpop.f32.mrb[0].mxu0
    %656 = vdwg.mxu0
    %660 = vrot.lane.b32.xlu0 %v586, 32
    %v661 = vpop.permute.xlu0 %660
    %662 = vrot.lane.b32.xlu0 %v587, 32
    %v663 = vpop.permute.xlu0 %662
    %664 = vrot.lane.b32.xlu0 %v588, 32
    %v665 = vpop.permute.xlu0 %664
    %v670 = vunpack.c.l.b16 %v370
    %v671 = vunpack.c.l.b16 %v371
    %v672 = vunpack.c.l.b16 %v372
    %v673 = vunpack.c.l.b16 %v373
    %v674 = vpack.c.b16 %v671, %v670
    %v675 = vpack.c.b16 %v673, %v672
    %v679 = vsel %vm396, %v661, 0
    %v682 = vsel %vm396, %v663, 0
    %v685 = vsel %vm396, %v665, 0
    %687 = vmatprep.subr.bf16.mxu0 0
    %688 = vmatpush1.bf16.msra.mxu0 %v674
    %689 = vmatprep.subr.bf16.mxu0 0
    %690 = vmatpush1.bf16.msra.mxu0 %v675
    %691 = vmatprep.subr.bf16.mxu0 0
    %692 = vmatpush1.bf16.msra.mxu0 0
    %693 = vmatprep.subr.bf16.mxu0 0
    %694 = vmatpush1.bf16.msra.mxu0 0
    %695 = vmatprep.subr.bf16.mxu0 0
    %696 = vmatpush1.bf16.msra.mxu0 0
    %697 = vmatprep.subr.bf16.mxu0 0
    %698 = vmatpush1.bf16.msra.mxu0 0
    %699 = vmatprep.subr.bf16.mxu0 0
    %700 = vmatpush1.bf16.msra.mxu0 0
    %701 = vmatprep.subr.bf16.mxu0 0
    %702 = vmatpush1.bf16.msra.mxu0 0
    %703 = vmatprep.subr.bf16.mxu0 0
    %704 = vmatpush1.bf16.msra.mxu0 0
    %705 = vmatprep.subr.bf16.mxu0 0
    %706 = vmatpush1.bf16.msra.mxu0 0
    %707 = vmatprep.subr.bf16.mxu0 0
    %708 = vmatpush1.bf16.msra.mxu0 0
    %709 = vmatprep.subr.bf16.mxu0 0
    %710 = vmatpush1.bf16.msra.mxu0 0
    %711 = vmatprep.subr.bf16.mxu0 0
    %712 = vmatpush1.bf16.msra.mxu0 0
    %713 = vmatprep.subr.bf16.mxu0 0
    %714 = vmatpush1.bf16.msra.mxu0 0
    %715 = vmatprep.subr.bf16.mxu0 0
    %716 = vmatpush1.bf16.msra.mxu0 0
    %717 = vmatprep.subr.bf16.mxu0 0
    %718 = vmatpush1.bf16.msra.mxu0 0
    %719 = vmatprep.mubr.bf16.mxu0 0
    %720 = vmatmul.mubr.bf16.gmra.mrb[0].mxu0 %v679
    %v721 = vpop.f32.mrb[0].mxu0
    %v722 = vadd.f32 %v636, %v721
    %v723 = vpop.f32.mrb[0].mxu0
    %v724 = vpop.f32.mrb[0].mxu0
    %v725 = vadd.f32 %v639, %v724
    %v726 = vpop.f32.mrb[0].mxu0
    %727 = vmatprep.mubr.bf16.mxu0 0
    %728 = vmatmul.mubr.bf16.gmra.mrb[0].mxu0 %v682
    %v729 = vpop.f32.mrb[0].mxu0
    %v730 = vadd.f32 %v644, %v729
    %v731 = vpop.f32.mrb[0].mxu0
    %v732 = vpop.f32.mrb[0].mxu0
    %v733 = vadd.f32 %v647, %v732
    %v734 = vpop.f32.mrb[0].mxu0
    %735 = vmatprep.mubr.bf16.mxu0 0
    %736 = vmatmul.mubr.bf16.gmra.mrb[0].mxu0 %v685
    %v737 = vpop.f32.mrb[0].mxu0
    %v738 = vadd.f32 %v652, %v737
    %v739 = vpop.f32.mrb[0].mxu0
    %v740 = vpop.f32.mrb[0].mxu0
    %v741 = vpop.f32.mrb[0].mxu0
    %742 = vdwg.mxu0
    %v743 = vlaneseq
    %v744 = vshrl.u32 %v743, 7
    %v745 = vsub.s32 0, %v744
    %v746 = vrot.slane %v378, %v745
    %v747 = vadd.f32 %v722, %v746
    %v748 = vadd.f32 %v725, %v746
    %v749 = vadd.f32 %v730, %v746
    %v750 = vadd.f32 %v733, %v746
    %v751 = vadd.f32 %v738, %v746
    %v752 = vxor.u32 %v747, 2147483648
    %v753 = vxor.u32 %v748, 2147483648
    %v754 = vxor.u32 %v749, 2147483648
    %v755 = vxor.u32 %v750, 2147483648
    %v756 = vxor.u32 %v751, 2147483648
    %v757 = vmul.f32 %v752, 1.442695
    %v758 = vpow.pop %v757
    %v759 = vmul.f32 %v753, 1.442695
    %v760 = vpow.pop %v759
    %v761 = vmul.f32 %v754, 1.442695
    %v762 = vpow.pop %v761
    %v763 = vmul.f32 %v755, 1.442695
    %v764 = vpow.pop %v763
    %v765 = vmul.f32 %v756, 1.442695
    %v766 = vpow.pop %v765
    %v767 = vadd.f32 %v758, 1.0
    %v768 = vadd.f32 %v760, 1.0
    %v769 = vadd.f32 %v762, 1.0
    %v770 = vadd.f32 %v764, 1.0
    %v771 = vadd.f32 %v766, 1.0
    %v772 = vrcp.pop %v767
    %v773 = vmul.f32 1.0, %v772
    %v774 = vrcp.pop %v768
    %v775 = vmul.f32 1.0, %v774
    %v776 = vrcp.pop %v769
    %v777 = vmul.f32 1.0, %v776
    %v778 = vrcp.pop %v770
    %v779 = vmul.f32 1.0, %v778
    %v780 = vrcp.pop %v771
    %v781 = vmul.f32 1.0, %v780
    %v782 = vmul.f32 %v773, 2.0
    %v783 = vmul.f32 %v775, 2.0
    %v784 = vmul.f32 %v777, 2.0
    %v785 = vmul.f32 %v779, 2.0
    %v786 = vmul.f32 %v781, 2.0
    %v787 = vsub.f32 %v782, 1.0
    %v788 = vsub.f32 %v783, 1.0
    %v789 = vsub.f32 %v784, 1.0
    %v790 = vsub.f32 %v785, 1.0
    %v791 = vsub.f32 %v786, 1.0
    %v792 = vmul.f32 %v773, 0.0
    %v793 = vmul.f32 %v775, 0.0
    %v794 = vmul.f32 %v777, 0.0
    %v795 = vmul.f32 %v779, 0.0
    %v796 = vmul.f32 %v781, 0.0
    %802 = vrot.lane.b32.xlu0 %v787, 64
    %v803 = vpop.permute.xlu0 %802
    %804 = vrot.lane.b32.xlu0 %v788, 64
    %v805 = vpop.permute.xlu0 %804
    %806 = vrot.lane.b32.xlu0 %v789, 64
    %v807 = vpop.permute.xlu0 %806
    %808 = vrot.lane.b32.xlu0 %v790, 64
    %v809 = vpop.permute.xlu0 %808
    %810 = vrot.lane.b32.xlu0 %v791, 64
    %v811 = vpop.permute.xlu0 %810
    %v817 = vmul.f32 %v773, %v803
    %v818 = vmul.f32 %v775, %v805
    %v819 = vmul.f32 %v777, %v807
    %v820 = vmul.f32 %v779, %v809
    %v821 = vmul.f32 %v781, %v811
    %827 = vrot.lane.b32.xlu0 %v817, 32
    %v828 = vpop.permute.xlu0 %827
    %829 = vrot.lane.b32.xlu0 %v818, 32
    %v830 = vpop.permute.xlu0 %829
    %831 = vrot.lane.b32.xlu0 %v819, 32
    %v832 = vpop.permute.xlu0 %831
    %833 = vrot.lane.b32.xlu0 %v820, 32
    %v834 = vpop.permute.xlu0 %833
    %835 = vrot.lane.b32.xlu0 %v821, 32
    %v836 = vpop.permute.xlu0 %835
    %v842 = vadd.f32 %v792, %v828
    %v843 = vadd.f32 %v793, %v830
    %v844 = vadd.f32 %v794, %v832
    %v845 = vadd.f32 %v795, %v834
    %v846 = vadd.f32 %v796, %v836
    %v847 = vtanh.pop %v842
    %v848 = vtanh.pop %v843
    %v849 = vtanh.pop %v844
    %v850 = vtanh.pop %v845
    %v851 = vtanh.pop %v846
    %857 = vrot.lane.b32.xlu0 %v847, 64
    %v858 = vpop.permute.xlu0 %857
    %859 = vrot.lane.b32.xlu0 %v848, 64
    %v860 = vpop.permute.xlu0 %859
    %861 = vrot.lane.b32.xlu0 %v849, 64
    %v862 = vpop.permute.xlu0 %861
    %863 = vrot.lane.b32.xlu0 %v850, 64
    %v864 = vpop.permute.xlu0 %863
    %865 = vrot.lane.b32.xlu0 %v851, 64
    %v866 = vpop.permute.xlu0 %865
    %v872 = vmul.f32 %v773, %v858
    %v873 = vmul.f32 %v775, %v860
    %v874 = vmul.f32 %v777, %v862
    %v875 = vmul.f32 %v779, %v864
    %v876 = vmul.f32 %v781, %v866
    %v877 = vld [vmem:[#allocation2 + $0x28] sm:$0xff]
    %v878 = vld [vmem:[#allocation2 + $0x30] sm:$0xff]
    %v879 = vld [vmem:[#allocation2 + $0x38] sm:$0xff]
    %v880 = vld [vmem:[#allocation2 + $0x40] sm:$0xff]
    %v881 = vld [vmem:[#allocation2 + $0x48] sm:$0xff]
    %882 = vmatprep.subr.bf16.mxu0 0
    %883 = vmatpush1.bf16.msra.mxu0 %v392
    %884 = vmatprep.subr.bf16.mxu0 0
    %885 = vmatpush1.bf16.msra.mxu0 %v393
    %886 = vmatprep.subr.bf16.mxu0 0
    %887 = vmatpush1.bf16.msra.mxu0 0
    %888 = vmatprep.subr.bf16.mxu0 0
    %889 = vmatpush1.bf16.msra.mxu0 0
    %890 = vmatprep.subr.bf16.mxu0 0
    %891 = vmatpush1.bf16.msra.mxu0 0
    %892 = vmatprep.subr.bf16.mxu0 0
    %893 = vmatpush1.bf16.msra.mxu0 0
    %894 = vmatprep.subr.bf16.mxu0 0
    %895 = vmatpush1.bf16.msra.mxu0 0
    %896 = vmatprep.subr.bf16.mxu0 0
    %897 = vmatpush1.bf16.msra.mxu0 0
    %898 = vmatprep.subr.bf16.mxu0 0
    %899 = vmatpush1.bf16.msra.mxu0 0
    %900 = vmatprep.subr.bf16.mxu0 0
    %901 = vmatpush1.bf16.msra.mxu0 0
    %902 = vmatprep.subr.bf16.mxu0 0
    %903 = vmatpush1.bf16.msra.mxu0 0
    %904 = vmatprep.subr.bf16.mxu0 0
    %905 = vmatpush1.bf16.msra.mxu0 0
    %906 = vmatprep.subr.bf16.mxu0 0
    %907 = vmatpush1.bf16.msra.mxu0 0
    %908 = vmatprep.subr.bf16.mxu0 0
    %909 = vmatpush1.bf16.msra.mxu0 0
    %910 = vmatprep.subr.bf16.mxu0 0
    %911 = vmatpush1.bf16.msra.mxu0 0
    %912 = vmatprep.subr.bf16.mxu0 0
    %913 = vmatpush1.bf16.msra.mxu0 0
    %914 = vmatprep.mubr.bf16.mxu0 0
    %915 = vmatmul.mubr.bf16.gmra.mrb[0].mxu0 %v679
    %v916 = vpop.f32.mrb[0].mxu0
    %v917 = vadd.f32 0.0, %v916
    %v918 = vpop.f32.mrb[0].mxu0
    %v919 = vpop.f32.mrb[0].mxu0
    %v920 = vadd.f32 0.0, %v919
    %v921 = vpop.f32.mrb[0].mxu0
    %922 = vmatprep.mubr.bf16.mxu0 0
    %923 = vmatmul.mubr.bf16.gmra.mrb[0].mxu0 %v682
    %v924 = vpop.f32.mrb[0].mxu0
    %v925 = vadd.f32 0.0, %v924
    %v926 = vpop.f32.mrb[0].mxu0
    %v927 = vpop.f32.mrb[0].mxu0
    %v928 = vadd.f32 0.0, %v927
    %v929 = vpop.f32.mrb[0].mxu0
    %930 = vmatprep.mubr.bf16.mxu0 0
    %931 = vmatmul.mubr.bf16.gmra.mrb[0].mxu0 %v685
    %v932 = vpop.f32.mrb[0].mxu0
    %v933 = vadd.f32 0.0, %v932
    %v934 = vpop.f32.mrb[0].mxu0
    %v935 = vpop.f32.mrb[0].mxu0
    %v936 = vpop.f32.mrb[0].mxu0
    %937 = vdwg.mxu0
    %v938 = vadd.f32 %v877, %v917
    %v939 = vadd.f32 %v878, %v920
    %v940 = vadd.f32 %v879, %v925
    %v941 = vadd.f32 %v880, %v928
    %v942 = vadd.f32 %v881, %v933
    %v943 = vxor.u32 %v938, 2147483648
    %v944 = vxor.u32 %v939, 2147483648
    %v945 = vxor.u32 %v940, 2147483648
    %v946 = vxor.u32 %v941, 2147483648
    %v947 = vxor.u32 %v942, 2147483648
    %v948 = vmul.f32 %v943, 1.442695
    %v949 = vpow.pop %v948
    %v950 = vmul.f32 %v944, 1.442695
    %v951 = vpow.pop %v950
    %v952 = vmul.f32 %v945, 1.442695
    %v953 = vpow.pop %v952
    %v954 = vmul.f32 %v946, 1.442695
    %v955 = vpow.pop %v954
    %v956 = vmul.f32 %v947, 1.442695
    %v957 = vpow.pop %v956
    %v958 = vadd.f32 %v949, 1.0
    %v959 = vadd.f32 %v951, 1.0
    %v960 = vadd.f32 %v953, 1.0
    %v961 = vadd.f32 %v955, 1.0
    %v962 = vadd.f32 %v957, 1.0
    %v963 = vrcp.pop %v958
    %v964 = vmul.f32 1.0, %v963
    %v965 = vrcp.pop %v959
    %v966 = vmul.f32 1.0, %v965
    %v967 = vrcp.pop %v960
    %v968 = vmul.f32 1.0, %v967
    %v969 = vrcp.pop %v961
    %v970 = vmul.f32 1.0, %v969
    %v971 = vrcp.pop %v962
    %v972 = vmul.f32 1.0, %v971
    %v973 = vmul.f32 %v964, 2.0
    %v974 = vmul.f32 %v966, 2.0
    %v975 = vmul.f32 %v968, 2.0
    %v976 = vmul.f32 %v970, 2.0
    %v977 = vmul.f32 %v972, 2.0
    %v978 = vsub.f32 %v973, 1.0
    %v979 = vsub.f32 %v974, 1.0
    %v980 = vsub.f32 %v975, 1.0
    %v981 = vsub.f32 %v976, 1.0
    %v982 = vsub.f32 %v977, 1.0
    %v983 = vmul.f32 %v964, %v551
    %v984 = vmul.f32 %v966, %v552
    %v985 = vmul.f32 %v968, %v553
    %v986 = vmul.f32 %v970, %v554
    %v987 = vmul.f32 %v972, %v555
    %993 = vrot.lane.b32.xlu0 %v978, 64
    %v994 = vpop.permute.xlu0 %993
    %995 = vrot.lane.b32.xlu0 %v979, 64
    %v996 = vpop.permute.xlu0 %995
    %997 = vrot.lane.b32.xlu0 %v980, 64
    %v998 = vpop.permute.xlu0 %997
    %999 = vrot.lane.b32.xlu0 %v981, 64
    %v1000 = vpop.permute.xlu0 %999
    %1001 = vrot.lane.b32.xlu0 %v982, 64
    %v1002 = vpop.permute.xlu0 %1001
    %v1008 = vmul.f32 %v964, %v994
    %v1009 = vmul.f32 %v966, %v996
    %v1010 = vmul.f32 %v968, %v998
    %v1011 = vmul.f32 %v970, %v1000
    %v1012 = vmul.f32 %v972, %v1002
    %1018 = vrot.lane.b32.xlu0 %v1008, 32
    %v1019 = vpop.permute.xlu0 %1018
    %1020 = vrot.lane.b32.xlu0 %v1009, 32
    %v1021 = vpop.permute.xlu0 %1020
    %1022 = vrot.lane.b32.xlu0 %v1010, 32
    %v1023 = vpop.permute.xlu0 %1022
    %1024 = vrot.lane.b32.xlu0 %v1011, 32
    %v1025 = vpop.permute.xlu0 %1024
    %1026 = vrot.lane.b32.xlu0 %v1012, 32
    %v1027 = vpop.permute.xlu0 %1026
    %v1033 = vadd.f32 %v983, %v1019
    %v1034 = vadd.f32 %v984, %v1021
    %v1035 = vadd.f32 %v985, %v1023
    %v1036 = vadd.f32 %v986, %v1025
    %v1037 = vadd.f32 %v987, %v1027
    %v1038 = vtanh.pop %v1033
    %v1039 = vtanh.pop %v1034
    %v1040 = vtanh.pop %v1035
    %v1041 = vtanh.pop %v1036
    %v1042 = vtanh.pop %v1037
    %1048 = vrot.lane.b32.xlu0 %v1038, 64
    %v1049 = vpop.permute.xlu0 %1048
    %1050 = vrot.lane.b32.xlu0 %v1039, 64
    %v1051 = vpop.permute.xlu0 %1050
    %1052 = vrot.lane.b32.xlu0 %v1040, 64
    %v1053 = vpop.permute.xlu0 %1052
    %1054 = vrot.lane.b32.xlu0 %v1041, 64
    %v1055 = vpop.permute.xlu0 %1054
    %1056 = vrot.lane.b32.xlu0 %v1042, 64
    %v1057 = vpop.permute.xlu0 %1056
    %v1063 = vmul.f32 %v964, %v1049
    %v1064 = vmul.f32 %v966, %v1051
    %v1065 = vmul.f32 %v968, %v1053
    %v1066 = vmul.f32 %v970, %v1055
    %v1067 = vmul.f32 %v972, %v1057
    %v1068 = vpack.c.bf16 %v1064, %v1063
    %v1069 = vpack.c.bf16 %v1066, %v1065
    %v1070 = vpack.c.bf16 %v1067, %v1067
    %v1071 = vpack.c.bf16 %v873, %v872
    %v1072 = vpack.c.bf16 %v875, %v874
    %v1073 = vpack.c.bf16 %v876, %v876
    %1077 = vrot.lane.b32.xlu0 %v1071, 32
    %v1078 = vpop.permute.xlu0 %1077
    %1079 = vrot.lane.b32.xlu0 %v1072, 32
    %v1080 = vpop.permute.xlu0 %1079
    %1081 = vrot.lane.b32.xlu0 %v1073, 32
    %v1082 = vpop.permute.xlu0 %1081
    %v1084 = vsel %vm396, %v1078, 0
    %v1087 = vsel %vm396, %v1080, 0
    %v1090 = vsel %vm396, %v1082, 0
    %1092 = vmatprep.subr.bf16.mxu0 0
    %1093 = vmatpush1.bf16.msra.mxu0 %v597
    %1094 = vmatprep.subr.bf16.mxu0 0
    %1095 = vmatpush1.bf16.msra.mxu0 %v598
    %1096 = vmatprep.subr.bf16.mxu0 0
    %1097 = vmatpush1.bf16.msra.mxu0 0
    %1098 = vmatprep.subr.bf16.mxu0 0
    %1099 = vmatpush1.bf16.msra.mxu0 0
    %1100 = vmatprep.subr.bf16.mxu0 0
    %1101 = vmatpush1.bf16.msra.mxu0 0
    %1102 = vmatprep.subr.bf16.mxu0 0
    %1103 = vmatpush1.bf16.msra.mxu0 0
    %1104 = vmatprep.subr.bf16.mxu0 0
    %1105 = vmatpush1.bf16.msra.mxu0 0
    %1106 = vmatprep.subr.bf16.mxu0 0
    %1107 = vmatpush1.bf16.msra.mxu0 0
    %1108 = vmatprep.subr.bf16.mxu0 0
    %1109 = vmatpush1.bf16.msra.mxu0 0
    %1110 = vmatprep.subr.bf16.mxu0 0
    %1111 = vmatpush1.bf16.msra.mxu0 0
    %1112 = vmatprep.subr.bf16.mxu0 0
    %1113 = vmatpush1.bf16.msra.mxu0 0
    %1114 = vmatprep.subr.bf16.mxu0 0
    %1115 = vmatpush1.bf16.msra.mxu0 0
    %1116 = vmatprep.subr.bf16.mxu0 0
    %1117 = vmatpush1.bf16.msra.mxu0 0
    %1118 = vmatprep.subr.bf16.mxu0 0
    %1119 = vmatpush1.bf16.msra.mxu0 0
    %1120 = vmatprep.subr.bf16.mxu0 0
    %1121 = vmatpush1.bf16.msra.mxu0 0
    %1122 = vmatprep.subr.bf16.mxu0 0
    %1123 = vmatpush1.bf16.msra.mxu0 0
    %1124 = vmatprep.mubr.bf16.mxu0 0
    %1125 = vmatmul.mubr.bf16.gmra.mrb[0].mxu0 %v1084
    %v1126 = vpop.f32.mrb[0].mxu0
    %v1127 = vadd.f32 0.0, %v1126
    %v1128 = vpop.f32.mrb[0].mxu0
    %v1129 = vpop.f32.mrb[0].mxu0
    %v1130 = vadd.f32 0.0, %v1129
    %v1131 = vpop.f32.mrb[0].mxu0
    %1132 = vmatprep.mubr.bf16.mxu0 0
    %1133 = vmatmul.mubr.bf16.gmra.mrb[0].mxu0 %v1087
    %v1134 = vpop.f32.mrb[0].mxu0
    %v1135 = vadd.f32 0.0, %v1134
    %v1136 = vpop.f32.mrb[0].mxu0
    %v1137 = vpop.f32.mrb[0].mxu0
    %v1138 = vadd.f32 0.0, %v1137
    %v1139 = vpop.f32.mrb[0].mxu0
    %1140 = vmatprep.mubr.bf16.mxu0 0
    %1141 = vmatmul.mubr.bf16.gmra.mrb[0].mxu0 %v1090
    %v1142 = vpop.f32.mrb[0].mxu0
    %v1143 = vadd.f32 0.0, %v1142
    %v1144 = vpop.f32.mrb[0].mxu0
    %v1145 = vpop.f32.mrb[0].mxu0
    %v1146 = vpop.f32.mrb[0].mxu0
    %1147 = vdwg.mxu0
    %1151 = vrot.lane.b32.xlu0 %v1068, 32
    %v1152 = vpop.permute.xlu0 %1151
    %1153 = vrot.lane.b32.xlu0 %v1069, 32
    %v1154 = vpop.permute.xlu0 %1153
    %1155 = vrot.lane.b32.xlu0 %v1070, 32
    %v1156 = vpop.permute.xlu0 %1155
    %v1158 = vsel %vm396, %v1152, 0
    %v1161 = vsel %vm396, %v1154, 0
    %v1164 = vsel %vm396, %v1156, 0
    %1166 = vmatprep.subr.bf16.mxu0 0
    %1167 = vmatpush1.bf16.msra.mxu0 %v674
    %1168 = vmatprep.subr.bf16.mxu0 0
    %1169 = vmatpush1.bf16.msra.mxu0 %v675
    %1170 = vmatprep.subr.bf16.mxu0 0
    %1171 = vmatpush1.bf16.msra.mxu0 0
    %1172 = vmatprep.subr.bf16.mxu0 0
    %1173 = vmatpush1.bf16.msra.mxu0 0
    %1174 = vmatprep.subr.bf16.mxu0 0
    %1175 = vmatpush1.bf16.msra.mxu0 0
    %1176 = vmatprep.subr.bf16.mxu0 0
    %1177 = vmatpush1.bf16.msra.mxu0 0
    %1178 = vmatprep.subr.bf16.mxu0 0
    %1179 = vmatpush1.bf16.msra.mxu0 0
    %1180 = vmatprep.subr.bf16.mxu0 0
    %1181 = vmatpush1.bf16.msra.mxu0 0
    %1182 = vmatprep.subr.bf16.mxu0 0
    %1183 = vmatpush1.bf16.msra.mxu0 0
    %1184 = vmatprep.subr.bf16.mxu0 0
    %1185 = vmatpush1.bf16.msra.mxu0 0
    %1186 = vmatprep.subr.bf16.mxu0 0
    %1187 = vmatpush1.bf16.msra.mxu0 0
    %1188 = vmatprep.subr.bf16.mxu0 0
    %1189 = vmatpush1.bf16.msra.mxu0 0
    %1190 = vmatprep.subr.bf16.mxu0 0
    %1191 = vmatpush1.bf16.msra.mxu0 0
    %1192 = vmatprep.subr.bf16.mxu0 0
    %1193 = vmatpush1.bf16.msra.mxu0 0
    %1194 = vmatprep.subr.bf16.mxu0 0
    %1195 = vmatpush1.bf16.msra.mxu0 0
    %1196 = vmatprep.subr.bf16.mxu0 0
    %1197 = vmatpush1.bf16.msra.mxu0 0
    %1198 = vmatprep.mubr.bf16.mxu0 0
    %1199 = vmatmul.mubr.bf16.gmra.mrb[0].mxu0 %v1158
    %v1200 = vpop.f32.mrb[0].mxu0
    %v1201 = vadd.f32 %v1127, %v1200
    %v1202 = vpop.f32.mrb[0].mxu0
    %v1203 = vpop.f32.mrb[0].mxu0
    %v1204 = vadd.f32 %v1130, %v1203
    %v1205 = vpop.f32.mrb[0].mxu0
    %1206 = vmatprep.mubr.bf16.mxu0 0
    %1207 = vmatmul.mubr.bf16.gmra.mrb[0].mxu0 %v1161
    %v1208 = vpop.f32.mrb[0].mxu0
    %v1209 = vadd.f32 %v1135, %v1208
    %v1210 = vpop.f32.mrb[0].mxu0
    %v1211 = vpop.f32.mrb[0].mxu0
    %v1212 = vadd.f32 %v1138, %v1211
    %v1213 = vpop.f32.mrb[0].mxu0
    %1214 = vmatprep.mubr.bf16.mxu0 0
    %1215 = vmatmul.mubr.bf16.gmra.mrb[0].mxu0 %v1164
    %v1216 = vpop.f32.mrb[0].mxu0
    %v1217 = vadd.f32 %v1143, %v1216
    %v1218 = vpop.f32.mrb[0].mxu0
    %v1219 = vpop.f32.mrb[0].mxu0
    %v1220 = vpop.f32.mrb[0].mxu0
    %1221 = vdwg.mxu0
    %v1222 = vadd.f32 %v1201, %v746
    %v1223 = vadd.f32 %v1204, %v746
    %v1224 = vadd.f32 %v1209, %v746
    %v1225 = vadd.f32 %v1212, %v746
    %v1226 = vadd.f32 %v1217, %v746
    %v1227 = vxor.u32 %v1222, 2147483648
    %v1228 = vxor.u32 %v1223, 2147483648
    %v1229 = vxor.u32 %v1224, 2147483648
    %v1230 = vxor.u32 %v1225, 2147483648
    %v1231 = vxor.u32 %v1226, 2147483648
    %v1232 = vmul.f32 %v1227, 1.442695
    %v1233 = vpow.pop %v1232
    %v1234 = vmul.f32 %v1228, 1.442695
    %v1235 = vpow.pop %v1234
    %v1236 = vmul.f32 %v1229, 1.442695
    %v1237 = vpow.pop %v1236
    %v1238 = vmul.f32 %v1230, 1.442695
    %v1239 = vpow.pop %v1238
    %v1240 = vmul.f32 %v1231, 1.442695
    %v1241 = vpow.pop %v1240
    %v1242 = vadd.f32 %v1233, 1.0
    %v1243 = vadd.f32 %v1235, 1.0
    %v1244 = vadd.f32 %v1237, 1.0
    %v1245 = vadd.f32 %v1239, 1.0
    %v1246 = vadd.f32 %v1241, 1.0
    %v1247 = vrcp.pop %v1242
    %v1248 = vmul.f32 1.0, %v1247
    %v1249 = vrcp.pop %v1243
    %v1250 = vmul.f32 1.0, %v1249
    %v1251 = vrcp.pop %v1244
    %v1252 = vmul.f32 1.0, %v1251
    %v1253 = vrcp.pop %v1245
    %v1254 = vmul.f32 1.0, %v1253
    %v1255 = vrcp.pop %v1246
    %v1256 = vmul.f32 1.0, %v1255
    %v1257 = vmul.f32 %v1248, 2.0
    %v1258 = vmul.f32 %v1250, 2.0
    %v1259 = vmul.f32 %v1252, 2.0
    %v1260 = vmul.f32 %v1254, 2.0
    %v1261 = vmul.f32 %v1256, 2.0
    %v1262 = vsub.f32 %v1257, 1.0
    %v1263 = vsub.f32 %v1258, 1.0
    %v1264 = vsub.f32 %v1259, 1.0
    %v1265 = vsub.f32 %v1260, 1.0
    %v1266 = vsub.f32 %v1261, 1.0
    %v1267 = vmul.f32 %v1248, %v842
    %v1268 = vmul.f32 %v1250, %v843
    %v1269 = vmul.f32 %v1252, %v844
    %v1270 = vmul.f32 %v1254, %v845
    %v1271 = vmul.f32 %v1256, %v846
    %1277 = vrot.lane.b32.xlu0 %v1262, 64
    %v1278 = vpop.permute.xlu0 %1277
    %1279 = vrot.lane.b32.xlu0 %v1263, 64
    %v1280 = vpop.permute.xlu0 %1279
    %1281 = vrot.lane.b32.xlu0 %v1264, 64
    %v1282 = vpop.permute.xlu0 %1281
    %1283 = vrot.lane.b32.xlu0 %v1265, 64
    %v1284 = vpop.permute.xlu0 %1283
    %1285 = vrot.lane.b32.xlu0 %v1266, 64
    %v1286 = vpop.permute.xlu0 %1285
    %v1292 = vmul.f32 %v1248, %v1278
    %v1293 = vmul.f32 %v1250, %v1280
    %v1294 = vmul.f32 %v1252, %v1282
    %v1295 = vmul.f32 %v1254, %v1284
    %v1296 = vmul.f32 %v1256, %v1286
    %1302 = vrot.lane.b32.xlu0 %v1292, 32
    %v1303 = vpop.permute.xlu0 %1302
    %1304 = vrot.lane.b32.xlu0 %v1293, 32
    %v1305 = vpop.permute.xlu0 %1304
    %1306 = vrot.lane.b32.xlu0 %v1294, 32
    %v1307 = vpop.permute.xlu0 %1306
    %1308 = vrot.lane.b32.xlu0 %v1295, 32
    %v1309 = vpop.permute.xlu0 %1308
    %1310 = vrot.lane.b32.xlu0 %v1296, 32
    %v1311 = vpop.permute.xlu0 %1310
    %v1317 = vadd.f32 %v1267, %v1303
    %v1318 = vadd.f32 %v1268, %v1305
    %v1319 = vadd.f32 %v1269, %v1307
    %v1320 = vadd.f32 %v1270, %v1309
    %v1321 = vadd.f32 %v1271, %v1311
    %v1322 = vtanh.pop %v1317
    %v1323 = vtanh.pop %v1318
    %v1324 = vtanh.pop %v1319
    %v1325 = vtanh.pop %v1320
    %v1326 = vtanh.pop %v1321
    %1332 = vrot.lane.b32.xlu0 %v1322, 64
    %v1333 = vpop.permute.xlu0 %1332
    %1334 = vrot.lane.b32.xlu0 %v1323, 64
    %v1335 = vpop.permute.xlu0 %1334
    %1336 = vrot.lane.b32.xlu0 %v1324, 64
    %v1337 = vpop.permute.xlu0 %1336
    %1338 = vrot.lane.b32.xlu0 %v1325, 64
    %v1339 = vpop.permute.xlu0 %1338
    %1340 = vrot.lane.b32.xlu0 %v1326, 64
    %v1341 = vpop.permute.xlu0 %1340
    %v1347 = vmul.f32 %v1248, %v1333
    %v1348 = vmul.f32 %v1250, %v1335
    %v1349 = vmul.f32 %v1252, %v1337
    %v1350 = vmul.f32 %v1254, %v1339
    %v1351 = vmul.f32 %v1256, %v1341
    %v1352 = vld [vmem:[#allocation2 + $0x50] sm:$0xff]
    %v1353 = vld [vmem:[#allocation2 + $0x58] sm:$0xff]
    %v1354 = vld [vmem:[#allocation2 + $0x60] sm:$0xff]
    %v1355 = vld [vmem:[#allocation2 + $0x68] sm:$0xff]
    %v1356 = vld [vmem:[#allocation2 + $0x70] sm:$0xff]
    %1357 = vmatprep.subr.bf16.mxu0 0
    %1358 = vmatpush1.bf16.msra.mxu0 %v392
    %1359 = vmatprep.subr.bf16.mxu0 0
    %1360 = vmatpush1.bf16.msra.mxu0 %v393
    %1361 = vmatprep.subr.bf16.mxu0 0
    %1362 = vmatpush1.bf16.msra.mxu0 0
    %1363 = vmatprep.subr.bf16.mxu0 0
    %1364 = vmatpush1.bf16.msra.mxu0 0
    %1365 = vmatprep.subr.bf16.mxu0 0
    %1366 = vmatpush1.bf16.msra.mxu0 0
    %1367 = vmatprep.subr.bf16.mxu0 0
    %1368 = vmatpush1.bf16.msra.mxu0 0
    %1369 = vmatprep.subr.bf16.mxu0 0
    %1370 = vmatpush1.bf16.msra.mxu0 0
    %1371 = vmatprep.subr.bf16.mxu0 0
    %1372 = vmatpush1.bf16.msra.mxu0 0
    %1373 = vmatprep.subr.bf16.mxu0 0
    %1374 = vmatpush1.bf16.msra.mxu0 0
    %1375 = vmatprep.subr.bf16.mxu0 0
    %1376 = vmatpush1.bf16.msra.mxu0 0
    %1377 = vmatprep.subr.bf16.mxu0 0
    %1378 = vmatpush1.bf16.msra.mxu0 0
    %1379 = vmatprep.subr.bf16.mxu0 0
    %1380 = vmatpush1.bf16.msra.mxu0 0
    %1381 = vmatprep.subr.bf16.mxu0 0
    %1382 = vmatpush1.bf16.msra.mxu0 0
    %1383 = vmatprep.subr.bf16.mxu0 0
    %1384 = vmatpush1.bf16.msra.mxu0 0
    %1385 = vmatprep.subr.bf16.mxu0 0
    %1386 = vmatpush1.bf16.msra.mxu0 0
    %1387 = vmatprep.subr.bf16.mxu0 0
    %1388 = vmatpush1.bf16.msra.mxu0 0
    %1389 = vmatprep.mubr.bf16.mxu0 0
    %1390 = vmatmul.mubr.bf16.gmra.mrb[0].mxu0 %v1158
    %v1391 = vpop.f32.mrb[0].mxu0
    %v1392 = vadd.f32 0.0, %v1391
    %v1393 = vpop.f32.mrb[0].mxu0
    %v1394 = vpop.f32.mrb[0].mxu0
    %v1395 = vadd.f32 0.0, %v1394
    %v1396 = vpop.f32.mrb[0].mxu0
    %1397 = vmatprep.mubr.bf16.mxu0 0
    %1398 = vmatmul.mubr.bf16.gmra.mrb[0].mxu0 %v1161
    %v1399 = vpop.f32.mrb[0].mxu0
    %v1400 = vadd.f32 0.0, %v1399
    %v1401 = vpop.f32.mrb[0].mxu0
    %v1402 = vpop.f32.mrb[0].mxu0
    %v1403 = vadd.f32 0.0, %v1402
    %v1404 = vpop.f32.mrb[0].mxu0
    %1405 = vmatprep.mubr.bf16.mxu0 0
    %1406 = vmatmul.mubr.bf16.gmra.mrb[0].mxu0 %v1164
    %v1407 = vpop.f32.mrb[0].mxu0
    %v1408 = vadd.f32 0.0, %v1407
    %v1409 = vpop.f32.mrb[0].mxu0
    %v1410 = vpop.f32.mrb[0].mxu0
    %v1411 = vpop.f32.mrb[0].mxu0
    %1412 = vdwg.mxu0
    %v1413 = vadd.f32 %v1352, %v1392
    %v1414 = vadd.f32 %v1353, %v1395
    %v1415 = vadd.f32 %v1354, %v1400
    %v1416 = vadd.f32 %v1355, %v1403
    %v1417 = vadd.f32 %v1356, %v1408
    %v1418 = vxor.u32 %v1413, 2147483648
    %v1419 = vxor.u32 %v1414, 2147483648
    %v1420 = vxor.u32 %v1415, 2147483648
    %v1421 = vxor.u32 %v1416, 2147483648
    %v1422 = vxor.u32 %v1417, 2147483648
    %v1423 = vmul.f32 %v1418, 1.442695
    %v1424 = vpow.pop %v1423
    %v1425 = vmul.f32 %v1419, 1.442695
    %v1426 = vpow.pop %v1425
    %v1427 = vmul.f32 %v1420, 1.442695
    %v1428 = vpow.pop %v1427
    %v1429 = vmul.f32 %v1421, 1.442695
    %v1430 = vpow.pop %v1429
    %v1431 = vmul.f32 %v1422, 1.442695
    %v1432 = vpow.pop %v1431
    %v1433 = vadd.f32 %v1424, 1.0
    %v1434 = vadd.f32 %v1426, 1.0
    %v1435 = vadd.f32 %v1428, 1.0
    %v1436 = vadd.f32 %v1430, 1.0
    %v1437 = vadd.f32 %v1432, 1.0
    %v1438 = vrcp.pop %v1433
    %v1439 = vmul.f32 1.0, %v1438
    %v1440 = vrcp.pop %v1434
    %v1441 = vmul.f32 1.0, %v1440
    %v1442 = vrcp.pop %v1435
    %v1443 = vmul.f32 1.0, %v1442
    %v1444 = vrcp.pop %v1436
    %v1445 = vmul.f32 1.0, %v1444
    %v1446 = vrcp.pop %v1437
    %v1447 = vmul.f32 1.0, %v1446
    %v1448 = vmul.f32 %v1439, 2.0
    %v1449 = vmul.f32 %v1441, 2.0
    %v1450 = vmul.f32 %v1443, 2.0
    %v1451 = vmul.f32 %v1445, 2.0
    %v1452 = vmul.f32 %v1447, 2.0
    %v1453 = vsub.f32 %v1448, 1.0
    %v1454 = vsub.f32 %v1449, 1.0
    %v1455 = vsub.f32 %v1450, 1.0
    %v1456 = vsub.f32 %v1451, 1.0
    %v1457 = vsub.f32 %v1452, 1.0
    %v1458 = vmul.f32 %v1439, %v1033
    %v1459 = vmul.f32 %v1441, %v1034
    %v1460 = vmul.f32 %v1443, %v1035
    %v1461 = vmul.f32 %v1445, %v1036
    %v1462 = vmul.f32 %v1447, %v1037
    %1468 = vrot.lane.b32.xlu0 %v1453, 64
    %v1469 = vpop.permute.xlu0 %1468
    %1470 = vrot.lane.b32.xlu0 %v1454, 64
    %v1471 = vpop.permute.xlu0 %1470
    %1472 = vrot.lane.b32.xlu0 %v1455, 64
    %v1473 = vpop.permute.xlu0 %1472
    %1474 = vrot.lane.b32.xlu0 %v1456, 64
    %v1475 = vpop.permute.xlu0 %1474
    %1476 = vrot.lane.b32.xlu0 %v1457, 64
    %v1477 = vpop.permute.xlu0 %1476
    %v1483 = vmul.f32 %v1439, %v1469
    %v1484 = vmul.f32 %v1441, %v1471
    %v1485 = vmul.f32 %v1443, %v1473
    %v1486 = vmul.f32 %v1445, %v1475
    %v1487 = vmul.f32 %v1447, %v1477
    %1493 = vrot.lane.b32.xlu0 %v1483, 32
    %v1494 = vpop.permute.xlu0 %1493
    %1495 = vrot.lane.b32.xlu0 %v1484, 32
    %v1496 = vpop.permute.xlu0 %1495
    %1497 = vrot.lane.b32.xlu0 %v1485, 32
    %v1498 = vpop.permute.xlu0 %1497
    %1499 = vrot.lane.b32.xlu0 %v1486, 32
    %v1500 = vpop.permute.xlu0 %1499
    %1501 = vrot.lane.b32.xlu0 %v1487, 32
    %v1502 = vpop.permute.xlu0 %1501
    %v1508 = vadd.f32 %v1458, %v1494
    %v1509 = vadd.f32 %v1459, %v1496
    %v1510 = vadd.f32 %v1460, %v1498
    %v1511 = vadd.f32 %v1461, %v1500
    %v1512 = vadd.f32 %v1462, %v1502
    %v1513 = vtanh.pop %v1508
    %v1514 = vtanh.pop %v1509
    %v1515 = vtanh.pop %v1510
    %v1516 = vtanh.pop %v1511
    %v1517 = vtanh.pop %v1512
    %1523 = vrot.lane.b32.xlu0 %v1513, 64
    %v1524 = vpop.permute.xlu0 %1523
    %1525 = vrot.lane.b32.xlu0 %v1514, 64
    %v1526 = vpop.permute.xlu0 %1525
    %1527 = vrot.lane.b32.xlu0 %v1515, 64
    %v1528 = vpop.permute.xlu0 %1527
    %1529 = vrot.lane.b32.xlu0 %v1516, 64
    %v1530 = vpop.permute.xlu0 %1529
    %1531 = vrot.lane.b32.xlu0 %v1517, 64
    %v1532 = vpop.permute.xlu0 %1531
    %v1538 = vmul.f32 %v1439, %v1524
    %v1539 = vmul.f32 %v1441, %v1526
    %v1540 = vmul.f32 %v1443, %v1528
    %v1541 = vmul.f32 %v1445, %v1530
    %v1542 = vmul.f32 %v1447, %v1532
    %v1543 = vpack.c.bf16 %v1539, %v1538
    %v1544 = vpack.c.bf16 %v1541, %v1540
    %v1545 = vpack.c.bf16 %v1542, %v1542
    %v1546 = vpack.c.bf16 %v1348, %v1347
    %v1547 = vpack.c.bf16 %v1350, %v1349
    %v1548 = vpack.c.bf16 %v1351, %v1351
    %1552 = vrot.lane.b32.xlu0 %v1546, 32
    %v1553 = vpop.permute.xlu0 %1552
    %1554 = vrot.lane.b32.xlu0 %v1547, 32
    %v1555 = vpop.permute.xlu0 %1554
    %1556 = vrot.lane.b32.xlu0 %v1548, 32
    %v1557 = vpop.permute.xlu0 %1556
    %v1559 = vsel %vm396, %v1553, 0
    %v1562 = vsel %vm396, %v1555, 0
    %v1565 = vsel %vm396, %v1557, 0
    %1567 = vmatprep.subr.bf16.mxu0 0
    %1568 = vmatpush1.bf16.msra.mxu0 %v597
    %1569 = vmatprep.subr.bf16.mxu0 0
    %1570 = vmatpush1.bf16.msra.mxu0 %v598
    %1571 = vmatprep.subr.bf16.mxu0 0
    %1572 = vmatpush1.bf16.msra.mxu0 0
    %1573 = vmatprep.subr.bf16.mxu0 0
    %1574 = vmatpush1.bf16.msra.mxu0 0
    %1575 = vmatprep.subr.bf16.mxu0 0
    %1576 = vmatpush1.bf16.msra.mxu0 0
    %1577 = vmatprep.subr.bf16.mxu0 0
    %1578 = vmatpush1.bf16.msra.mxu0 0
    %1579 = vmatprep.subr.bf16.mxu0 0
    %1580 = vmatpush1.bf16.msra.mxu0 0
    %1581 = vmatprep.subr.bf16.mxu0 0
    %1582 = vmatpush1.bf16.msra.mxu0 0
    %1583 = vmatprep.subr.bf16.mxu0 0
    %1584 = vmatpush1.bf16.msra.mxu0 0
    %1585 = vmatprep.subr.bf16.mxu0 0
    %1586 = vmatpush1.bf16.msra.mxu0 0
    %1587 = vmatprep.subr.bf16.mxu0 0
    %1588 = vmatpush1.bf16.msra.mxu0 0
    %1589 = vmatprep.subr.bf16.mxu0 0
    %1590 = vmatpush1.bf16.msra.mxu0 0
    %1591 = vmatprep.subr.bf16.mxu0 0
    %1592 = vmatpush1.bf16.msra.mxu0 0
    %1593 = vmatprep.subr.bf16.mxu0 0
    %1594 = vmatpush1.bf16.msra.mxu0 0
    %1595 = vmatprep.subr.bf16.mxu0 0
    %1596 = vmatpush1.bf16.msra.mxu0 0
    %1597 = vmatprep.subr.bf16.mxu0 0
    %1598 = vmatpush1.bf16.msra.mxu0 0
    %1599 = vmatprep.mubr.bf16.mxu0 0
    %1600 = vmatmul.mubr.bf16.gmra.mrb[0].mxu0 %v1559
    %v1601 = vpop.f32.mrb[0].mxu0
    %v1602 = vadd.f32 0.0, %v1601
    %v1603 = vpop.f32.mrb[0].mxu0
    %v1604 = vpop.f32.mrb[0].mxu0
    %v1605 = vadd.f32 0.0, %v1604
    %v1606 = vpop.f32.mrb[0].mxu0
    %1607 = vmatprep.mubr.bf16.mxu0 0
    %1608 = vmatmul.mubr.bf16.gmra.mrb[0].mxu0 %v1562
    %v1609 = vpop.f32.mrb[0].mxu0
    %v1610 = vadd.f32 0.0, %v1609
    %v1611 = vpop.f32.mrb[0].mxu0
    %v1612 = vpop.f32.mrb[0].mxu0
    %v1613 = vadd.f32 0.0, %v1612
    %v1614 = vpop.f32.mrb[0].mxu0
    %1615 = vmatprep.mubr.bf16.mxu0 0
    %1616 = vmatmul.mubr.bf16.gmra.mrb[0].mxu0 %v1565
    %v1617 = vpop.f32.mrb[0].mxu0
    %v1618 = vadd.f32 0.0, %v1617
    %v1619 = vpop.f32.mrb[0].mxu0
    %v1620 = vpop.f32.mrb[0].mxu0
    %v1621 = vpop.f32.mrb[0].mxu0
    %1622 = vdwg.mxu0
    %1626 = vrot.lane.b32.xlu0 %v1543, 32
    %v1627 = vpop.permute.xlu0 %1626
    %1628 = vrot.lane.b32.xlu0 %v1544, 32
    %v1629 = vpop.permute.xlu0 %1628
    %1630 = vrot.lane.b32.xlu0 %v1545, 32
    %v1631 = vpop.permute.xlu0 %1630
    %v1633 = vsel %vm396, %v1627, 0
    %v1636 = vsel %vm396, %v1629, 0
    %v1639 = vsel %vm396, %v1631, 0
    %1641 = vmatprep.subr.bf16.mxu0 0
    %1642 = vmatpush1.bf16.msra.mxu0 %v674
    %1643 = vmatprep.subr.bf16.mxu0 0
    %1644 = vmatpush1.bf16.msra.mxu0 %v675
    %1645 = vmatprep.subr.bf16.mxu0 0
    %1646 = vmatpush1.bf16.msra.mxu0 0
    %1647 = vmatprep.subr.bf16.mxu0 0
    %1648 = vmatpush1.bf16.msra.mxu0 0
    %1649 = vmatprep.subr.bf16.mxu0 0
    %1650 = vmatpush1.bf16.msra.mxu0 0
    %1651 = vmatprep.subr.bf16.mxu0 0
    %1652 = vmatpush1.bf16.msra.mxu0 0
    %1653 = vmatprep.subr.bf16.mxu0 0
    %1654 = vmatpush1.bf16.msra.mxu0 0
    %1655 = vmatprep.subr.bf16.mxu0 0
    %1656 = vmatpush1.bf16.msra.mxu0 0
    %1657 = vmatprep.subr.bf16.mxu0 0
    %1658 = vmatpush1.bf16.msra.mxu0 0
    %1659 = vmatprep.subr.bf16.mxu0 0
    %1660 = vmatpush1.bf16.msra.mxu0 0
    %1661 = vmatprep.subr.bf16.mxu0 0
    %1662 = vmatpush1.bf16.msra.mxu0 0
    %1663 = vmatprep.subr.bf16.mxu0 0
    %1664 = vmatpush1.bf16.msra.mxu0 0
    %1665 = vmatprep.subr.bf16.mxu0 0
    %1666 = vmatpush1.bf16.msra.mxu0 0
    %1667 = vmatprep.subr.bf16.mxu0 0
    %1668 = vmatpush1.bf16.msra.mxu0 0
    %1669 = vmatprep.subr.bf16.mxu0 0
    %1670 = vmatpush1.bf16.msra.mxu0 0
    %1671 = vmatprep.subr.bf16.mxu0 0
    %1672 = vmatpush1.bf16.msra.mxu0 0
    %1673 = vmatprep.mubr.bf16.mxu0 0
    %1674 = vmatmul.mubr.bf16.gmra.mrb[0].mxu0 %v1633
    %v1675 = vpop.f32.mrb[0].mxu0
    %v1676 = vadd.f32 %v1602, %v1675
    %v1677 = vpop.f32.mrb[0].mxu0
    %v1678 = vpop.f32.mrb[0].mxu0
    %v1679 = vadd.f32 %v1605, %v1678
    %v1680 = vpop.f32.mrb[0].mxu0
    %1681 = vmatprep.mubr.bf16.mxu0 0
    %1682 = vmatmul.mubr.bf16.gmra.mrb[0].mxu0 %v1636
    %v1683 = vpop.f32.mrb[0].mxu0
    %v1684 = vadd.f32 %v1610, %v1683
    %v1685 = vpop.f32.mrb[0].mxu0
    %v1686 = vpop.f32.mrb[0].mxu0
    %v1687 = vadd.f32 %v1613, %v1686
    %v1688 = vpop.f32.mrb[0].mxu0
    %1689 = vmatprep.mubr.bf16.mxu0 0
    %1690 = vmatmul.mubr.bf16.gmra.mrb[0].mxu0 %v1639
    %v1691 = vpop.f32.mrb[0].mxu0
    %v1692 = vadd.f32 %v1618, %v1691
    %v1693 = vpop.f32.mrb[0].mxu0
    %v1694 = vpop.f32.mrb[0].mxu0
    %v1695 = vpop.f32.mrb[0].mxu0
    %1696 = vdwg.mxu0
    %v1697 = vadd.f32 %v1676, %v746
    %v1698 = vadd.f32 %v1679, %v746
    %v1699 = vadd.f32 %v1684, %v746
    %v1700 = vadd.f32 %v1687, %v746
    %v1701 = vadd.f32 %v1692, %v746
    %v1702 = vxor.u32 %v1697, 2147483648
    %v1703 = vxor.u32 %v1698, 2147483648
    %v1704 = vxor.u32 %v1699, 2147483648
    %v1705 = vxor.u32 %v1700, 2147483648
    %v1706 = vxor.u32 %v1701, 2147483648
    %v1707 = vmul.f32 %v1702, 1.442695
    %v1708 = vpow.pop %v1707
    %v1709 = vmul.f32 %v1703, 1.442695
    %v1710 = vpow.pop %v1709
    %v1711 = vmul.f32 %v1704, 1.442695
    %v1712 = vpow.pop %v1711
    %v1713 = vmul.f32 %v1705, 1.442695
    %v1714 = vpow.pop %v1713
    %v1715 = vmul.f32 %v1706, 1.442695
    %v1716 = vpow.pop %v1715
    %v1717 = vadd.f32 %v1708, 1.0
    %v1718 = vadd.f32 %v1710, 1.0
    %v1719 = vadd.f32 %v1712, 1.0
    %v1720 = vadd.f32 %v1714, 1.0
    %v1721 = vadd.f32 %v1716, 1.0
    %v1722 = vrcp.pop %v1717
    %v1723 = vmul.f32 1.0, %v1722
    %v1724 = vrcp.pop %v1718
    %v1725 = vmul.f32 1.0, %v1724
    %v1726 = vrcp.pop %v1719
    %v1727 = vmul.f32 1.0, %v1726
    %v1728 = vrcp.pop %v1720
    %v1729 = vmul.f32 1.0, %v1728
    %v1730 = vrcp.pop %v1721
    %v1731 = vmul.f32 1.0, %v1730
    %v1732 = vmul.f32 %v1723, 2.0
    %v1733 = vmul.f32 %v1725, 2.0
    %v1734 = vmul.f32 %v1727, 2.0
    %v1735 = vmul.f32 %v1729, 2.0
    %v1736 = vmul.f32 %v1731, 2.0
    %v1737 = vsub.f32 %v1732, 1.0
    %v1738 = vsub.f32 %v1733, 1.0
    %v1739 = vsub.f32 %v1734, 1.0
    %v1740 = vsub.f32 %v1735, 1.0
    %v1741 = vsub.f32 %v1736, 1.0
    %v1742 = vmul.f32 %v1723, %v1317
    %v1743 = vmul.f32 %v1725, %v1318
    %v1744 = vmul.f32 %v1727, %v1319
    %v1745 = vmul.f32 %v1729, %v1320
    %v1746 = vmul.f32 %v1731, %v1321
    %1752 = vrot.lane.b32.xlu0 %v1737, 64
    %v1753 = vpop.permute.xlu0 %1752
    %1754 = vrot.lane.b32.xlu0 %v1738, 64
    %v1755 = vpop.permute.xlu0 %1754
    %1756 = vrot.lane.b32.xlu0 %v1739, 64
    %v1757 = vpop.permute.xlu0 %1756
    %1758 = vrot.lane.b32.xlu0 %v1740, 64
    %v1759 = vpop.permute.xlu0 %1758
    %1760 = vrot.lane.b32.xlu0 %v1741, 64
    %v1761 = vpop.permute.xlu0 %1760
    %v1767 = vmul.f32 %v1723, %v1753
    %v1768 = vmul.f32 %v1725, %v1755
    %v1769 = vmul.f32 %v1727, %v1757
    %v1770 = vmul.f32 %v1729, %v1759
    %v1771 = vmul.f32 %v1731, %v1761
    %1777 = vrot.lane.b32.xlu0 %v1767, 32
    %v1778 = vpop.permute.xlu0 %1777
    %1779 = vrot.lane.b32.xlu0 %v1768, 32
    %v1780 = vpop.permute.xlu0 %1779
    %1781 = vrot.lane.b32.xlu0 %v1769, 32
    %v1782 = vpop.permute.xlu0 %1781
    %1783 = vrot.lane.b32.xlu0 %v1770, 32
    %v1784 = vpop.permute.xlu0 %1783
    %1785 = vrot.lane.b32.xlu0 %v1771, 32
    %v1786 = vpop.permute.xlu0 %1785
    %v1792 = vadd.f32 %v1742, %v1778
    %v1793 = vadd.f32 %v1743, %v1780
    %v1794 = vadd.f32 %v1744, %v1782
    %v1795 = vadd.f32 %v1745, %v1784
    %v1796 = vadd.f32 %v1746, %v1786
    %v1797 = vtanh.pop %v1792
    %v1798 = vtanh.pop %v1793
    %v1799 = vtanh.pop %v1794
    %v1800 = vtanh.pop %v1795
    %v1801 = vtanh.pop %v1796
    %1807 = vrot.lane.b32.xlu0 %v1797, 64
    %v1808 = vpop.permute.xlu0 %1807
    %1809 = vrot.lane.b32.xlu0 %v1798, 64
    %v1810 = vpop.permute.xlu0 %1809
    %1811 = vrot.lane.b32.xlu0 %v1799, 64
    %v1812 = vpop.permute.xlu0 %1811
    %1813 = vrot.lane.b32.xlu0 %v1800, 64
    %v1814 = vpop.permute.xlu0 %1813
    %1815 = vrot.lane.b32.xlu0 %v1801, 64
    %v1816 = vpop.permute.xlu0 %1815
    %v1822 = vmul.f32 %v1723, %v1808
    %v1823 = vmul.f32 %v1725, %v1810
    %v1824 = vmul.f32 %v1727, %v1812
    %v1825 = vmul.f32 %v1729, %v1814
    %v1826 = vmul.f32 %v1731, %v1816
    %v1827 = vld [vmem:[#allocation2 + $0x78] sm:$0xff]
    %v1828 = vld [vmem:[#allocation2 + $0x80] sm:$0xff]
    %v1829 = vld [vmem:[#allocation2 + $0x88] sm:$0xff]
    %v1830 = vld [vmem:[#allocation2 + $0x90] sm:$0xff]
    %v1831 = vld [vmem:[#allocation2 + $0x98] sm:$0xff]
    %1832 = vmatprep.subr.bf16.mxu0 0
    %1833 = vmatpush1.bf16.msra.mxu0 %v392
    %1834 = vmatprep.subr.bf16.mxu0 0
    %1835 = vmatpush1.bf16.msra.mxu0 %v393
    %1836 = vmatprep.subr.bf16.mxu0 0
    %1837 = vmatpush1.bf16.msra.mxu0 0
    %1838 = vmatprep.subr.bf16.mxu0 0
    %1839 = vmatpush1.bf16.msra.mxu0 0
    %1840 = vmatprep.subr.bf16.mxu0 0
    %1841 = vmatpush1.bf16.msra.mxu0 0
    %1842 = vmatprep.subr.bf16.mxu0 0
    %1843 = vmatpush1.bf16.msra.mxu0 0
    %1844 = vmatprep.subr.bf16.mxu0 0
    %1845 = vmatpush1.bf16.msra.mxu0 0
    %1846 = vmatprep.subr.bf16.mxu0 0
    %1847 = vmatpush1.bf16.msra.mxu0 0
    %1848 = vmatprep.subr.bf16.mxu0 0
    %1849 = vmatpush1.bf16.msra.mxu0 0
    %1850 = vmatprep.subr.bf16.mxu0 0
    %1851 = vmatpush1.bf16.msra.mxu0 0
    %1852 = vmatprep.subr.bf16.mxu0 0
    %1853 = vmatpush1.bf16.msra.mxu0 0
    %1854 = vmatprep.subr.bf16.mxu0 0
    %1855 = vmatpush1.bf16.msra.mxu0 0
    %1856 = vmatprep.subr.bf16.mxu0 0
    %1857 = vmatpush1.bf16.msra.mxu0 0
    %1858 = vmatprep.subr.bf16.mxu0 0
    %1859 = vmatpush1.bf16.msra.mxu0 0
    %1860 = vmatprep.subr.bf16.mxu0 0
    %1861 = vmatpush1.bf16.msra.mxu0 0
    %1862 = vmatprep.subr.bf16.mxu0 0
    %1863 = vmatpush1.bf16.msra.mxu0 0
    %1864 = vmatprep.mubr.bf16.mxu0 0
    %1865 = vmatmul.mubr.bf16.gmra.mrb[0].mxu0 %v1633
    %v1866 = vpop.f32.mrb[0].mxu0
    %v1867 = vadd.f32 0.0, %v1866
    %v1868 = vpop.f32.mrb[0].mxu0
    %v1869 = vpop.f32.mrb[0].mxu0
    %v1870 = vadd.f32 0.0, %v1869
    %v1871 = vpop.f32.mrb[0].mxu0
    %1872 = vmatprep.mubr.bf16.mxu0 0
    %1873 = vmatmul.mubr.bf16.gmra.mrb[0].mxu0 %v1636
    %v1874 = vpop.f32.mrb[0].mxu0
    %v1875 = vadd.f32 0.0, %v1874
    %v1876 = vpop.f32.mrb[0].mxu0
    %v1877 = vpop.f32.mrb[0].mxu0
    %v1878 = vadd.f32 0.0, %v1877
    %v1879 = vpop.f32.mrb[0].mxu0
    %1880 = vmatprep.mubr.bf16.mxu0 0
    %1881 = vmatmul.mubr.bf16.gmra.mrb[0].mxu0 %v1639
    %v1882 = vpop.f32.mrb[0].mxu0
    %v1883 = vadd.f32 0.0, %v1882
    %v1884 = vpop.f32.mrb[0].mxu0
    %v1885 = vpop.f32.mrb[0].mxu0
    %v1886 = vpop.f32.mrb[0].mxu0
    %1887 = vdwg.mxu0
    %v1888 = vadd.f32 %v1827, %v1867
    %v1889 = vadd.f32 %v1828, %v1870
    %v1890 = vadd.f32 %v1829, %v1875
    %v1891 = vadd.f32 %v1830, %v1878
    %v1892 = vadd.f32 %v1831, %v1883
    %v1893 = vxor.u32 %v1888, 2147483648
    %v1894 = vxor.u32 %v1889, 2147483648
    %v1895 = vxor.u32 %v1890, 2147483648
    %v1896 = vxor.u32 %v1891, 2147483648
    %v1897 = vxor.u32 %v1892, 2147483648
    %v1898 = vmul.f32 %v1893, 1.442695
    %v1899 = vpow.pop %v1898
    %v1900 = vmul.f32 %v1894, 1.442695
    %v1901 = vpow.pop %v1900
    %v1902 = vmul.f32 %v1895, 1.442695
    %v1903 = vpow.pop %v1902
    %v1904 = vmul.f32 %v1896, 1.442695
    %v1905 = vpow.pop %v1904
    %v1906 = vmul.f32 %v1897, 1.442695
    %v1907 = vpow.pop %v1906
    %v1908 = vadd.f32 %v1899, 1.0
    %v1909 = vadd.f32 %v1901, 1.0
    %v1910 = vadd.f32 %v1903, 1.0
    %v1911 = vadd.f32 %v1905, 1.0
    %v1912 = vadd.f32 %v1907, 1.0
    %v1913 = vrcp.pop %v1908
    %v1914 = vmul.f32 1.0, %v1913
    %v1915 = vrcp.pop %v1909
    %v1916 = vmul.f32 1.0, %v1915
    %v1917 = vrcp.pop %v1910
    %v1918 = vmul.f32 1.0, %v1917
    %v1919 = vrcp.pop %v1911
    %v1920 = vmul.f32 1.0, %v1919
    %v1921 = vrcp.pop %v1912
    %v1922 = vmul.f32 1.0, %v1921
    %v1923 = vmul.f32 %v1914, 2.0
    %v1924 = vmul.f32 %v1916, 2.0
    %v1925 = vmul.f32 %v1918, 2.0
    %v1926 = vmul.f32 %v1920, 2.0
    %v1927 = vmul.f32 %v1922, 2.0
    %v1928 = vsub.f32 %v1923, 1.0
    %v1929 = vsub.f32 %v1924, 1.0
    %v1930 = vsub.f32 %v1925, 1.0
    %v1931 = vsub.f32 %v1926, 1.0
    %v1932 = vsub.f32 %v1927, 1.0
    %v1933 = vmul.f32 %v1914, %v1508
    %v1934 = vmul.f32 %v1916, %v1509
    %v1935 = vmul.f32 %v1918, %v1510
    %v1936 = vmul.f32 %v1920, %v1511
    %v1937 = vmul.f32 %v1922, %v1512
    %1943 = vrot.lane.b32.xlu0 %v1928, 64
    %v1944 = vpop.permute.xlu0 %1943
    %1945 = vrot.lane.b32.xlu0 %v1929, 64
    %v1946 = vpop.permute.xlu0 %1945
    %1947 = vrot.lane.b32.xlu0 %v1930, 64
    %v1948 = vpop.permute.xlu0 %1947
    %1949 = vrot.lane.b32.xlu0 %v1931, 64
    %v1950 = vpop.permute.xlu0 %1949
    %1951 = vrot.lane.b32.xlu0 %v1932, 64
    %v1952 = vpop.permute.xlu0 %1951
    %v1958 = vmul.f32 %v1914, %v1944
    %v1959 = vmul.f32 %v1916, %v1946
    %v1960 = vmul.f32 %v1918, %v1948
    %v1961 = vmul.f32 %v1920, %v1950
    %v1962 = vmul.f32 %v1922, %v1952
    %1968 = vrot.lane.b32.xlu0 %v1958, 32
    %v1969 = vpop.permute.xlu0 %1968
    %1970 = vrot.lane.b32.xlu0 %v1959, 32
    %v1971 = vpop.permute.xlu0 %1970
    %1972 = vrot.lane.b32.xlu0 %v1960, 32
    %v1973 = vpop.permute.xlu0 %1972
    %1974 = vrot.lane.b32.xlu0 %v1961, 32
    %v1975 = vpop.permute.xlu0 %1974
    %1976 = vrot.lane.b32.xlu0 %v1962, 32
    %v1977 = vpop.permute.xlu0 %1976
    %v1983 = vadd.f32 %v1933, %v1969
    %v1984 = vadd.f32 %v1934, %v1971
    %v1985 = vadd.f32 %v1935, %v1973
    %v1986 = vadd.f32 %v1936, %v1975
    %v1987 = vadd.f32 %v1937, %v1977
    %v1988 = vtanh.pop %v1983
    %v1989 = vtanh.pop %v1984
    %v1990 = vtanh.pop %v1985
    %v1991 = vtanh.pop %v1986
    %v1992 = vtanh.pop %v1987
    %1998 = vrot.lane.b32.xlu0 %v1988, 64
    %v1999 = vpop.permute.xlu0 %1998
    %2000 = vrot.lane.b32.xlu0 %v1989, 64
    %v2001 = vpop.permute.xlu0 %2000
    %2002 = vrot.lane.b32.xlu0 %v1990, 64
    %v2003 = vpop.permute.xlu0 %2002
    %2004 = vrot.lane.b32.xlu0 %v1991, 64
    %v2005 = vpop.permute.xlu0 %2004
    %2006 = vrot.lane.b32.xlu0 %v1992, 64
    %v2007 = vpop.permute.xlu0 %2006
    %v2013 = vmul.f32 %v1914, %v1999
    %v2014 = vmul.f32 %v1916, %v2001
    %v2015 = vmul.f32 %v1918, %v2003
    %v2016 = vmul.f32 %v1920, %v2005
    %v2017 = vmul.f32 %v1922, %v2007
    %v2018 = vpack.c.bf16 %v2014, %v2013
    %v2019 = vpack.c.bf16 %v2016, %v2015
    %v2020 = vpack.c.bf16 %v2017, %v2017
    %v2021 = vpack.c.bf16 %v1823, %v1822
    %v2022 = vpack.c.bf16 %v1825, %v1824
    %v2023 = vpack.c.bf16 %v1826, %v1826
    %2027 = vrot.lane.b32.xlu0 %v2021, 32
    %v2028 = vpop.permute.xlu0 %2027
    %2029 = vrot.lane.b32.xlu0 %v2022, 32
    %v2030 = vpop.permute.xlu0 %2029
    %2031 = vrot.lane.b32.xlu0 %v2023, 32
    %v2032 = vpop.permute.xlu0 %2031
    %v2034 = vsel %vm396, %v2028, 0
    %v2037 = vsel %vm396, %v2030, 0
    %v2040 = vsel %vm396, %v2032, 0
    %2042 = vmatprep.subr.bf16.mxu0 0
    %2043 = vmatpush1.bf16.msra.mxu0 %v597
    %2044 = vmatprep.subr.bf16.mxu0 0
    %2045 = vmatpush1.bf16.msra.mxu0 %v598
    %2046 = vmatprep.subr.bf16.mxu0 0
    %2047 = vmatpush1.bf16.msra.mxu0 0
    %2048 = vmatprep.subr.bf16.mxu0 0
    %2049 = vmatpush1.bf16.msra.mxu0 0
    %2050 = vmatprep.subr.bf16.mxu0 0
    %2051 = vmatpush1.bf16.msra.mxu0 0
    %2052 = vmatprep.subr.bf16.mxu0 0
    %2053 = vmatpush1.bf16.msra.mxu0 0
    %2054 = vmatprep.subr.bf16.mxu0 0
    %2055 = vmatpush1.bf16.msra.mxu0 0
    %2056 = vmatprep.subr.bf16.mxu0 0
    %2057 = vmatpush1.bf16.msra.mxu0 0
    %2058 = vmatprep.subr.bf16.mxu0 0
    %2059 = vmatpush1.bf16.msra.mxu0 0
    %2060 = vmatprep.subr.bf16.mxu0 0
    %2061 = vmatpush1.bf16.msra.mxu0 0
    %2062 = vmatprep.subr.bf16.mxu0 0
    %2063 = vmatpush1.bf16.msra.mxu0 0
    %2064 = vmatprep.subr.bf16.mxu0 0
    %2065 = vmatpush1.bf16.msra.mxu0 0
    %2066 = vmatprep.subr.bf16.mxu0 0
    %2067 = vmatpush1.bf16.msra.mxu0 0
    %2068 = vmatprep.subr.bf16.mxu0 0
    %2069 = vmatpush1.bf16.msra.mxu0 0
    %2070 = vmatprep.subr.bf16.mxu0 0
    %2071 = vmatpush1.bf16.msra.mxu0 0
    %2072 = vmatprep.subr.bf16.mxu0 0
    %2073 = vmatpush1.bf16.msra.mxu0 0
    %2074 = vmatprep.mubr.bf16.mxu0 0
    %2075 = vmatmul.mubr.bf16.gmra.mrb[0].mxu0 %v2034
    %v2076 = vpop.f32.mrb[0].mxu0
    %v2077 = vadd.f32 0.0, %v2076
    %v2078 = vpop.f32.mrb[0].mxu0
    %v2079 = vpop.f32.mrb[0].mxu0
    %v2080 = vadd.f32 0.0, %v2079
    %v2081 = vpop.f32.mrb[0].mxu0
    %2082 = vmatprep.mubr.bf16.mxu0 0
    %2083 = vmatmul.mubr.bf16.gmra.mrb[0].mxu0 %v2037
    %v2084 = vpop.f32.mrb[0].mxu0
    %v2085 = vadd.f32 0.0, %v2084
    %v2086 = vpop.f32.mrb[0].mxu0
    %v2087 = vpop.f32.mrb[0].mxu0
    %v2088 = vadd.f32 0.0, %v2087
    %v2089 = vpop.f32.mrb[0].mxu0
    %2090 = vmatprep.mubr.bf16.mxu0 0
    %2091 = vmatmul.mubr.bf16.gmra.mrb[0].mxu0 %v2040
    %v2092 = vpop.f32.mrb[0].mxu0
    %v2093 = vadd.f32 0.0, %v2092
    %v2094 = vpop.f32.mrb[0].mxu0
    %v2095 = vpop.f32.mrb[0].mxu0
    %v2096 = vpop.f32.mrb[0].mxu0
    %2097 = vdwg.mxu0
    %2101 = vrot.lane.b32.xlu0 %v2018, 32
    %v2102 = vpop.permute.xlu0 %2101
    %2103 = vrot.lane.b32.xlu0 %v2019, 32
    %v2104 = vpop.permute.xlu0 %2103
    %2105 = vrot.lane.b32.xlu0 %v2020, 32
    %v2106 = vpop.permute.xlu0 %2105
    %v2108 = vsel %vm396, %v2102, 0
    %v2111 = vsel %vm396, %v2104, 0
    %v2114 = vsel %vm396, %v2106, 0
    %2116 = vmatprep.subr.bf16.mxu0 0
    %2117 = vmatpush1.bf16.msra.mxu0 %v674
    %2118 = vmatprep.subr.bf16.mxu0 0
    %2119 = vmatpush1.bf16.msra.mxu0 %v675
    %2120 = vmatprep.subr.bf16.mxu0 0
    %2121 = vmatpush1.bf16.msra.mxu0 0
    %2122 = vmatprep.subr.bf16.mxu0 0
    %2123 = vmatpush1.bf16.msra.mxu0 0
    %2124 = vmatprep.subr.bf16.mxu0 0
    %2125 = vmatpush1.bf16.msra.mxu0 0
    %2126 = vmatprep.subr.bf16.mxu0 0
    %2127 = vmatpush1.bf16.msra.mxu0 0
    %2128 = vmatprep.subr.bf16.mxu0 0
    %2129 = vmatpush1.bf16.msra.mxu0 0
    %2130 = vmatprep.subr.bf16.mxu0 0
    %2131 = vmatpush1.bf16.msra.mxu0 0
    %2132 = vmatprep.subr.bf16.mxu0 0
    %2133 = vmatpush1.bf16.msra.mxu0 0
    %2134 = vmatprep.subr.bf16.mxu0 0
    %2135 = vmatpush1.bf16.msra.mxu0 0
    %2136 = vmatprep.subr.bf16.mxu0 0
    %2137 = vmatpush1.bf16.msra.mxu0 0
    %2138 = vmatprep.subr.bf16.mxu0 0
    %2139 = vmatpush1.bf16.msra.mxu0 0
    %2140 = vmatprep.subr.bf16.mxu0 0
    %2141 = vmatpush1.bf16.msra.mxu0 0
    %2142 = vmatprep.subr.bf16.mxu0 0
    %2143 = vmatpush1.bf16.msra.mxu0 0
    %2144 = vmatprep.subr.bf16.mxu0 0
    %2145 = vmatpush1.bf16.msra.mxu0 0
    %2146 = vmatprep.subr.bf16.mxu0 0
    %2147 = vmatpush1.bf16.msra.mxu0 0
    %2148 = vmatprep.mubr.bf16.mxu0 0
    %2149 = vmatmul.mubr.bf16.gmra.mrb[0].mxu0 %v2108
    %v2150 = vpop.f32.mrb[0].mxu0
    %v2151 = vadd.f32 %v2077, %v2150
    %v2152 = vpop.f32.mrb[0].mxu0
    %v2153 = vpop.f32.mrb[0].mxu0
    %v2154 = vadd.f32 %v2080, %v2153
    %v2155 = vpop.f32.mrb[0].mxu0
    %2156 = vmatprep.mubr.bf16.mxu0 0
    %2157 = vmatmul.mubr.bf16.gmra.mrb[0].mxu0 %v2111
    %v2158 = vpop.f32.mrb[0].mxu0
    %v2159 = vadd.f32 %v2085, %v2158
    %v2160 = vpop.f32.mrb[0].mxu0
    %v2161 = vpop.f32.mrb[0].mxu0
    %v2162 = vadd.f32 %v2088, %v2161
    %v2163 = vpop.f32.mrb[0].mxu0
    %2164 = vmatprep.mubr.bf16.mxu0 0
    %2165 = vmatmul.mubr.bf16.gmra.mrb[0].mxu0 %v2114
    %v2166 = vpop.f32.mrb[0].mxu0
    %v2167 = vadd.f32 %v2093, %v2166
    %v2168 = vpop.f32.mrb[0].mxu0
    %v2169 = vpop.f32.mrb[0].mxu0
    %v2170 = vpop.f32.mrb[0].mxu0
    %2171 = vdwg.mxu0
    %v2172 = vadd.f32 %v2151, %v746
    %v2173 = vadd.f32 %v2154, %v746
    %v2174 = vadd.f32 %v2159, %v746
    %v2175 = vadd.f32 %v2162, %v746
    %v2176 = vadd.f32 %v2167, %v746
    %v2177 = vxor.u32 %v2172, 2147483648
    %v2178 = vxor.u32 %v2173, 2147483648
    %v2179 = vxor.u32 %v2174, 2147483648
    %v2180 = vxor.u32 %v2175, 2147483648
    %v2181 = vxor.u32 %v2176, 2147483648
    %v2182 = vmul.f32 %v2177, 1.442695
    %v2183 = vpow.pop %v2182
    %v2184 = vmul.f32 %v2178, 1.442695
    %v2185 = vpow.pop %v2184
    %v2186 = vmul.f32 %v2179, 1.442695
    %v2187 = vpow.pop %v2186
    %v2188 = vmul.f32 %v2180, 1.442695
    %v2189 = vpow.pop %v2188
    %v2190 = vmul.f32 %v2181, 1.442695
    %v2191 = vpow.pop %v2190
    %v2192 = vadd.f32 %v2183, 1.0
    %v2193 = vadd.f32 %v2185, 1.0
    %v2194 = vadd.f32 %v2187, 1.0
    %v2195 = vadd.f32 %v2189, 1.0
    %v2196 = vadd.f32 %v2191, 1.0
    %v2197 = vrcp.pop %v2192
    %v2198 = vmul.f32 1.0, %v2197
    %v2199 = vrcp.pop %v2193
    %v2200 = vmul.f32 1.0, %v2199
    %v2201 = vrcp.pop %v2194
    %v2202 = vmul.f32 1.0, %v2201
    %v2203 = vrcp.pop %v2195
    %v2204 = vmul.f32 1.0, %v2203
    %v2205 = vrcp.pop %v2196
    %v2206 = vmul.f32 1.0, %v2205
    %v2207 = vmul.f32 %v2198, 2.0
    %v2208 = vmul.f32 %v2200, 2.0
    %v2209 = vmul.f32 %v2202, 2.0
    %v2210 = vmul.f32 %v2204, 2.0
    %v2211 = vmul.f32 %v2206, 2.0
    %v2212 = vsub.f32 %v2207, 1.0
    %v2213 = vsub.f32 %v2208, 1.0
    %v2214 = vsub.f32 %v2209, 1.0
    %v2215 = vsub.f32 %v2210, 1.0
    %v2216 = vsub.f32 %v2211, 1.0
    %v2217 = vmul.f32 %v2198, %v1792
    %v2218 = vmul.f32 %v2200, %v1793
    %v2219 = vmul.f32 %v2202, %v1794
    %v2220 = vmul.f32 %v2204, %v1795
    %v2221 = vmul.f32 %v2206, %v1796
    %2227 = vrot.lane.b32.xlu0 %v2212, 64
    %v2228 = vpop.permute.xlu0 %2227
    %2229 = vrot.lane.b32.xlu0 %v2213, 64
    %v2230 = vpop.permute.xlu0 %2229
    %2231 = vrot.lane.b32.xlu0 %v2214, 64
    %v2232 = vpop.permute.xlu0 %2231
    %2233 = vrot.lane.b32.xlu0 %v2215, 64
    %v2234 = vpop.permute.xlu0 %2233
    %2235 = vrot.lane.b32.xlu0 %v2216, 64
    %v2236 = vpop.permute.xlu0 %2235
    %v2242 = vmul.f32 %v2198, %v2228
    %v2243 = vmul.f32 %v2200, %v2230
    %v2244 = vmul.f32 %v2202, %v2232
    %v2245 = vmul.f32 %v2204, %v2234
    %v2246 = vmul.f32 %v2206, %v2236
    %2252 = vrot.lane.b32.xlu0 %v2242, 32
    %v2253 = vpop.permute.xlu0 %2252
    %2254 = vrot.lane.b32.xlu0 %v2243, 32
    %v2255 = vpop.permute.xlu0 %2254
    %2256 = vrot.lane.b32.xlu0 %v2244, 32
    %v2257 = vpop.permute.xlu0 %2256
    %2258 = vrot.lane.b32.xlu0 %v2245, 32
    %v2259 = vpop.permute.xlu0 %2258
    %2260 = vrot.lane.b32.xlu0 %v2246, 32
    %v2261 = vpop.permute.xlu0 %2260
    %v2267 = vadd.f32 %v2217, %v2253
    %v2268 = vadd.f32 %v2218, %v2255
    %v2269 = vadd.f32 %v2219, %v2257
    %v2270 = vadd.f32 %v2220, %v2259
    %v2271 = vadd.f32 %v2221, %v2261
    %v2272 = vtanh.pop %v2267
    %v2273 = vtanh.pop %v2268
    %v2274 = vtanh.pop %v2269
    %v2275 = vtanh.pop %v2270
    %v2276 = vtanh.pop %v2271
    %2282 = vrot.lane.b32.xlu0 %v2272, 64
    %v2283 = vpop.permute.xlu0 %2282
    %2284 = vrot.lane.b32.xlu0 %v2273, 64
    %v2285 = vpop.permute.xlu0 %2284
    %2286 = vrot.lane.b32.xlu0 %v2274, 64
    %v2287 = vpop.permute.xlu0 %2286
    %2288 = vrot.lane.b32.xlu0 %v2275, 64
    %v2289 = vpop.permute.xlu0 %2288
    %2290 = vrot.lane.b32.xlu0 %v2276, 64
    %v2291 = vpop.permute.xlu0 %2290
    %v2297 = vmul.f32 %v2198, %v2283
    %v2298 = vmul.f32 %v2200, %v2285
    %v2299 = vmul.f32 %v2202, %v2287
    %v2300 = vmul.f32 %v2204, %v2289
    %v2301 = vmul.f32 %v2206, %v2291
    %v2302 = vld [vmem:[#allocation2 + $0xa0] sm:$0xff]
    %v2303 = vld [vmem:[#allocation2 + $0xa8] sm:$0xff]
    %v2304 = vld [vmem:[#allocation2 + $0xb0] sm:$0xff]
    %v2305 = vld [vmem:[#allocation2 + $0xb8] sm:$0xff]
    %v2306 = vld [vmem:[#allocation2 + $0xc0] sm:$0xff]
    %2307 = vmatprep.subr.bf16.mxu0 0
    %2308 = vmatpush1.bf16.msra.mxu0 %v392
    %2309 = vmatprep.subr.bf16.mxu0 0
    %2310 = vmatpush1.bf16.msra.mxu0 %v393
    %2311 = vmatprep.subr.bf16.mxu0 0
    %2312 = vmatpush1.bf16.msra.mxu0 0
    %2313 = vmatprep.subr.bf16.mxu0 0
    %2314 = vmatpush1.bf16.msra.mxu0 0
    %2315 = vmatprep.subr.bf16.mxu0 0
    %2316 = vmatpush1.bf16.msra.mxu0 0
    %2317 = vmatprep.subr.bf16.mxu0 0
    %2318 = vmatpush1.bf16.msra.mxu0 0
    %2319 = vmatprep.subr.bf16.mxu0 0
    %2320 = vmatpush1.bf16.msra.mxu0 0
    %2321 = vmatprep.subr.bf16.mxu0 0
    %2322 = vmatpush1.bf16.msra.mxu0 0
    %2323 = vmatprep.subr.bf16.mxu0 0
    %2324 = vmatpush1.bf16.msra.mxu0 0
    %2325 = vmatprep.subr.bf16.mxu0 0
    %2326 = vmatpush1.bf16.msra.mxu0 0
    %2327 = vmatprep.subr.bf16.mxu0 0
    %2328 = vmatpush1.bf16.msra.mxu0 0
    %2329 = vmatprep.subr.bf16.mxu0 0
    %2330 = vmatpush1.bf16.msra.mxu0 0
    %2331 = vmatprep.subr.bf16.mxu0 0
    %2332 = vmatpush1.bf16.msra.mxu0 0
    %2333 = vmatprep.subr.bf16.mxu0 0
    %2334 = vmatpush1.bf16.msra.mxu0 0
    %2335 = vmatprep.subr.bf16.mxu0 0
    %2336 = vmatpush1.bf16.msra.mxu0 0
    %2337 = vmatprep.subr.bf16.mxu0 0
    %2338 = vmatpush1.bf16.msra.mxu0 0
    %2339 = vmatprep.mubr.bf16.mxu0 0
    %2340 = vmatmul.mubr.bf16.gmra.mrb[0].mxu0 %v2108
    %v2341 = vpop.f32.mrb[0].mxu0
    %v2342 = vadd.f32 0.0, %v2341
    %v2343 = vpop.f32.mrb[0].mxu0
    %v2344 = vpop.f32.mrb[0].mxu0
    %v2345 = vadd.f32 0.0, %v2344
    %v2346 = vpop.f32.mrb[0].mxu0
    %2347 = vmatprep.mubr.bf16.mxu0 0
    %2348 = vmatmul.mubr.bf16.gmra.mrb[0].mxu0 %v2111
    %v2349 = vpop.f32.mrb[0].mxu0
    %v2350 = vadd.f32 0.0, %v2349
    %v2351 = vpop.f32.mrb[0].mxu0
    %v2352 = vpop.f32.mrb[0].mxu0
    %v2353 = vadd.f32 0.0, %v2352
    %v2354 = vpop.f32.mrb[0].mxu0
    %2355 = vmatprep.mubr.bf16.mxu0 0
    %2356 = vmatmul.mubr.bf16.gmra.mrb[0].mxu0 %v2114
    %v2357 = vpop.f32.mrb[0].mxu0
    %v2358 = vadd.f32 0.0, %v2357
    %v2359 = vpop.f32.mrb[0].mxu0
    %v2360 = vpop.f32.mrb[0].mxu0
    %v2361 = vpop.f32.mrb[0].mxu0
    %2362 = vdwg.mxu0
    %v2363 = vadd.f32 %v2302, %v2342
    %v2364 = vadd.f32 %v2303, %v2345
    %v2365 = vadd.f32 %v2304, %v2350
    %v2366 = vadd.f32 %v2305, %v2353
    %v2367 = vadd.f32 %v2306, %v2358
    %v2368 = vxor.u32 %v2363, 2147483648
    %v2369 = vxor.u32 %v2364, 2147483648
    %v2370 = vxor.u32 %v2365, 2147483648
    %v2371 = vxor.u32 %v2366, 2147483648
    %v2372 = vxor.u32 %v2367, 2147483648
    %v2373 = vmul.f32 %v2368, 1.442695
    %v2374 = vpow.pop %v2373
    %v2375 = vmul.f32 %v2369, 1.442695
    %v2376 = vpow.pop %v2375
    %v2377 = vmul.f32 %v2370, 1.442695
    %v2378 = vpow.pop %v2377
    %v2379 = vmul.f32 %v2371, 1.442695
    %v2380 = vpow.pop %v2379
    %v2381 = vmul.f32 %v2372, 1.442695
    %v2382 = vpow.pop %v2381
    %v2383 = vadd.f32 %v2374, 1.0
    %v2384 = vadd.f32 %v2376, 1.0
    %v2385 = vadd.f32 %v2378, 1.0
    %v2386 = vadd.f32 %v2380, 1.0
    %v2387 = vadd.f32 %v2382, 1.0
    %v2388 = vrcp.pop %v2383
    %v2389 = vmul.f32 1.0, %v2388
    %v2390 = vrcp.pop %v2384
    %v2391 = vmul.f32 1.0, %v2390
    %v2392 = vrcp.pop %v2385
    %v2393 = vmul.f32 1.0, %v2392
    %v2394 = vrcp.pop %v2386
    %v2395 = vmul.f32 1.0, %v2394
    %v2396 = vrcp.pop %v2387
    %v2397 = vmul.f32 1.0, %v2396
    %v2398 = vmul.f32 %v2389, 2.0
    %v2399 = vmul.f32 %v2391, 2.0
    %v2400 = vmul.f32 %v2393, 2.0
    %v2401 = vmul.f32 %v2395, 2.0
    %v2402 = vmul.f32 %v2397, 2.0
    %v2403 = vsub.f32 %v2398, 1.0
    %v2404 = vsub.f32 %v2399, 1.0
    %v2405 = vsub.f32 %v2400, 1.0
    %v2406 = vsub.f32 %v2401, 1.0
    %v2407 = vsub.f32 %v2402, 1.0
    %v2408 = vmul.f32 %v2389, %v1983
    %v2409 = vmul.f32 %v2391, %v1984
    %v2410 = vmul.f32 %v2393, %v1985
    %v2411 = vmul.f32 %v2395, %v1986
    %v2412 = vmul.f32 %v2397, %v1987
    %2418 = vrot.lane.b32.xlu0 %v2403, 64
    %v2419 = vpop.permute.xlu0 %2418
    %2420 = vrot.lane.b32.xlu0 %v2404, 64
    %v2421 = vpop.permute.xlu0 %2420
    %2422 = vrot.lane.b32.xlu0 %v2405, 64
    %v2423 = vpop.permute.xlu0 %2422
    %2424 = vrot.lane.b32.xlu0 %v2406, 64
    %v2425 = vpop.permute.xlu0 %2424
    %2426 = vrot.lane.b32.xlu0 %v2407, 64
    %v2427 = vpop.permute.xlu0 %2426
    %v2433 = vmul.f32 %v2389, %v2419
    %v2434 = vmul.f32 %v2391, %v2421
    %v2435 = vmul.f32 %v2393, %v2423
    %v2436 = vmul.f32 %v2395, %v2425
    %v2437 = vmul.f32 %v2397, %v2427
    %2443 = vrot.lane.b32.xlu0 %v2433, 32
    %v2444 = vpop.permute.xlu0 %2443
    %2445 = vrot.lane.b32.xlu0 %v2434, 32
    %v2446 = vpop.permute.xlu0 %2445
    %2447 = vrot.lane.b32.xlu0 %v2435, 32
    %v2448 = vpop.permute.xlu0 %2447
    %2449 = vrot.lane.b32.xlu0 %v2436, 32
    %v2450 = vpop.permute.xlu0 %2449
    %2451 = vrot.lane.b32.xlu0 %v2437, 32
    %v2452 = vpop.permute.xlu0 %2451
    %v2458 = vadd.f32 %v2408, %v2444
    %v2459 = vadd.f32 %v2409, %v2446
    %v2460 = vadd.f32 %v2410, %v2448
    %v2461 = vadd.f32 %v2411, %v2450
    %v2462 = vadd.f32 %v2412, %v2452
    %v2463 = vtanh.pop %v2458
    %v2464 = vtanh.pop %v2459
    %v2465 = vtanh.pop %v2460
    %v2466 = vtanh.pop %v2461
    %v2467 = vtanh.pop %v2462
    %2473 = vrot.lane.b32.xlu0 %v2463, 64
    %v2474 = vpop.permute.xlu0 %2473
    %2475 = vrot.lane.b32.xlu0 %v2464, 64
    %v2476 = vpop.permute.xlu0 %2475
    %2477 = vrot.lane.b32.xlu0 %v2465, 64
    %v2478 = vpop.permute.xlu0 %2477
    %2479 = vrot.lane.b32.xlu0 %v2466, 64
    %v2480 = vpop.permute.xlu0 %2479
    %2481 = vrot.lane.b32.xlu0 %v2467, 64
    %v2482 = vpop.permute.xlu0 %2481
    %v2488 = vmul.f32 %v2389, %v2474
    %v2489 = vmul.f32 %v2391, %v2476
    %v2490 = vmul.f32 %v2393, %v2478
    %v2491 = vmul.f32 %v2395, %v2480
    %v2492 = vmul.f32 %v2397, %v2482
    %v2493 = vpack.c.bf16 %v2489, %v2488
    %v2494 = vpack.c.bf16 %v2491, %v2490
    %v2495 = vpack.c.bf16 %v2492, %v2492
    %v2496 = vpack.c.bf16 %v2298, %v2297
    %v2497 = vpack.c.bf16 %v2300, %v2299
    %v2498 = vpack.c.bf16 %v2301, %v2301
    %2502 = vrot.lane.b32.xlu0 %v2496, 32
    %v2503 = vpop.permute.xlu0 %2502
    %2504 = vrot.lane.b32.xlu0 %v2497, 32
    %v2505 = vpop.permute.xlu0 %2504
    %2506 = vrot.lane.b32.xlu0 %v2498, 32
    %v2507 = vpop.permute.xlu0 %2506
    %v2509 = vsel %vm396, %v2503, 0
    %v2512 = vsel %vm396, %v2505, 0
    %v2515 = vsel %vm396, %v2507, 0
    %2517 = vmatprep.subr.bf16.mxu0 0
    %2518 = vmatpush1.bf16.msra.mxu0 %v597
    %2519 = vmatprep.subr.bf16.mxu0 0
    %2520 = vmatpush1.bf16.msra.mxu0 %v598
    %2521 = vmatprep.subr.bf16.mxu0 0
    %2522 = vmatpush1.bf16.msra.mxu0 0
    %2523 = vmatprep.subr.bf16.mxu0 0
    %2524 = vmatpush1.bf16.msra.mxu0 0
    %2525 = vmatprep.subr.bf16.mxu0 0
    %2526 = vmatpush1.bf16.msra.mxu0 0
    %2527 = vmatprep.subr.bf16.mxu0 0
    %2528 = vmatpush1.bf16.msra.mxu0 0
    %2529 = vmatprep.subr.bf16.mxu0 0
    %2530 = vmatpush1.bf16.msra.mxu0 0
    %2531 = vmatprep.subr.bf16.mxu0 0
    %2532 = vmatpush1.bf16.msra.mxu0 0
    %2533 = vmatprep.subr.bf16.mxu0 0
    %2534 = vmatpush1.bf16.msra.mxu0 0
    %2535 = vmatprep.subr.bf16.mxu0 0
    %2536 = vmatpush1.bf16.msra.mxu0 0
    %2537 = vmatprep.subr.bf16.mxu0 0
    %2538 = vmatpush1.bf16.msra.mxu0 0
    %2539 = vmatprep.subr.bf16.mxu0 0
    %2540 = vmatpush1.bf16.msra.mxu0 0
    %2541 = vmatprep.subr.bf16.mxu0 0
    %2542 = vmatpush1.bf16.msra.mxu0 0
    %2543 = vmatprep.subr.bf16.mxu0 0
    %2544 = vmatpush1.bf16.msra.mxu0 0
    %2545 = vmatprep.subr.bf16.mxu0 0
    %2546 = vmatpush1.bf16.msra.mxu0 0
    %2547 = vmatprep.subr.bf16.mxu0 0
    %2548 = vmatpush1.bf16.msra.mxu0 0
    %2549 = vmatprep.mubr.bf16.mxu0 0
    %2550 = vmatmul.mubr.bf16.gmra.mrb[0].mxu0 %v2509
    %v2551 = vpop.f32.mrb[0].mxu0
    %v2552 = vadd.f32 0.0, %v2551
    %v2553 = vpop.f32.mrb[0].mxu0
    %v2554 = vpop.f32.mrb[0].mxu0
    %v2555 = vadd.f32 0.0, %v2554
    %v2556 = vpop.f32.mrb[0].mxu0
    %2557 = vmatprep.mubr.bf16.mxu0 0
    %2558 = vmatmul.mubr.bf16.gmra.mrb[0].mxu0 %v2512
    %v2559 = vpop.f32.mrb[0].mxu0
    %v2560 = vadd.f32 0.0, %v2559
    %v2561 = vpop.f32.mrb[0].mxu0
    %v2562 = vpop.f32.mrb[0].mxu0
    %v2563 = vadd.f32 0.0, %v2562
    %v2564 = vpop.f32.mrb[0].mxu0
    %2565 = vmatprep.mubr.bf16.mxu0 0
    %2566 = vmatmul.mubr.bf16.gmra.mrb[0].mxu0 %v2515
    %v2567 = vpop.f32.mrb[0].mxu0
    %v2568 = vadd.f32 0.0, %v2567
    %v2569 = vpop.f32.mrb[0].mxu0
    %v2570 = vpop.f32.mrb[0].mxu0
    %v2571 = vpop.f32.mrb[0].mxu0
    %2572 = vdwg.mxu0
    %2576 = vrot.lane.b32.xlu0 %v2493, 32
    %v2577 = vpop.permute.xlu0 %2576
    %2578 = vrot.lane.b32.xlu0 %v2494, 32
    %v2579 = vpop.permute.xlu0 %2578
    %2580 = vrot.lane.b32.xlu0 %v2495, 32
    %v2581 = vpop.permute.xlu0 %2580
    %v2583 = vsel %vm396, %v2577, 0
    %v2586 = vsel %vm396, %v2579, 0
    %v2589 = vsel %vm396, %v2581, 0
    %2591 = vmatprep.subr.bf16.mxu0 0
    %2592 = vmatpush1.bf16.msra.mxu0 %v674
    %2593 = vmatprep.subr.bf16.mxu0 0
    %2594 = vmatpush1.bf16.msra.mxu0 %v675
    %2595 = vmatprep.subr.bf16.mxu0 0
    %2596 = vmatpush1.bf16.msra.mxu0 0
    %2597 = vmatprep.subr.bf16.mxu0 0
    %2598 = vmatpush1.bf16.msra.mxu0 0
    %2599 = vmatprep.subr.bf16.mxu0 0
    %2600 = vmatpush1.bf16.msra.mxu0 0
    %2601 = vmatprep.subr.bf16.mxu0 0
    %2602 = vmatpush1.bf16.msra.mxu0 0
    %2603 = vmatprep.subr.bf16.mxu0 0
    %2604 = vmatpush1.bf16.msra.mxu0 0
    %2605 = vmatprep.subr.bf16.mxu0 0
    %2606 = vmatpush1.bf16.msra.mxu0 0
    %2607 = vmatprep.subr.bf16.mxu0 0
    %2608 = vmatpush1.bf16.msra.mxu0 0
    %2609 = vmatprep.subr.bf16.mxu0 0
    %2610 = vmatpush1.bf16.msra.mxu0 0
    %2611 = vmatprep.subr.bf16.mxu0 0
    %2612 = vmatpush1.bf16.msra.mxu0 0
    %2613 = vmatprep.subr.bf16.mxu0 0
    %2614 = vmatpush1.bf16.msra.mxu0 0
    %2615 = vmatprep.subr.bf16.mxu0 0
    %2616 = vmatpush1.bf16.msra.mxu0 0
    %2617 = vmatprep.subr.bf16.mxu0 0
    %2618 = vmatpush1.bf16.msra.mxu0 0
    %2619 = vmatprep.subr.bf16.mxu0 0
    %2620 = vmatpush1.bf16.msra.mxu0 0
    %2621 = vmatprep.subr.bf16.mxu0 0
    %2622 = vmatpush1.bf16.msra.mxu0 0
    %2623 = vmatprep.mubr.bf16.mxu0 0
    %2624 = vmatmul.mubr.bf16.gmra.mrb[0].mxu0 %v2583
    %v2625 = vpop.f32.mrb[0].mxu0
    %v2626 = vadd.f32 %v2552, %v2625
    %v2627 = vpop.f32.mrb[0].mxu0
    %v2628 = vpop.f32.mrb[0].mxu0
    %v2629 = vadd.f32 %v2555, %v2628
    %v2630 = vpop.f32.mrb[0].mxu0
    %2631 = vmatprep.mubr.bf16.mxu0 0
    %2632 = vmatmul.mubr.bf16.gmra.mrb[0].mxu0 %v2586
    %v2633 = vpop.f32.mrb[0].mxu0
    %v2634 = vadd.f32 %v2560, %v2633
    %v2635 = vpop.f32.mrb[0].mxu0
    %v2636 = vpop.f32.mrb[0].mxu0
    %v2637 = vadd.f32 %v2563, %v2636
    %v2638 = vpop.f32.mrb[0].mxu0
    %2639 = vmatprep.mubr.bf16.mxu0 0
    %2640 = vmatmul.mubr.bf16.gmra.mrb[0].mxu0 %v2589
    %v2641 = vpop.f32.mrb[0].mxu0
    %v2642 = vadd.f32 %v2568, %v2641
    %v2643 = vpop.f32.mrb[0].mxu0
    %v2644 = vpop.f32.mrb[0].mxu0
    %v2645 = vpop.f32.mrb[0].mxu0
    %2646 = vdwg.mxu0
    %v2647 = vadd.f32 %v2626, %v746
    %v2648 = vadd.f32 %v2629, %v746
    %v2649 = vadd.f32 %v2634, %v746
    %v2650 = vadd.f32 %v2637, %v746
    %v2651 = vadd.f32 %v2642, %v746
    %v2652 = vxor.u32 %v2647, 2147483648
    %v2653 = vxor.u32 %v2648, 2147483648
    %v2654 = vxor.u32 %v2649, 2147483648
    %v2655 = vxor.u32 %v2650, 2147483648
    %v2656 = vxor.u32 %v2651, 2147483648
    %v2657 = vmul.f32 %v2652, 1.442695
    %v2658 = vpow.pop %v2657
    %v2659 = vmul.f32 %v2653, 1.442695
    %v2660 = vpow.pop %v2659
    %v2661 = vmul.f32 %v2654, 1.442695
    %v2662 = vpow.pop %v2661
    %v2663 = vmul.f32 %v2655, 1.442695
    %v2664 = vpow.pop %v2663
    %v2665 = vmul.f32 %v2656, 1.442695
    %v2666 = vpow.pop %v2665
    %v2667 = vadd.f32 %v2658, 1.0
    %v2668 = vadd.f32 %v2660, 1.0
    %v2669 = vadd.f32 %v2662, 1.0
    %v2670 = vadd.f32 %v2664, 1.0
    %v2671 = vadd.f32 %v2666, 1.0
    %v2672 = vrcp.pop %v2667
    %v2673 = vmul.f32 1.0, %v2672
    %v2674 = vrcp.pop %v2668
    %v2675 = vmul.f32 1.0, %v2674
    %v2676 = vrcp.pop %v2669
    %v2677 = vmul.f32 1.0, %v2676
    %v2678 = vrcp.pop %v2670
    %v2679 = vmul.f32 1.0, %v2678
    %v2680 = vrcp.pop %v2671
    %v2681 = vmul.f32 1.0, %v2680
    %v2682 = vmul.f32 %v2673, 2.0
    %v2683 = vmul.f32 %v2675, 2.0
    %v2684 = vmul.f32 %v2677, 2.0
    %v2685 = vmul.f32 %v2679, 2.0
    %v2686 = vmul.f32 %v2681, 2.0
    %v2687 = vsub.f32 %v2682, 1.0
    %v2688 = vsub.f32 %v2683, 1.0
    %v2689 = vsub.f32 %v2684, 1.0
    %v2690 = vsub.f32 %v2685, 1.0
    %v2691 = vsub.f32 %v2686, 1.0
    %v2692 = vmul.f32 %v2673, %v2267
    %v2693 = vmul.f32 %v2675, %v2268
    %v2694 = vmul.f32 %v2677, %v2269
    %v2695 = vmul.f32 %v2679, %v2270
    %v2696 = vmul.f32 %v2681, %v2271
    %2702 = vrot.lane.b32.xlu0 %v2687, 64
    %v2703 = vpop.permute.xlu0 %2702
    %2704 = vrot.lane.b32.xlu0 %v2688, 64
    %v2705 = vpop.permute.xlu0 %2704
    %2706 = vrot.lane.b32.xlu0 %v2689, 64
    %v2707 = vpop.permute.xlu0 %2706
    %2708 = vrot.lane.b32.xlu0 %v2690, 64
    %v2709 = vpop.permute.xlu0 %2708
    %2710 = vrot.lane.b32.xlu0 %v2691, 64
    %v2711 = vpop.permute.xlu0 %2710
    %v2717 = vmul.f32 %v2673, %v2703
    %v2718 = vmul.f32 %v2675, %v2705
    %v2719 = vmul.f32 %v2677, %v2707
    %v2720 = vmul.f32 %v2679, %v2709
    %v2721 = vmul.f32 %v2681, %v2711
    %2727 = vrot.lane.b32.xlu0 %v2717, 32
    %v2728 = vpop.permute.xlu0 %2727
    %2729 = vrot.lane.b32.xlu0 %v2718, 32
    %v2730 = vpop.permute.xlu0 %2729
    %2731 = vrot.lane.b32.xlu0 %v2719, 32
    %v2732 = vpop.permute.xlu0 %2731
    %2733 = vrot.lane.b32.xlu0 %v2720, 32
    %v2734 = vpop.permute.xlu0 %2733
    %2735 = vrot.lane.b32.xlu0 %v2721, 32
    %v2736 = vpop.permute.xlu0 %2735
    %v2742 = vadd.f32 %v2692, %v2728
    %v2743 = vadd.f32 %v2693, %v2730
    %v2744 = vadd.f32 %v2694, %v2732
    %v2745 = vadd.f32 %v2695, %v2734
    %v2746 = vadd.f32 %v2696, %v2736
    %v2747 = vtanh.pop %v2742
    %v2748 = vtanh.pop %v2743
    %v2749 = vtanh.pop %v2744
    %v2750 = vtanh.pop %v2745
    %v2751 = vtanh.pop %v2746
    %2757 = vrot.lane.b32.xlu0 %v2747, 64
    %v2758 = vpop.permute.xlu0 %2757
    %2759 = vrot.lane.b32.xlu0 %v2748, 64
    %v2760 = vpop.permute.xlu0 %2759
    %2761 = vrot.lane.b32.xlu0 %v2749, 64
    %v2762 = vpop.permute.xlu0 %2761
    %2763 = vrot.lane.b32.xlu0 %v2750, 64
    %v2764 = vpop.permute.xlu0 %2763
    %2765 = vrot.lane.b32.xlu0 %v2751, 64
    %v2766 = vpop.permute.xlu0 %2765
    %v2772 = vmul.f32 %v2673, %v2758
    %v2773 = vmul.f32 %v2675, %v2760
    %v2774 = vmul.f32 %v2677, %v2762
    %v2775 = vmul.f32 %v2679, %v2764
    %v2776 = vmul.f32 %v2681, %v2766
    %v2777 = vld [vmem:[#allocation2 + $0xc8] sm:$0xff]
    %v2778 = vld [vmem:[#allocation2 + $0xd0] sm:$0xff]
    %v2779 = vld [vmem:[#allocation2 + $0xd8] sm:$0xff]
    %v2780 = vld [vmem:[#allocation2 + $0xe0] sm:$0xff]
    %v2781 = vld [vmem:[#allocation2 + $0xe8] sm:$0xff]
    %2782 = vmatprep.subr.bf16.mxu0 0
    %2783 = vmatpush1.bf16.msra.mxu0 %v392
    %2784 = vmatprep.subr.bf16.mxu0 0
    %2785 = vmatpush1.bf16.msra.mxu0 %v393
    %2786 = vmatprep.subr.bf16.mxu0 0
    %2787 = vmatpush1.bf16.msra.mxu0 0
    %2788 = vmatprep.subr.bf16.mxu0 0
    %2789 = vmatpush1.bf16.msra.mxu0 0
    %2790 = vmatprep.subr.bf16.mxu0 0
    %2791 = vmatpush1.bf16.msra.mxu0 0
    %2792 = vmatprep.subr.bf16.mxu0 0
    %2793 = vmatpush1.bf16.msra.mxu0 0
    %2794 = vmatprep.subr.bf16.mxu0 0
    %2795 = vmatpush1.bf16.msra.mxu0 0
    %2796 = vmatprep.subr.bf16.mxu0 0
    %2797 = vmatpush1.bf16.msra.mxu0 0
    %2798 = vmatprep.subr.bf16.mxu0 0
    %2799 = vmatpush1.bf16.msra.mxu0 0
    %2800 = vmatprep.subr.bf16.mxu0 0
    %2801 = vmatpush1.bf16.msra.mxu0 0
    %2802 = vmatprep.subr.bf16.mxu0 0
    %2803 = vmatpush1.bf16.msra.mxu0 0
    %2804 = vmatprep.subr.bf16.mxu0 0
    %2805 = vmatpush1.bf16.msra.mxu0 0
    %2806 = vmatprep.subr.bf16.mxu0 0
    %2807 = vmatpush1.bf16.msra.mxu0 0
    %2808 = vmatprep.subr.bf16.mxu0 0
    %2809 = vmatpush1.bf16.msra.mxu0 0
    %2810 = vmatprep.subr.bf16.mxu0 0
    %2811 = vmatpush1.bf16.msra.mxu0 0
    %2812 = vmatprep.subr.bf16.mxu0 0
    %2813 = vmatpush1.bf16.msra.mxu0 0
    %2814 = vmatprep.mubr.bf16.mxu0 0
    %2815 = vmatmul.mubr.bf16.gmra.mrb[0].mxu0 %v2583
    %v2816 = vpop.f32.mrb[0].mxu0
    %v2817 = vadd.f32 0.0, %v2816
    %v2818 = vpop.f32.mrb[0].mxu0
    %v2819 = vpop.f32.mrb[0].mxu0
    %v2820 = vadd.f32 0.0, %v2819
    %v2821 = vpop.f32.mrb[0].mxu0
    %2822 = vmatprep.mubr.bf16.mxu0 0
    %2823 = vmatmul.mubr.bf16.gmra.mrb[0].mxu0 %v2586
    %v2824 = vpop.f32.mrb[0].mxu0
    %v2825 = vadd.f32 0.0, %v2824
    %v2826 = vpop.f32.mrb[0].mxu0
    %v2827 = vpop.f32.mrb[0].mxu0
    %v2828 = vadd.f32 0.0, %v2827
    %v2829 = vpop.f32.mrb[0].mxu0
    %2830 = vmatprep.mubr.bf16.mxu0 0
    %2831 = vmatmul.mubr.bf16.gmra.mrb[0].mxu0 %v2589
    %v2832 = vpop.f32.mrb[0].mxu0
    %v2833 = vadd.f32 0.0, %v2832
    %v2834 = vpop.f32.mrb[0].mxu0
    %v2835 = vpop.f32.mrb[0].mxu0
    %v2836 = vpop.f32.mrb[0].mxu0
    %2837 = vdwg.mxu0
    %v2838 = vadd.f32 %v2777, %v2817
    %v2839 = vadd.f32 %v2778, %v2820
    %v2840 = vadd.f32 %v2779, %v2825
    %v2841 = vadd.f32 %v2780, %v2828
    %v2842 = vadd.f32 %v2781, %v2833
    %v2843 = vxor.u32 %v2838, 2147483648
    %v2844 = vxor.u32 %v2839, 2147483648
    %v2845 = vxor.u32 %v2840, 2147483648
    %v2846 = vxor.u32 %v2841, 2147483648
    %v2847 = vxor.u32 %v2842, 2147483648
    %v2848 = vmul.f32 %v2843, 1.442695
    %v2849 = vpow.pop %v2848
    %v2850 = vmul.f32 %v2844, 1.442695
    %v2851 = vpow.pop %v2850
    %v2852 = vmul.f32 %v2845, 1.442695
    %v2853 = vpow.pop %v2852
    %v2854 = vmul.f32 %v2846, 1.442695
    %v2855 = vpow.pop %v2854
    %v2856 = vmul.f32 %v2847, 1.442695
    %v2857 = vpow.pop %v2856
    %v2858 = vadd.f32 %v2849, 1.0
    %v2859 = vadd.f32 %v2851, 1.0
    %v2860 = vadd.f32 %v2853, 1.0
    %v2861 = vadd.f32 %v2855, 1.0
    %v2862 = vadd.f32 %v2857, 1.0
    %v2863 = vrcp.pop %v2858
    %v2864 = vmul.f32 1.0, %v2863
    %v2865 = vrcp.pop %v2859
    %v2866 = vmul.f32 1.0, %v2865
    %v2867 = vrcp.pop %v2860
    %v2868 = vmul.f32 1.0, %v2867
    %v2869 = vrcp.pop %v2861
    %v2870 = vmul.f32 1.0, %v2869
    %v2871 = vrcp.pop %v2862
    %v2872 = vmul.f32 1.0, %v2871
    %v2873 = vmul.f32 %v2864, 2.0
    %v2874 = vmul.f32 %v2866, 2.0
    %v2875 = vmul.f32 %v2868, 2.0
    %v2876 = vmul.f32 %v2870, 2.0
    %v2877 = vmul.f32 %v2872, 2.0
    %v2878 = vsub.f32 %v2873, 1.0
    %v2879 = vsub.f32 %v2874, 1.0
    %v2880 = vsub.f32 %v2875, 1.0
    %v2881 = vsub.f32 %v2876, 1.0
    %v2882 = vsub.f32 %v2877, 1.0
    %v2883 = vmul.f32 %v2864, %v2458
    %v2884 = vmul.f32 %v2866, %v2459
    %v2885 = vmul.f32 %v2868, %v2460
    %v2886 = vmul.f32 %v2870, %v2461
    %v2887 = vmul.f32 %v2872, %v2462
    %2893 = vrot.lane.b32.xlu0 %v2878, 64
    %v2894 = vpop.permute.xlu0 %2893
    %2895 = vrot.lane.b32.xlu0 %v2879, 64
    %v2896 = vpop.permute.xlu0 %2895
    %2897 = vrot.lane.b32.xlu0 %v2880, 64
    %v2898 = vpop.permute.xlu0 %2897
    %2899 = vrot.lane.b32.xlu0 %v2881, 64
    %v2900 = vpop.permute.xlu0 %2899
    %2901 = vrot.lane.b32.xlu0 %v2882, 64
    %v2902 = vpop.permute.xlu0 %2901
    %v2908 = vmul.f32 %v2864, %v2894
    %v2909 = vmul.f32 %v2866, %v2896
    %v2910 = vmul.f32 %v2868, %v2898
    %v2911 = vmul.f32 %v2870, %v2900
    %v2912 = vmul.f32 %v2872, %v2902
    %2918 = vrot.lane.b32.xlu0 %v2908, 32
    %v2919 = vpop.permute.xlu0 %2918
    %2920 = vrot.lane.b32.xlu0 %v2909, 32
    %v2921 = vpop.permute.xlu0 %2920
    %2922 = vrot.lane.b32.xlu0 %v2910, 32
    %v2923 = vpop.permute.xlu0 %2922
    %2924 = vrot.lane.b32.xlu0 %v2911, 32
    %v2925 = vpop.permute.xlu0 %2924
    %2926 = vrot.lane.b32.xlu0 %v2912, 32
    %v2927 = vpop.permute.xlu0 %2926
    %v2933 = vadd.f32 %v2883, %v2919
    %v2934 = vadd.f32 %v2884, %v2921
    %v2935 = vadd.f32 %v2885, %v2923
    %v2936 = vadd.f32 %v2886, %v2925
    %v2937 = vadd.f32 %v2887, %v2927
    %v2938 = vtanh.pop %v2933
    %v2939 = vtanh.pop %v2934
    %v2940 = vtanh.pop %v2935
    %v2941 = vtanh.pop %v2936
    %v2942 = vtanh.pop %v2937
    %2948 = vrot.lane.b32.xlu0 %v2938, 64
    %v2949 = vpop.permute.xlu0 %2948
    %2950 = vrot.lane.b32.xlu0 %v2939, 64
    %v2951 = vpop.permute.xlu0 %2950
    %2952 = vrot.lane.b32.xlu0 %v2940, 64
    %v2953 = vpop.permute.xlu0 %2952
    %2954 = vrot.lane.b32.xlu0 %v2941, 64
    %v2955 = vpop.permute.xlu0 %2954
    %2956 = vrot.lane.b32.xlu0 %v2942, 64
    %v2957 = vpop.permute.xlu0 %2956
    %v2963 = vmul.f32 %v2864, %v2949
    %v2964 = vmul.f32 %v2866, %v2951
    %v2965 = vmul.f32 %v2868, %v2953
    %v2966 = vmul.f32 %v2870, %v2955
    %v2967 = vmul.f32 %v2872, %v2957
    %v2968 = vpack.c.bf16 %v2964, %v2963
    %v2969 = vpack.c.bf16 %v2966, %v2965
    %v2970 = vpack.c.bf16 %v2967, %v2967
    %v2971 = vpack.c.bf16 %v2773, %v2772
    %v2972 = vpack.c.bf16 %v2775, %v2774
    %v2973 = vpack.c.bf16 %v2776, %v2776
    %2977 = vrot.lane.b32.xlu0 %v2971, 32
    %v2978 = vpop.permute.xlu0 %2977
    %2979 = vrot.lane.b32.xlu0 %v2972, 32
    %v2980 = vpop.permute.xlu0 %2979
    %2981 = vrot.lane.b32.xlu0 %v2973, 32
    %v2982 = vpop.permute.xlu0 %2981
    %v2984 = vsel %vm396, %v2978, 0
    %v2987 = vsel %vm396, %v2980, 0
    %v2990 = vsel %vm396, %v2982, 0
    %2992 = vmatprep.subr.bf16.mxu0 0
    %2993 = vmatpush1.bf16.msra.mxu0 %v597
    %2994 = vmatprep.subr.bf16.mxu0 0
    %2995 = vmatpush1.bf16.msra.mxu0 %v598
    %2996 = vmatprep.subr.bf16.mxu0 0
    %2997 = vmatpush1.bf16.msra.mxu0 0
    %2998 = vmatprep.subr.bf16.mxu0 0
    %2999 = vmatpush1.bf16.msra.mxu0 0
    %3000 = vmatprep.subr.bf16.mxu0 0
    %3001 = vmatpush1.bf16.msra.mxu0 0
    %3002 = vmatprep.subr.bf16.mxu0 0
    %3003 = vmatpush1.bf16.msra.mxu0 0
    %3004 = vmatprep.subr.bf16.mxu0 0
    %3005 = vmatpush1.bf16.msra.mxu0 0
    %3006 = vmatprep.subr.bf16.mxu0 0
    %3007 = vmatpush1.bf16.msra.mxu0 0
    %3008 = vmatprep.subr.bf16.mxu0 0
    %3009 = vmatpush1.bf16.msra.mxu0 0
    %3010 = vmatprep.subr.bf16.mxu0 0
    %3011 = vmatpush1.bf16.msra.mxu0 0
    %3012 = vmatprep.subr.bf16.mxu0 0
    %3013 = vmatpush1.bf16.msra.mxu0 0
    %3014 = vmatprep.subr.bf16.mxu0 0
    %3015 = vmatpush1.bf16.msra.mxu0 0
    %3016 = vmatprep.subr.bf16.mxu0 0
    %3017 = vmatpush1.bf16.msra.mxu0 0
    %3018 = vmatprep.subr.bf16.mxu0 0
    %3019 = vmatpush1.bf16.msra.mxu0 0
    %3020 = vmatprep.subr.bf16.mxu0 0
    %3021 = vmatpush1.bf16.msra.mxu0 0
    %3022 = vmatprep.subr.bf16.mxu0 0
    %3023 = vmatpush1.bf16.msra.mxu0 0
    %3024 = vmatprep.mubr.bf16.mxu0 0
    %3025 = vmatmul.mubr.bf16.gmra.mrb[0].mxu0 %v2984
    %v3026 = vpop.f32.mrb[0].mxu0
    %v3027 = vadd.f32 0.0, %v3026
    %v3028 = vpop.f32.mrb[0].mxu0
    %v3029 = vpop.f32.mrb[0].mxu0
    %v3030 = vadd.f32 0.0, %v3029
    %v3031 = vpop.f32.mrb[0].mxu0
    %3032 = vmatprep.mubr.bf16.mxu0 0
    %3033 = vmatmul.mubr.bf16.gmra.mrb[0].mxu0 %v2987
    %v3034 = vpop.f32.mrb[0].mxu0
    %v3035 = vadd.f32 0.0, %v3034
    %v3036 = vpop.f32.mrb[0].mxu0
    %v3037 = vpop.f32.mrb[0].mxu0
    %v3038 = vadd.f32 0.0, %v3037
    %v3039 = vpop.f32.mrb[0].mxu0
    %3040 = vmatprep.mubr.bf16.mxu0 0
    %3041 = vmatmul.mubr.bf16.gmra.mrb[0].mxu0 %v2990
    %v3042 = vpop.f32.mrb[0].mxu0
    %v3043 = vadd.f32 0.0, %v3042
    %v3044 = vpop.f32.mrb[0].mxu0
    %v3045 = vpop.f32.mrb[0].mxu0
    %v3046 = vpop.f32.mrb[0].mxu0
    %3047 = vdwg.mxu0
    %3051 = vrot.lane.b32.xlu0 %v2968, 32
    %v3052 = vpop.permute.xlu0 %3051
    %3053 = vrot.lane.b32.xlu0 %v2969, 32
    %v3054 = vpop.permute.xlu0 %3053
    %3055 = vrot.lane.b32.xlu0 %v2970, 32
    %v3056 = vpop.permute.xlu0 %3055
    %v3058 = vsel %vm396, %v3052, 0
    %v3061 = vsel %vm396, %v3054, 0
    %v3064 = vsel %vm396, %v3056, 0
    %3066 = vmatprep.subr.bf16.mxu0 0
    %3067 = vmatpush1.bf16.msra.mxu0 %v674
    %3068 = vmatprep.subr.bf16.mxu0 0
    %3069 = vmatpush1.bf16.msra.mxu0 %v675
    %3070 = vmatprep.subr.bf16.mxu0 0
    %3071 = vmatpush1.bf16.msra.mxu0 0
    %3072 = vmatprep.subr.bf16.mxu0 0
    %3073 = vmatpush1.bf16.msra.mxu0 0
    %3074 = vmatprep.subr.bf16.mxu0 0
    %3075 = vmatpush1.bf16.msra.mxu0 0
    %3076 = vmatprep.subr.bf16.mxu0 0
    %3077 = vmatpush1.bf16.msra.mxu0 0
    %3078 = vmatprep.subr.bf16.mxu0 0
    %3079 = vmatpush1.bf16.msra.mxu0 0
    %3080 = vmatprep.subr.bf16.mxu0 0
    %3081 = vmatpush1.bf16.msra.mxu0 0
    %3082 = vmatprep.subr.bf16.mxu0 0
    %3083 = vmatpush1.bf16.msra.mxu0 0
    %3084 = vmatprep.subr.bf16.mxu0 0
    %3085 = vmatpush1.bf16.msra.mxu0 0
    %3086 = vmatprep.subr.bf16.mxu0 0
    %3087 = vmatpush1.bf16.msra.mxu0 0
    %3088 = vmatprep.subr.bf16.mxu0 0
    %3089 = vmatpush1.bf16.msra.mxu0 0
    %3090 = vmatprep.subr.bf16.mxu0 0
    %3091 = vmatpush1.bf16.msra.mxu0 0
    %3092 = vmatprep.subr.bf16.mxu0 0
    %3093 = vmatpush1.bf16.msra.mxu0 0
    %3094 = vmatprep.subr.bf16.mxu0 0
    %3095 = vmatpush1.bf16.msra.mxu0 0
    %3096 = vmatprep.subr.bf16.mxu0 0
    %3097 = vmatpush1.bf16.msra.mxu0 0
    %3098 = vmatprep.mubr.bf16.mxu0 0
    %3099 = vmatmul.mubr.bf16.gmra.mrb[0].mxu0 %v3058
    %v3100 = vpop.f32.mrb[0].mxu0
    %v3101 = vadd.f32 %v3027, %v3100
    %v3102 = vpop.f32.mrb[0].mxu0
    %v3103 = vpop.f32.mrb[0].mxu0
    %v3104 = vadd.f32 %v3030, %v3103
    %v3105 = vpop.f32.mrb[0].mxu0
    %3106 = vmatprep.mubr.bf16.mxu0 0
    %3107 = vmatmul.mubr.bf16.gmra.mrb[0].mxu0 %v3061
    %v3108 = vpop.f32.mrb[0].mxu0
    %v3109 = vadd.f32 %v3035, %v3108
    %v3110 = vpop.f32.mrb[0].mxu0
    %v3111 = vpop.f32.mrb[0].mxu0
    %v3112 = vadd.f32 %v3038, %v3111
    %v3113 = vpop.f32.mrb[0].mxu0
    %3114 = vmatprep.mubr.bf16.mxu0 0
    %3115 = vmatmul.mubr.bf16.gmra.mrb[0].mxu0 %v3064
    %v3116 = vpop.f32.mrb[0].mxu0
    %v3117 = vadd.f32 %v3043, %v3116
    %v3118 = vpop.f32.mrb[0].mxu0
    %v3119 = vpop.f32.mrb[0].mxu0
    %v3120 = vpop.f32.mrb[0].mxu0
    %3121 = vdwg.mxu0
    %v3122 = vadd.f32 %v3101, %v746
    %v3123 = vadd.f32 %v3104, %v746
    %v3124 = vadd.f32 %v3109, %v746
    %v3125 = vadd.f32 %v3112, %v746
    %v3126 = vadd.f32 %v3117, %v746
    %v3127 = vxor.u32 %v3122, 2147483648
    %v3128 = vxor.u32 %v3123, 2147483648
    %v3129 = vxor.u32 %v3124, 2147483648
    %v3130 = vxor.u32 %v3125, 2147483648
    %v3131 = vxor.u32 %v3126, 2147483648
    %v3132 = vmul.f32 %v3127, 1.442695
    %v3133 = vpow.pop %v3132
    %v3134 = vmul.f32 %v3128, 1.442695
    %v3135 = vpow.pop %v3134
    %v3136 = vmul.f32 %v3129, 1.442695
    %v3137 = vpow.pop %v3136
    %v3138 = vmul.f32 %v3130, 1.442695
    %v3139 = vpow.pop %v3138
    %v3140 = vmul.f32 %v3131, 1.442695
    %v3141 = vpow.pop %v3140
    %v3142 = vadd.f32 %v3133, 1.0
    %v3143 = vadd.f32 %v3135, 1.0
    %v3144 = vadd.f32 %v3137, 1.0
    %v3145 = vadd.f32 %v3139, 1.0
    %v3146 = vadd.f32 %v3141, 1.0
    %v3147 = vrcp.pop %v3142
    %v3148 = vmul.f32 1.0, %v3147
    %v3149 = vrcp.pop %v3143
    %v3150 = vmul.f32 1.0, %v3149
    %v3151 = vrcp.pop %v3144
    %v3152 = vmul.f32 1.0, %v3151
    %v3153 = vrcp.pop %v3145
    %v3154 = vmul.f32 1.0, %v3153
    %v3155 = vrcp.pop %v3146
    %v3156 = vmul.f32 1.0, %v3155
    %v3157 = vmul.f32 %v3148, 2.0
    %v3158 = vmul.f32 %v3150, 2.0
    %v3159 = vmul.f32 %v3152, 2.0
    %v3160 = vmul.f32 %v3154, 2.0
    %v3161 = vmul.f32 %v3156, 2.0
    %v3162 = vsub.f32 %v3157, 1.0
    %v3163 = vsub.f32 %v3158, 1.0
    %v3164 = vsub.f32 %v3159, 1.0
    %v3165 = vsub.f32 %v3160, 1.0
    %v3166 = vsub.f32 %v3161, 1.0
    %v3167 = vmul.f32 %v3148, %v2742
    %v3168 = vmul.f32 %v3150, %v2743
    %v3169 = vmul.f32 %v3152, %v2744
    %v3170 = vmul.f32 %v3154, %v2745
    %v3171 = vmul.f32 %v3156, %v2746
    %3177 = vrot.lane.b32.xlu0 %v3162, 64
    %v3178 = vpop.permute.xlu0 %3177
    %3179 = vrot.lane.b32.xlu0 %v3163, 64
    %v3180 = vpop.permute.xlu0 %3179
    %3181 = vrot.lane.b32.xlu0 %v3164, 64
    %v3182 = vpop.permute.xlu0 %3181
    %3183 = vrot.lane.b32.xlu0 %v3165, 64
    %v3184 = vpop.permute.xlu0 %3183
    %3185 = vrot.lane.b32.xlu0 %v3166, 64
    %v3186 = vpop.permute.xlu0 %3185
    %v3192 = vmul.f32 %v3148, %v3178
    %v3193 = vmul.f32 %v3150, %v3180
    %v3194 = vmul.f32 %v3152, %v3182
    %v3195 = vmul.f32 %v3154, %v3184
    %v3196 = vmul.f32 %v3156, %v3186
    %3202 = vrot.lane.b32.xlu0 %v3192, 32
    %v3203 = vpop.permute.xlu0 %3202
    %3204 = vrot.lane.b32.xlu0 %v3193, 32
    %v3205 = vpop.permute.xlu0 %3204
    %3206 = vrot.lane.b32.xlu0 %v3194, 32
    %v3207 = vpop.permute.xlu0 %3206
    %3208 = vrot.lane.b32.xlu0 %v3195, 32
    %v3209 = vpop.permute.xlu0 %3208
    %3210 = vrot.lane.b32.xlu0 %v3196, 32
    %v3211 = vpop.permute.xlu0 %3210
    %v3217 = vadd.f32 %v3167, %v3203
    %v3218 = vadd.f32 %v3168, %v3205
    %v3219 = vadd.f32 %v3169, %v3207
    %v3220 = vadd.f32 %v3170, %v3209
    %v3221 = vadd.f32 %v3171, %v3211
    %v3222 = vtanh.pop %v3217
    %v3223 = vtanh.pop %v3218
    %v3224 = vtanh.pop %v3219
    %v3225 = vtanh.pop %v3220
    %v3226 = vtanh.pop %v3221
    %3232 = vrot.lane.b32.xlu0 %v3222, 64
    %v3233 = vpop.permute.xlu0 %3232
    %3234 = vrot.lane.b32.xlu0 %v3223, 64
    %v3235 = vpop.permute.xlu0 %3234
    %3236 = vrot.lane.b32.xlu0 %v3224, 64
    %v3237 = vpop.permute.xlu0 %3236
    %3238 = vrot.lane.b32.xlu0 %v3225, 64
    %v3239 = vpop.permute.xlu0 %3238
    %3240 = vrot.lane.b32.xlu0 %v3226, 64
    %v3241 = vpop.permute.xlu0 %3240
    %v3247 = vmul.f32 %v3148, %v3233
    %v3248 = vmul.f32 %v3150, %v3235
    %v3249 = vmul.f32 %v3152, %v3237
    %v3250 = vmul.f32 %v3154, %v3239
    %v3251 = vmul.f32 %v3156, %v3241
    %v3252 = vld [vmem:[%s2 + $0x38] sm:$0xf]
    %v3253 = vld [vmem:[%s2 + $0x3c] sm:$0xf]
    %v3254 = vld [vmem:[%s2 + $0x40] sm:$0xf]
    %v3255 = vld [vmem:[%s2 + $0x44] sm:$0xf]
    %v3256 = vld [vmem:[%s2 + $0x48] sm:$0xf]
    %v3257 = vld [vmem:[%s2 + $0x4c] sm:$0xf]
    %v3258 = vld [vmem:[%s2 + $0x50] sm:$0xf]
    %v3259 = vld [vmem:[%s2 + $0x54] sm:$0xf]
    %v3260 = vpack.c.bf16 %v3248, %v3247
    %v3261 = vpack.c.bf16 %v3250, %v3249
    %v3262 = vpack.c.bf16 %v3251, %v3251
    %3266 = vrot.lane.b32.xlu0 %v3260, 32
    %v3267 = vpop.permute.xlu0 %3266
    %3268 = vrot.lane.b32.xlu0 %v3261, 32
    %v3269 = vpop.permute.xlu0 %3268
    %3270 = vrot.lane.b32.xlu0 %v3262, 32
    %v3271 = vpop.permute.xlu0 %3270
    %v3276 = vunpack.c.l.b16 %v3256
    %v3277 = vunpack.c.l.b16 %v3257
    %v3278 = vunpack.c.l.b16 %v3258
    %v3279 = vunpack.c.l.b16 %v3259
    %v3280 = vpack.c.b16 %v3277, %v3276
    %v3281 = vpack.c.b16 %v3279, %v3278
    %v3285 = vsel %vm396, %v3267, 0
    %v3288 = vsel %vm396, %v3269, 0
    %v3291 = vsel %vm396, %v3271, 0
    %3293 = vmatprep.subr.bf16.mxu0 0
    %3294 = vmatpush1.bf16.msra.mxu0 %v3280
    %3295 = vmatprep.subr.bf16.mxu0 0
    %3296 = vmatpush1.bf16.msra.mxu0 %v3281
    %3297 = vmatprep.subr.bf16.mxu0 0
    %3298 = vmatpush1.bf16.msra.mxu0 0
    %3299 = vmatprep.subr.bf16.mxu0 0
    %3300 = vmatpush1.bf16.msra.mxu0 0
    %3301 = vmatprep.subr.bf16.mxu0 0
    %3302 = vmatpush1.bf16.msra.mxu0 0
    %3303 = vmatprep.subr.bf16.mxu0 0
    %3304 = vmatpush1.bf16.msra.mxu0 0
    %3305 = vmatprep.subr.bf16.mxu0 0
    %3306 = vmatpush1.bf16.msra.mxu0 0
    %3307 = vmatprep.subr.bf16.mxu0 0
    %3308 = vmatpush1.bf16.msra.mxu0 0
    %3309 = vmatprep.subr.bf16.mxu0 0
    %3310 = vmatpush1.bf16.msra.mxu0 0
    %3311 = vmatprep.subr.bf16.mxu0 0
    %3312 = vmatpush1.bf16.msra.mxu0 0
    %3313 = vmatprep.subr.bf16.mxu0 0
    %3314 = vmatpush1.bf16.msra.mxu0 0
    %3315 = vmatprep.subr.bf16.mxu0 0
    %3316 = vmatpush1.bf16.msra.mxu0 0
    %3317 = vmatprep.subr.bf16.mxu0 0
    %3318 = vmatpush1.bf16.msra.mxu0 0
    %3319 = vmatprep.subr.bf16.mxu0 0
    %3320 = vmatpush1.bf16.msra.mxu0 0
    %3321 = vmatprep.subr.bf16.mxu0 0
    %3322 = vmatpush1.bf16.msra.mxu0 0
    %3323 = vmatprep.subr.bf16.mxu0 0
    %3324 = vmatpush1.bf16.msra.mxu0 0
    %3325 = vmatprep.mubr.bf16.mxu0 0
    %3326 = vmatmul.mubr.bf16.gmra.mrb[0].mxu0 %v3285
    %v3327 = vpop.f32.mrb[0].mxu0
    %v3328 = vadd.f32 0.0, %v3327
    %v3329 = vpop.f32.mrb[0].mxu0
    %v3330 = vpop.f32.mrb[0].mxu0
    %v3331 = vadd.f32 0.0, %v3330
    %v3332 = vpop.f32.mrb[0].mxu0
    %3333 = vmatprep.mubr.bf16.mxu0 0
    %3334 = vmatmul.mubr.bf16.gmra.mrb[0].mxu0 %v3288
    %v3335 = vpop.f32.mrb[0].mxu0
    %v3336 = vadd.f32 0.0, %v3335
    %v3337 = vpop.f32.mrb[0].mxu0
    %v3338 = vpop.f32.mrb[0].mxu0
    %v3339 = vadd.f32 0.0, %v3338
    %v3340 = vpop.f32.mrb[0].mxu0
    %3341 = vmatprep.mubr.bf16.mxu0 0
    %3342 = vmatmul.mubr.bf16.gmra.mrb[0].mxu0 %v3291
    %v3343 = vpop.f32.mrb[0].mxu0
    %v3344 = vadd.f32 0.0, %v3343
    %v3345 = vpop.f32.mrb[0].mxu0
    %v3346 = vpop.f32.mrb[0].mxu0
    %v3347 = vpop.f32.mrb[0].mxu0
    %3348 = vdwg.mxu0
    %v3353 = vunpack.c.l.b16 %v3252
    %v3354 = vunpack.c.l.b16 %v3253
    %v3355 = vunpack.c.l.b16 %v3254
    %v3356 = vunpack.c.l.b16 %v3255
    %v3357 = vpack.c.b16 %v3354, %v3353
    %v3358 = vpack.c.b16 %v3356, %v3355
    %3361 = vmatprep.subr.bf16.mxu0 0
    %3362 = vmatpush1.bf16.msra.mxu0 %v3357
    %3363 = vmatprep.subr.bf16.mxu0 0
    %3364 = vmatpush1.bf16.msra.mxu0 %v3358
    %3365 = vmatprep.subr.bf16.mxu0 0
    %3366 = vmatpush1.bf16.msra.mxu0 0
    %3367 = vmatprep.subr.bf16.mxu0 0
    %3368 = vmatpush1.bf16.msra.mxu0 0
    %3369 = vmatprep.subr.bf16.mxu0 0
    %3370 = vmatpush1.bf16.msra.mxu0 0
    %3371 = vmatprep.subr.bf16.mxu0 0
    %3372 = vmatpush1.bf16.msra.mxu0 0
    %3373 = vmatprep.subr.bf16.mxu0 0
    %3374 = vmatpush1.bf16.msra.mxu0 0
    %3375 = vmatprep.subr.bf16.mxu0 0
    %3376 = vmatpush1.bf16.msra.mxu0 0
    %3377 = vmatprep.subr.bf16.mxu0 0
    %3378 = vmatpush1.bf16.msra.mxu0 0
    %3379 = vmatprep.subr.bf16.mxu0 0
    %3380 = vmatpush1.bf16.msra.mxu0 0
    %3381 = vmatprep.subr.bf16.mxu0 0
    %3382 = vmatpush1.bf16.msra.mxu0 0
    %3383 = vmatprep.subr.bf16.mxu0 0
    %3384 = vmatpush1.bf16.msra.mxu0 0
    %3385 = vmatprep.subr.bf16.mxu0 0
    %3386 = vmatpush1.bf16.msra.mxu0 0
    %3387 = vmatprep.subr.bf16.mxu0 0
    %3388 = vmatpush1.bf16.msra.mxu0 0
    %3389 = vmatprep.subr.bf16.mxu0 0
    %3390 = vmatpush1.bf16.msra.mxu0 0
    %3391 = vmatprep.subr.bf16.mxu0 0
    %3392 = vmatpush1.bf16.msra.mxu0 0
    %3393 = vmatprep.mubr.bf16.mxu0 0
    %3394 = vmatmul.mubr.bf16.gmra.mrb[0].mxu0 %v3058
    %v3395 = vpop.f32.mrb[0].mxu0
    %v3396 = vadd.f32 %v3328, %v3395
    %v3397 = vpop.f32.mrb[0].mxu0
    %v3398 = vpop.f32.mrb[0].mxu0
    %v3399 = vadd.f32 %v3331, %v3398
    %v3400 = vpop.f32.mrb[0].mxu0
    %3401 = vmatprep.mubr.bf16.mxu0 0
    %3402 = vmatmul.mubr.bf16.gmra.mrb[0].mxu0 %v3061
    %v3403 = vpop.f32.mrb[0].mxu0
    %v3404 = vadd.f32 %v3336, %v3403
    %v3405 = vpop.f32.mrb[0].mxu0
    %v3406 = vpop.f32.mrb[0].mxu0
    %v3407 = vadd.f32 %v3339, %v3406
    %v3408 = vpop.f32.mrb[0].mxu0
    %3409 = vmatprep.mubr.bf16.mxu0 0
    %3410 = vmatmul.mubr.bf16.gmra.mrb[0].mxu0 %v3064
    %v3411 = vpop.f32.mrb[0].mxu0
    %v3412 = vadd.f32 %v3344, %v3411
    %v3413 = vpop.f32.mrb[0].mxu0
    %v3414 = vpop.f32.mrb[0].mxu0
    %v3415 = vpop.f32.mrb[0].mxu0
    %3416 = vdwg.mxu0
    %v3417 = vld [vmem:[%s2 + $0x58] sm:$0xf]
    %v3418 = vld [vmem:[%s2 + $0x5c] sm:$0xf]
    %v3419 = vld [vmem:[%s2 + $0x60] sm:$0xf]
    %v3420 = vld [vmem:[%s2 + $0x64] sm:$0xf]
    %v3421 = vpack.c.bf16 %v2934, %v2933
    %v3422 = vpack.c.bf16 %v2936, %v2935
    %v3423 = vpack.c.bf16 %v2937, %v2937
    %3427 = vrot.lane.b32.xlu0 %v3421, 96
    %v3428 = vpop.permute.xlu0 %3427
    %3429 = vrot.lane.b32.xlu0 %v3422, 96
    %v3430 = vpop.permute.xlu0 %3429
    %3431 = vrot.lane.b32.xlu0 %v3423, 96
    %v3432 = vpop.permute.xlu0 %3431
    %v3437 = vunpack.c.l.b16 %v3417
    %v3438 = vunpack.c.l.b16 %v3418
    %v3439 = vunpack.c.l.b16 %v3419
    %v3440 = vunpack.c.l.b16 %v3420
    %v3441 = vpack.c.b16 %v3438, %v3437
    %v3442 = vpack.c.b16 %v3440, %v3439
    %v3446 = vsel %vm396, %v3428, 0
    %v3449 = vsel %vm396, %v3430, 0
    %v3452 = vsel %vm396, %v3432, 0
    %3454 = vmatprep.subr.bf16.mxu0 0
    %3455 = vmatpush1.bf16.msra.mxu0 %v3441
    %3456 = vmatprep.subr.bf16.mxu0 0
    %3457 = vmatpush1.bf16.msra.mxu0 %v3442
    %3458 = vmatprep.subr.bf16.mxu0 0
    %3459 = vmatpush1.bf16.msra.mxu0 0
    %3460 = vmatprep.subr.bf16.mxu0 0
    %3461 = vmatpush1.bf16.msra.mxu0 0
    %3462 = vmatprep.subr.bf16.mxu0 0
    %3463 = vmatpush1.bf16.msra.mxu0 0
    %3464 = vmatprep.subr.bf16.mxu0 0
    %3465 = vmatpush1.bf16.msra.mxu0 0
    %3466 = vmatprep.subr.bf16.mxu0 0
    %3467 = vmatpush1.bf16.msra.mxu0 0
    %3468 = vmatprep.subr.bf16.mxu0 0
    %3469 = vmatpush1.bf16.msra.mxu0 0
    %3470 = vmatprep.subr.bf16.mxu0 0
    %3471 = vmatpush1.bf16.msra.mxu0 0
    %3472 = vmatprep.subr.bf16.mxu0 0
    %3473 = vmatpush1.bf16.msra.mxu0 0
    %3474 = vmatprep.subr.bf16.mxu0 0
    %3475 = vmatpush1.bf16.msra.mxu0 0
    %3476 = vmatprep.subr.bf16.mxu0 0
    %3477 = vmatpush1.bf16.msra.mxu0 0
    %3478 = vmatprep.subr.bf16.mxu0 0
    %3479 = vmatpush1.bf16.msra.mxu0 0
    %3480 = vmatprep.subr.bf16.mxu0 0
    %3481 = vmatpush1.bf16.msra.mxu0 0
    %3482 = vmatprep.subr.bf16.mxu0 0
    %3483 = vmatpush1.bf16.msra.mxu0 0
    %3484 = vmatprep.subr.bf16.mxu0 0
    %3485 = vmatpush1.bf16.msra.mxu0 0
    %3486 = vmatprep.mubr.bf16.mxu0 0
    %3487 = vmatmul.mubr.bf16.gmra.mrb[0].mxu0 %v3446
    %v3488 = vpop.f32.mrb[0].mxu0
    %v3489 = vadd.f32 0.0, %v3488
    %v3490 = vpop.f32.mrb[0].mxu0
    %v3491 = vpop.f32.mrb[0].mxu0
    %v3492 = vadd.f32 0.0, %v3491
    %v3493 = vpop.f32.mrb[0].mxu0
    %3494 = vmatprep.mubr.bf16.mxu0 0
    %3495 = vmatmul.mubr.bf16.gmra.mrb[0].mxu0 %v3449
    %v3496 = vpop.f32.mrb[0].mxu0
    %v3497 = vadd.f32 0.0, %v3496
    %v3498 = vpop.f32.mrb[0].mxu0
    %v3499 = vpop.f32.mrb[0].mxu0
    %v3500 = vadd.f32 0.0, %v3499
    %v3501 = vpop.f32.mrb[0].mxu0
    %3502 = vmatprep.mubr.bf16.mxu0 0
    %3503 = vmatmul.mubr.bf16.gmra.mrb[0].mxu0 %v3452
    %v3504 = vpop.f32.mrb[0].mxu0
    %v3505 = vadd.f32 0.0, %v3504
    %v3506 = vpop.f32.mrb[0].mxu0
    %v3507 = vpop.f32.mrb[0].mxu0
    %v3508 = vpop.f32.mrb[0].mxu0
    %3509 = vdwg.mxu0
    %v3510 = vadd.f32 %v3396, %v3489
    %v3511 = vadd.f32 %v3399, %v3492
    %v3512 = vadd.f32 %v3404, %v3497
    %v3513 = vadd.f32 %v3407, %v3500
    %v3514 = vadd.f32 %v3412, %v3505
    %v3515 = vld [vmem:[%s2 + $0x68] sm:$0xf]
    %v3516 = vld [vmem:[%s2 + $0x6c] sm:$0xf]
    %v3517 = vld [vmem:[%s2 + $0x70] sm:$0xf]
    %v3518 = vld [vmem:[%s2 + $0x74] sm:$0xf]
    %v3519 = vpack.c.bf16 %v3218, %v3217
    %v3520 = vpack.c.bf16 %v3220, %v3219
    %v3521 = vpack.c.bf16 %v3221, %v3221
    %3525 = vrot.lane.b32.xlu0 %v3519, 96
    %v3526 = vpop.permute.xlu0 %3525
    %3527 = vrot.lane.b32.xlu0 %v3520, 96
    %v3528 = vpop.permute.xlu0 %3527
    %3529 = vrot.lane.b32.xlu0 %v3521, 96
    %v3530 = vpop.permute.xlu0 %3529
    %v3535 = vunpack.c.l.b16 %v3515
    %v3536 = vunpack.c.l.b16 %v3516
    %v3537 = vunpack.c.l.b16 %v3517
    %v3538 = vunpack.c.l.b16 %v3518
    %v3539 = vpack.c.b16 %v3536, %v3535
    %v3540 = vpack.c.b16 %v3538, %v3537
    %v3544 = vsel %vm396, %v3526, 0
    %v3547 = vsel %vm396, %v3528, 0
    %v3550 = vsel %vm396, %v3530, 0
    %3552 = vmatprep.subr.bf16.mxu0 0
    %3553 = vmatpush1.bf16.msra.mxu0 %v3539
    %3554 = vmatprep.subr.bf16.mxu0 0
    %3555 = vmatpush1.bf16.msra.mxu0 %v3540
    %3556 = vmatprep.subr.bf16.mxu0 0
    %3557 = vmatpush1.bf16.msra.mxu0 0
    %3558 = vmatprep.subr.bf16.mxu0 0
    %3559 = vmatpush1.bf16.msra.mxu0 0
    %3560 = vmatprep.subr.bf16.mxu0 0
    %3561 = vmatpush1.bf16.msra.mxu0 0
    %3562 = vmatprep.subr.bf16.mxu0 0
    %3563 = vmatpush1.bf16.msra.mxu0 0
    %3564 = vmatprep.subr.bf16.mxu0 0
    %3565 = vmatpush1.bf16.msra.mxu0 0
    %3566 = vmatprep.subr.bf16.mxu0 0
    %3567 = vmatpush1.bf16.msra.mxu0 0
    %3568 = vmatprep.subr.bf16.mxu0 0
    %3569 = vmatpush1.bf16.msra.mxu0 0
    %3570 = vmatprep.subr.bf16.mxu0 0
    %3571 = vmatpush1.bf16.msra.mxu0 0
    %3572 = vmatprep.subr.bf16.mxu0 0
    %3573 = vmatpush1.bf16.msra.mxu0 0
    %3574 = vmatprep.subr.bf16.mxu0 0
    %3575 = vmatpush1.bf16.msra.mxu0 0
    %3576 = vmatprep.subr.bf16.mxu0 0
    %3577 = vmatpush1.bf16.msra.mxu0 0
    %3578 = vmatprep.subr.bf16.mxu0 0
    %3579 = vmatpush1.bf16.msra.mxu0 0
    %3580 = vmatprep.subr.bf16.mxu0 0
    %3581 = vmatpush1.bf16.msra.mxu0 0
    %3582 = vmatprep.subr.bf16.mxu0 0
    %3583 = vmatpush1.bf16.msra.mxu0 0
    %3584 = vmatprep.mubr.bf16.mxu0 0
    %3585 = vmatmul.mubr.bf16.gmra.mrb[0].mxu0 %v3544
    %v3586 = vpop.f32.mrb[0].mxu0
    %v3587 = vadd.f32 0.0, %v3586
    %v3588 = vpop.f32.mrb[0].mxu0
    %v3589 = vpop.f32.mrb[0].mxu0
    %v3590 = vadd.f32 0.0, %v3589
    %v3591 = vpop.f32.mrb[0].mxu0
    %3592 = vmatprep.mubr.bf16.mxu0 0
    %3593 = vmatmul.mubr.bf16.gmra.mrb[0].mxu0 %v3547
    %v3594 = vpop.f32.mrb[0].mxu0
    %v3595 = vadd.f32 0.0, %v3594
    %v3596 = vpop.f32.mrb[0].mxu0
    %v3597 = vpop.f32.mrb[0].mxu0
    %v3598 = vadd.f32 0.0, %v3597
    %v3599 = vpop.f32.mrb[0].mxu0
    %3600 = vmatprep.mubr.bf16.mxu0 0
    %3601 = vmatmul.mubr.bf16.gmra.mrb[0].mxu0 %v3550
    %v3602 = vpop.f32.mrb[0].mxu0
    %v3603 = vadd.f32 0.0, %v3602
    %v3604 = vpop.f32.mrb[0].mxu0
    %v3605 = vpop.f32.mrb[0].mxu0
    %v3606 = vpop.f32.mrb[0].mxu0
    %3607 = vdwg.mxu0
    %v3608 = vadd.f32 %v3510, %v3587
    %v3609 = vadd.f32 %v3511, %v3590
    %v3610 = vadd.f32 %v3512, %v3595
    %v3611 = vadd.f32 %v3513, %v3598
    %v3612 = vadd.f32 %v3514, %v3603
    %v3613 = vld [vmem:[%s3 + $0x2] sm:$0x1]
    %v3614 = vlaneseq
    %v3615 = vshrl.u32 %v3614, 7
    %v3616 = vsub.s32 0, %v3615
    %v3617 = vrot.slane %v3613, %v3616
    %v3618 = vadd.f32 %v3608, %v3617
    %v3619 = vadd.f32 %v3609, %v3617
    %v3620 = vadd.f32 %v3610, %v3617
    %v3621 = vadd.f32 %v3611, %v3617
    %v3622 = vadd.f32 %v3612, %v3617
    %v3623 = vmax.f32 %v3618, 0.0
    %v3624 = vmax.f32 %v3619, 0.0
    %v3625 = vmax.f32 %v3620, 0.0
    %v3626 = vmax.f32 %v3621, 0.0
    %v3627 = vmax.f32 %v3622, 0.0
    %v3628 = vld [vmem:[%s3 + $0x3] sm:$0x1]
    %v3629 = vld [vmem:[%s2 + $0x78] sm:$0xf]
    %v3630 = vld [vmem:[%s2 + $0x7c] sm:$0xf]
    %v3631 = vld [vmem:[%s2 + $0x80] sm:$0xf]
    %v3632 = vld [vmem:[%s2 + $0x84] sm:$0xf]
    %v3633 = vpack.c.bf16 %v3624, %v3623
    %v3634 = vpack.c.bf16 %v3626, %v3625
    %v3635 = vpack.c.bf16 %v3627, %v3627
    %v3640 = vunpack.c.l.b16 %v3629
    %v3641 = vunpack.c.l.b16 %v3630
    %v3642 = vunpack.c.l.b16 %v3631
    %v3643 = vunpack.c.l.b16 %v3632
    %v3644 = vpack.c.b16 %v3641, %v3640
    %v3645 = vpack.c.b16 %v3643, %v3642
    %v3649 = vsel %vm396, %v3633, 0
    %v3652 = vsel %vm396, %v3634, 0
    %v3655 = vsel %vm396, %v3635, 0
    %3657 = vmatprep.subr.bf16.mxu0 0
    %3658 = vmatpush1.bf16.msra.mxu0 %v3644
    %3659 = vmatprep.subr.bf16.mxu0 0
    %3660 = vmatpush1.bf16.msra.mxu0 %v3645
    %3661 = vmatprep.subr.bf16.mxu0 0
    %3662 = vmatpush1.bf16.msra.mxu0 0
    %3663 = vmatprep.subr.bf16.mxu0 0
    %3664 = vmatpush1.bf16.msra.mxu0 0
    %3665 = vmatprep.subr.bf16.mxu0 0
    %3666 = vmatpush1.bf16.msra.mxu0 0
    %3667 = vmatprep.subr.bf16.mxu0 0
    %3668 = vmatpush1.bf16.msra.mxu0 0
    %3669 = vmatprep.subr.bf16.mxu0 0
    %3670 = vmatpush1.bf16.msra.mxu0 0
    %3671 = vmatprep.subr.bf16.mxu0 0
    %3672 = vmatpush1.bf16.msra.mxu0 0
    %3673 = vmatprep.subr.bf16.mxu0 0
    %3674 = vmatpush1.bf16.msra.mxu0 0
    %3675 = vmatprep.subr.bf16.mxu0 0
    %3676 = vmatpush1.bf16.msra.mxu0 0
    %3677 = vmatprep.subr.bf16.mxu0 0
    %3678 = vmatpush1.bf16.msra.mxu0 0
    %3679 = vmatprep.subr.bf16.mxu0 0
    %3680 = vmatpush1.bf16.msra.mxu0 0
    %3681 = vmatprep.subr.bf16.mxu0 0
    %3682 = vmatpush1.bf16.msra.mxu0 0
    %3683 = vmatprep.subr.bf16.mxu0 0
    %3684 = vmatpush1.bf16.msra.mxu0 0
    %3685 = vmatprep.subr.bf16.mxu0 0
    %3686 = vmatpush1.bf16.msra.mxu0 0
    %3687 = vmatprep.subr.bf16.mxu0 0
    %3688 = vmatpush1.bf16.msra.mxu0 0
    %3689 = vmatprep.mubr.bf16.mxu0 0
    %3690 = vmatmul.mubr.bf16.gmra.mrb[0].mxu0 %v3649
    %v3691 = vpop.f32.mrb[0].mxu0
    %v3692 = vadd.f32 0.0, %v3691
    %v3693 = vpop.f32.mrb[0].mxu0
    %v3694 = vpop.f32.mrb[0].mxu0
    %v3695 = vadd.f32 0.0, %v3694
    %v3696 = vpop.f32.mrb[0].mxu0
    %3697 = vmatprep.mubr.bf16.mxu0 0
    %3698 = vmatmul.mubr.bf16.gmra.mrb[0].mxu0 %v3652
    %v3699 = vpop.f32.mrb[0].mxu0
    %v3700 = vadd.f32 0.0, %v3699
    %v3701 = vpop.f32.mrb[0].mxu0
    %v3702 = vpop.f32.mrb[0].mxu0
    %v3703 = vadd.f32 0.0, %v3702
    %v3704 = vpop.f32.mrb[0].mxu0
    %3705 = vmatprep.mubr.bf16.mxu0 0
    %3706 = vmatmul.mubr.bf16.gmra.mrb[0].mxu0 %v3655
    %v3707 = vpop.f32.mrb[0].mxu0
    %v3708 = vadd.f32 0.0, %v3707
    %v3709 = vpop.f32.mrb[0].mxu0
    %v3710 = vpop.f32.mrb[0].mxu0
    %v3711 = vpop.f32.mrb[0].mxu0
    %3712 = vdwg.mxu0
    %v3713 = vld [vmem:[%s2 + $0x88] sm:$0xf]
    %v3714 = vld [vmem:[%s2 + $0x8c] sm:$0xf]
    %v3715 = vld [vmem:[%s2 + $0x90] sm:$0xf]
    %v3716 = vpack.c.bf16 %v3695, %v3692
    %v3717 = vpack.c.bf16 %v3703, %v3700
    %v3718 = vpack.c.bf16 %v3708, %v3708
    %v3722 = vunpack.c.l.b16 %v3713
    %v3723 = vunpack.c.l.b16 %v3714
    %v3724 = vunpack.c.l.b16 %v3715
    %v3725 = vpack.c.b16 %v3723, %v3722
    %v3726 = vpack.c.b16 %v3724, %v3724
    %vm3727 = vcmask 326656
    %v3729 = vsel %vm3727, %v3725, 0
    %v3732 = vsel %vm3727, %v3726, 0
    %vm3734 = vcmask 1043456
    %v3736 = vsel %vm3734, %v3718, 0
    %3738 = vmatprep.subr.bf16.mxu0 0
    %3739 = vmatpush1.bf16.msra.mxu0 %v3716
    %3740 = vmatprep.subr.bf16.mxu0 0
    %3741 = vmatpush1.bf16.msra.mxu0 %v3717
    %3742 = vmatprep.subr.bf16.mxu0 0
    %3743 = vmatpush1.bf16.msra.mxu0 %v3736
    %3744 = vmatprep.subr.bf16.mxu0 0
    %3745 = vmatpush1.bf16.msra.mxu0 0
    %3746 = vmatprep.subr.bf16.mxu0 0
    %3747 = vmatpush1.bf16.msra.mxu0 0
    %3748 = vmatprep.subr.bf16.mxu0 0
    %3749 = vmatpush1.bf16.msra.mxu0 0
    %3750 = vmatprep.subr.bf16.mxu0 0
    %3751 = vmatpush1.bf16.msra.mxu0 0
    %3752 = vmatprep.subr.bf16.mxu0 0
    %3753 = vmatpush1.bf16.msra.mxu0 0
    %3754 = vmatprep.subr.bf16.mxu0 0
    %3755 = vmatpush1.bf16.msra.mxu0 0
    %3756 = vmatprep.subr.bf16.mxu0 0
    %3757 = vmatpush1.bf16.msra.mxu0 0
    %3758 = vmatprep.subr.bf16.mxu0 0
    %3759 = vmatpush1.bf16.msra.mxu0 0
    %3760 = vmatprep.subr.bf16.mxu0 0
    %3761 = vmatpush1.bf16.msra.mxu0 0
    %3762 = vmatprep.subr.bf16.mxu0 0
    %3763 = vmatpush1.bf16.msra.mxu0 0
    %3764 = vmatprep.subr.bf16.mxu0 0
    %3765 = vmatpush1.bf16.msra.mxu0 0
    %3766 = vmatprep.subr.bf16.mxu0 0
    %3767 = vmatpush1.bf16.msra.mxu0 0
    %3768 = vmatprep.subr.bf16.mxu0 0
    %3769 = vmatpush1.bf16.msra.mxu0 0
    %3770 = vmatprep.mubr.bf16.mxu0 0
    %3771 = vmatmul.mubr.bf16.gmra.mrb[0].mxu0 %v3729
    %v3772 = vpop.f32.mrb[0].mxu0
    %v3773 = vadd.f32 0.0, %v3772
    %v3774 = vpop.f32.mrb[0].mxu0
    %v3775 = vpop.f32.mrb[0].mxu0
    %v3776 = vadd.f32 0.0, %v3775
    %v3777 = vpop.f32.mrb[0].mxu0
    %3778 = vmatprep.mubr.bf16.mxu0 0
    %3779 = vmatmul.mubr.bf16.gmra.mrb[0].mxu0 %v3732
    %v3780 = vpop.f32.mrb[0].mxu0
    %v3781 = vadd.f32 0.0, %v3780
    %v3782 = vpop.f32.mrb[0].mxu0
    %v3783 = vpop.f32.mrb[0].mxu0
    %v3784 = vpop.f32.mrb[0].mxu0
    %3785 = vdwg.mxu0
    %v3786 = vlaneseq
    %v3787 = vshrl.u32 %v3786, 7
    %v3788 = vsub.s32 0, %v3787
    %v3789 = vrot.slane %v3628, %v3788
    %v3790 = vadd.f32 %v3789, %v3773
    %v3791 = vadd.f32 %v3789, %v3776
    %v3792 = vadd.f32 %v3789, %v3781
    %v3793 = vld [vmem:[%s2 + $0x94] sm:$0xf]
    %v3794 = vld [vmem:[%s2 + $0x98] sm:$0xf]
    %v3795 = vld [vmem:[%s2 + $0x9c] sm:$0xf]
    %v3796 = vld [vmem:[%s2 + $0xa0] sm:$0xf]
    %v3801 = vunpack.c.l.b16 %v3793
    %v3802 = vunpack.c.l.b16 %v3794
    %v3803 = vunpack.c.l.b16 %v3795
    %v3804 = vunpack.c.l.b16 %v3796
    %v3805 = vpack.c.b16 %v3802, %v3801
    %v3806 = vpack.c.b16 %v3804, %v3803
    %3809 = vmatprep.subr.bf16.mxu0 0
    %3810 = vmatpush1.bf16.msra.mxu0 %v3805
    %3811 = vmatprep.subr.bf16.mxu0 0
    %3812 = vmatpush1.bf16.msra.mxu0 %v3806
    %3813 = vmatprep.subr.bf16.mxu0 0
    %3814 = vmatpush1.bf16.msra.mxu0 0
    %3815 = vmatprep.subr.bf16.mxu0 0
    %3816 = vmatpush1.bf16.msra.mxu0 0
    %3817 = vmatprep.subr.bf16.mxu0 0
    %3818 = vmatpush1.bf16.msra.mxu0 0
    %3819 = vmatprep.subr.bf16.mxu0 0
    %3820 = vmatpush1.bf16.msra.mxu0 0
    %3821 = vmatprep.subr.bf16.mxu0 0
    %3822 = vmatpush1.bf16.msra.mxu0 0
    %3823 = vmatprep.subr.bf16.mxu0 0
    %3824 = vmatpush1.bf16.msra.mxu0 0
    %3825 = vmatprep.subr.bf16.mxu0 0
    %3826 = vmatpush1.bf16.msra.mxu0 0
    %3827 = vmatprep.subr.bf16.mxu0 0
    %3828 = vmatpush1.bf16.msra.mxu0 0
    %3829 = vmatprep.subr.bf16.mxu0 0
    %3830 = vmatpush1.bf16.msra.mxu0 0
    %3831 = vmatprep.subr.bf16.mxu0 0
    %3832 = vmatpush1.bf16.msra.mxu0 0
    %3833 = vmatprep.subr.bf16.mxu0 0
    %3834 = vmatpush1.bf16.msra.mxu0 0
    %3835 = vmatprep.subr.bf16.mxu0 0
    %3836 = vmatpush1.bf16.msra.mxu0 0
    %3837 = vmatprep.subr.bf16.mxu0 0
    %3838 = vmatpush1.bf16.msra.mxu0 0
    %3839 = vmatprep.subr.bf16.mxu0 0
    %3840 = vmatpush1.bf16.msra.mxu0 0
    %3841 = vmatprep.mubr.bf16.mxu0 0
    %3842 = vmatmul.mubr.bf16.gmra.mrb[0].mxu0 %v3649
    %v3843 = vpop.f32.mrb[0].mxu0
    %v3844 = vadd.f32 0.0, %v3843
    %v3845 = vpop.f32.mrb[0].mxu0
    %v3846 = vpop.f32.mrb[0].mxu0
    %v3847 = vadd.f32 0.0, %v3846
    %v3848 = vpop.f32.mrb[0].mxu0
    %3849 = vmatprep.mubr.bf16.mxu0 0
    %3850 = vmatmul.mubr.bf16.gmra.mrb[0].mxu0 %v3652
    %v3851 = vpop.f32.mrb[0].mxu0
    %v3852 = vadd.f32 0.0, %v3851
    %v3853 = vpop.f32.mrb[0].mxu0
    %v3854 = vpop.f32.mrb[0].mxu0
    %v3855 = vadd.f32 0.0, %v3854
    %v3856 = vpop.f32.mrb[0].mxu0
    %3857 = vmatprep.mubr.bf16.mxu0 0
    %3858 = vmatmul.mubr.bf16.gmra.mrb[0].mxu0 %v3655
    %v3859 = vpop.f32.mrb[0].mxu0
    %v3860 = vadd.f32 0.0, %v3859
    %v3861 = vpop.f32.mrb[0].mxu0
    %v3862 = vpop.f32.mrb[0].mxu0
    %v3863 = vpop.f32.mrb[0].mxu0
    %3864 = vdwg.mxu0
    %v3865 = vld [vmem:[%s2 + $0xa4] sm:$0xf]
    %v3866 = vld [vmem:[%s2 + $0xa8] sm:$0xf]
    %v3867 = vld [vmem:[%s2 + $0xac] sm:$0xf]
    %v3868 = vpack.c.bf16 %v3847, %v3844
    %v3869 = vpack.c.bf16 %v3855, %v3852
    %v3870 = vpack.c.bf16 %v3860, %v3860
    %v3874 = vunpack.c.l.b16 %v3865
    %v3875 = vunpack.c.l.b16 %v3866
    %v3876 = vunpack.c.l.b16 %v3867
    %v3877 = vpack.c.b16 %v3875, %v3874
    %v3878 = vpack.c.b16 %v3876, %v3876
    %v3880 = vsel %vm3727, %v3877, 0
    %v3883 = vsel %vm3727, %v3878, 0
    %v3886 = vsel %vm3734, %v3870, 0
    %3888 = vmatprep.subr.bf16.mxu0 0
    %3889 = vmatpush1.bf16.msra.mxu0 %v3868
    %3890 = vmatprep.subr.bf16.mxu0 0
    %3891 = vmatpush1.bf16.msra.mxu0 %v3869
    %3892 = vmatprep.subr.bf16.mxu0 0
    %3893 = vmatpush1.bf16.msra.mxu0 %v3886
    %3894 = vmatprep.subr.bf16.mxu0 0
    %3895 = vmatpush1.bf16.msra.mxu0 0
    %3896 = vmatprep.subr.bf16.mxu0 0
    %3897 = vmatpush1.bf16.msra.mxu0 0
    %3898 = vmatprep.subr.bf16.mxu0 0
    %3899 = vmatpush1.bf16.msra.mxu0 0
    %3900 = vmatprep.subr.bf16.mxu0 0
    %3901 = vmatpush1.bf16.msra.mxu0 0
    %3902 = vmatprep.subr.bf16.mxu0 0
    %3903 = vmatpush1.bf16.msra.mxu0 0
    %3904 = vmatprep.subr.bf16.mxu0 0
    %3905 = vmatpush1.bf16.msra.mxu0 0
    %3906 = vmatprep.subr.bf16.mxu0 0
    %3907 = vmatpush1.bf16.msra.mxu0 0
    %3908 = vmatprep.subr.bf16.mxu0 0
    %3909 = vmatpush1.bf16.msra.mxu0 0
    %3910 = vmatprep.subr.bf16.mxu0 0
    %3911 = vmatpush1.bf16.msra.mxu0 0
    %3912 = vmatprep.subr.bf16.mxu0 0
    %3913 = vmatpush1.bf16.msra.mxu0 0
    %3914 = vmatprep.subr.bf16.mxu0 0
    %3915 = vmatpush1.bf16.msra.mxu0 0
    %3916 = vmatprep.subr.bf16.mxu0 0
    %3917 = vmatpush1.bf16.msra.mxu0 0
    %3918 = vmatprep.subr.bf16.mxu0 0
    %3919 = vmatpush1.bf16.msra.mxu0 0
    %3920 = vmatprep.mubr.bf16.mxu0 0
    %3921 = vmatmul.mubr.bf16.gmra.mrb[0].mxu0 %v3880
    %v3922 = vpop.f32.mrb[0].mxu0
    %v3923 = vadd.f32 0.0, %v3922
    %v3924 = vpop.f32.mrb[0].mxu0
    %v3925 = vpop.f32.mrb[0].mxu0
    %v3926 = vadd.f32 0.0, %v3925
    %v3927 = vpop.f32.mrb[0].mxu0
    %3928 = vmatprep.mubr.bf16.mxu0 0
    %3929 = vmatmul.mubr.bf16.gmra.mrb[0].mxu0 %v3883
    %v3930 = vpop.f32.mrb[0].mxu0
    %v3931 = vadd.f32 0.0, %v3930
    %v3932 = vpop.f32.mrb[0].mxu0
    %v3933 = vpop.f32.mrb[0].mxu0
    %v3934 = vpop.f32.mrb[0].mxu0
    %3935 = vdwg.mxu0
    %v3936 = vadd.f32 %v3790, %v3923
    %v3937 = vadd.f32 %v3791, %v3926
    %v3938 = vadd.f32 %v3792, %v3931
    %v3939 = vld [vmem:[%s2 + $0xb0] sm:$0xf]
    %v3940 = vld [vmem:[%s2 + $0xb4] sm:$0xf]
    %v3941 = vld [vmem:[%s2 + $0xb8] sm:$0xf]
    %v3942 = vld [vmem:[%s2 + $0xbc] sm:$0xf]
    %v3947 = vunpack.c.l.b16 %v3939
    %v3948 = vunpack.c.l.b16 %v3940
    %v3949 = vunpack.c.l.b16 %v3941
    %v3950 = vunpack.c.l.b16 %v3942
    %v3951 = vpack.c.b16 %v3948, %v3947
    %v3952 = vpack.c.b16 %v3950, %v3949
    %3955 = vmatprep.subr.bf16.mxu0 0
    %3956 = vmatpush1.bf16.msra.mxu0 %v3951
    %3957 = vmatprep.subr.bf16.mxu0 0
    %3958 = vmatpush1.bf16.msra.mxu0 %v3952
    %3959 = vmatprep.subr.bf16.mxu0 0
    %3960 = vmatpush1.bf16.msra.mxu0 0
    %3961 = vmatprep.subr.bf16.mxu0 0
    %3962 = vmatpush1.bf16.msra.mxu0 0
    %3963 = vmatprep.subr.bf16.mxu0 0
    %3964 = vmatpush1.bf16.msra.mxu0 0
    %3965 = vmatprep.subr.bf16.mxu0 0
    %3966 = vmatpush1.bf16.msra.mxu0 0
    %3967 = vmatprep.subr.bf16.mxu0 0
    %3968 = vmatpush1.bf16.msra.mxu0 0
    %3969 = vmatprep.subr.bf16.mxu0 0
    %3970 = vmatpush1.bf16.msra.mxu0 0
    %3971 = vmatprep.subr.bf16.mxu0 0
    %3972 = vmatpush1.bf16.msra.mxu0 0
    %3973 = vmatprep.subr.bf16.mxu0 0
    %3974 = vmatpush1.bf16.msra.mxu0 0
    %3975 = vmatprep.subr.bf16.mxu0 0
    %3976 = vmatpush1.bf16.msra.mxu0 0
    %3977 = vmatprep.subr.bf16.mxu0 0
    %3978 = vmatpush1.bf16.msra.mxu0 0
    %3979 = vmatprep.subr.bf16.mxu0 0
    %3980 = vmatpush1.bf16.msra.mxu0 0
    %3981 = vmatprep.subr.bf16.mxu0 0
    %3982 = vmatpush1.bf16.msra.mxu0 0
    %3983 = vmatprep.subr.bf16.mxu0 0
    %3984 = vmatpush1.bf16.msra.mxu0 0
    %3985 = vmatprep.subr.bf16.mxu0 0
    %3986 = vmatpush1.bf16.msra.mxu0 0
    %3987 = vmatprep.mubr.bf16.mxu0 0
    %3988 = vmatmul.mubr.bf16.gmra.mrb[0].mxu0 %v3649
    %v3989 = vpop.f32.mrb[0].mxu0
    %v3990 = vadd.f32 0.0, %v3989
    %v3991 = vpop.f32.mrb[0].mxu0
    %v3992 = vpop.f32.mrb[0].mxu0
    %v3993 = vadd.f32 0.0, %v3992
    %v3994 = vpop.f32.mrb[0].mxu0
    %3995 = vmatprep.mubr.bf16.mxu0 0
    %3996 = vmatmul.mubr.bf16.gmra.mrb[0].mxu0 %v3652
    %v3997 = vpop.f32.mrb[0].mxu0
    %v3998 = vadd.f32 0.0, %v3997
    %v3999 = vpop.f32.mrb[0].mxu0
    %v4000 = vpop.f32.mrb[0].mxu0
    %v4001 = vadd.f32 0.0, %v4000
    %v4002 = vpop.f32.mrb[0].mxu0
    %4003 = vmatprep.mubr.bf16.mxu0 0
    %4004 = vmatmul.mubr.bf16.gmra.mrb[0].mxu0 %v3655
    %v4005 = vpop.f32.mrb[0].mxu0
    %v4006 = vadd.f32 0.0, %v4005
    %v4007 = vpop.f32.mrb[0].mxu0
    %v4008 = vpop.f32.mrb[0].mxu0
    %v4009 = vpop.f32.mrb[0].mxu0
    %4010 = vdwg.mxu0
    %v4011 = vld [vmem:[%s2 + $0xc0] sm:$0xf]
    %v4012 = vld [vmem:[%s2 + $0xc4] sm:$0xf]
    %v4013 = vld [vmem:[%s2 + $0xc8] sm:$0xf]
    %v4014 = vpack.c.bf16 %v3993, %v3990
    %v4015 = vpack.c.bf16 %v4001, %v3998
    %v4016 = vpack.c.bf16 %v4006, %v4006
    %v4020 = vunpack.c.l.b16 %v4011
    %v4021 = vunpack.c.l.b16 %v4012
    %v4022 = vunpack.c.l.b16 %v4013
    %v4023 = vpack.c.b16 %v4021, %v4020
    %v4024 = vpack.c.b16 %v4022, %v4022
    %v4026 = vsel %vm3727, %v4023, 0
    %v4029 = vsel %vm3727, %v4024, 0
    %v4032 = vsel %vm3734, %v4016, 0
    %4034 = vmatprep.subr.bf16.mxu0 0
    %4035 = vmatpush1.bf16.msra.mxu0 %v4014
    %4036 = vmatprep.subr.bf16.mxu0 0
    %4037 = vmatpush1.bf16.msra.mxu0 %v4015
    %4038 = vmatprep.subr.bf16.mxu0 0
    %4039 = vmatpush1.bf16.msra.mxu0 %v4032
    %4040 = vmatprep.subr.bf16.mxu0 0
    %4041 = vmatpush1.bf16.msra.mxu0 0
    %4042 = vmatprep.subr.bf16.mxu0 0
    %4043 = vmatpush1.bf16.msra.mxu0 0
    %4044 = vmatprep.subr.bf16.mxu0 0
    %4045 = vmatpush1.bf16.msra.mxu0 0
    %4046 = vmatprep.subr.bf16.mxu0 0
    %4047 = vmatpush1.bf16.msra.mxu0 0
    %4048 = vmatprep.subr.bf16.mxu0 0
    %4049 = vmatpush1.bf16.msra.mxu0 0
    %4050 = vmatprep.subr.bf16.mxu0 0
    %4051 = vmatpush1.bf16.msra.mxu0 0
    %4052 = vmatprep.subr.bf16.mxu0 0
    %4053 = vmatpush1.bf16.msra.mxu0 0
    %4054 = vmatprep.subr.bf16.mxu0 0
    %4055 = vmatpush1.bf16.msra.mxu0 0
    %4056 = vmatprep.subr.bf16.mxu0 0
    %4057 = vmatpush1.bf16.msra.mxu0 0
    %4058 = vmatprep.subr.bf16.mxu0 0
    %4059 = vmatpush1.bf16.msra.mxu0 0
    %4060 = vmatprep.subr.bf16.mxu0 0
    %4061 = vmatpush1.bf16.msra.mxu0 0
    %4062 = vmatprep.subr.bf16.mxu0 0
    %4063 = vmatpush1.bf16.msra.mxu0 0
    %4064 = vmatprep.subr.bf16.mxu0 0
    %4065 = vmatpush1.bf16.msra.mxu0 0
    %4066 = vmatprep.mubr.bf16.mxu0 0
    %4067 = vmatmul.mubr.bf16.gmra.mrb[0].mxu0 %v4026
    %v4068 = vpop.f32.mrb[0].mxu0
    %v4069 = vadd.f32 0.0, %v4068
    %v4070 = vpop.f32.mrb[0].mxu0
    %v4071 = vpop.f32.mrb[0].mxu0
    %v4072 = vadd.f32 0.0, %v4071
    %v4073 = vpop.f32.mrb[0].mxu0
    %4074 = vmatprep.mubr.bf16.mxu0 0
    %4075 = vmatmul.mubr.bf16.gmra.mrb[0].mxu0 %v4029
    %v4076 = vpop.f32.mrb[0].mxu0
    %v4077 = vadd.f32 0.0, %v4076
    %v4078 = vpop.f32.mrb[0].mxu0
    %v4079 = vpop.f32.mrb[0].mxu0
    %v4080 = vpop.f32.mrb[0].mxu0
    %4081 = vdwg.mxu0
    %v4082 = vadd.f32 %v3936, %v4069
    %v4083 = vadd.f32 %v3937, %v4072
    %v4084 = vadd.f32 %v3938, %v4077
    %v4085 = vmax.f32 %v4082, %v4083
    %v4086 = vmax.f32 %v4085, %v4084
    %v4087 = vmax.f32 %v4086, 0.0
    %v4088 = vld [vmem:[%s2 + $0xdc] sm:$0xf]
    %v4089 = vld [vmem:[%s2 + $0xe0] sm:$0xf]
    %v4090 = vpack.c.bf16 %v4087, %v4087
    %v4091 = vld [vmem:[%s1] sm:$0xf]
    %v4092 = vld [vmem:[%s2 + $0xe4] sm:$0xf]
    %vm4093 = vcmask 64512
    %v4095 = vsel %vm4093, %v4091, 0
    %v4098 = vsel %vm3734, %v4092, 0
    %4100 = vmatprep.subr.bf16.mxu0 0
    %4101 = vmatpush1.bf16.msra.mxu0 %v4098
    %4102 = vmatprep.subr.bf16.mxu0 0
    %4103 = vmatpush1.bf16.msra.mxu0 0
    %4104 = vmatprep.subr.bf16.mxu0 0
    %4105 = vmatpush1.bf16.msra.mxu0 0
    %4106 = vmatprep.subr.bf16.mxu0 0
    %4107 = vmatpush1.bf16.msra.mxu0 0
    %4108 = vmatprep.subr.bf16.mxu0 0
    %4109 = vmatpush1.bf16.msra.mxu0 0
    %4110 = vmatprep.subr.bf16.mxu0 0
    %4111 = vmatpush1.bf16.msra.mxu0 0
    %4112 = vmatprep.subr.bf16.mxu0 0
    %4113 = vmatpush1.bf16.msra.mxu0 0
    %4114 = vmatprep.subr.bf16.mxu0 0
    %4115 = vmatpush1.bf16.msra.mxu0 0
    %4116 = vmatprep.subr.bf16.mxu0 0
    %4117 = vmatpush1.bf16.msra.mxu0 0
    %4118 = vmatprep.subr.bf16.mxu0 0
    %4119 = vmatpush1.bf16.msra.mxu0 0
    %4120 = vmatprep.subr.bf16.mxu0 0
    %4121 = vmatpush1.bf16.msra.mxu0 0
    %4122 = vmatprep.subr.bf16.mxu0 0
    %4123 = vmatpush1.bf16.msra.mxu0 0
    %4124 = vmatprep.subr.bf16.mxu0 0
    %4125 = vmatpush1.bf16.msra.mxu0 0
    %4126 = vmatprep.subr.bf16.mxu0 0
    %4127 = vmatpush1.bf16.msra.mxu0 0
    %4128 = vmatprep.subr.bf16.mxu0 0
    %4129 = vmatpush1.bf16.msra.mxu0 0
    %4130 = vmatprep.subr.bf16.mxu0 0
    %4131 = vmatpush1.bf16.msra.mxu0 0
    %4132 = vmatprep.mubr.bf16.mxu0 0
    %4133 = vmatmul.mubr.bf16.gmra.mrb[0].mxu0 %v4095
    %v4134 = vpop.f32.mrb[0].mxu0
    %v4135 = vadd.f32 0.0, %v4134
    %v4136 = vpop.f32.mrb[0].mxu0
    %v4137 = vpop.f32.mrb[0].mxu0
    %v4138 = vpop.f32.mrb[0].mxu0
    %4139 = vdwg.mxu0
    %v4142 = vunpack.c.l.b16 %v4088
    %v4143 = vunpack.c.l.b16 %v4089
    %v4144 = vpack.c.b16 %v4143, %v4142
    %v4147 = vsel %vm137, %v4090, 0
    %4149 = vmatprep.subr.bf16.mxu0 0
    %4150 = vmatpush1.bf16.msra.mxu0 %v4144
    %4151 = vmatprep.subr.bf16.mxu0 0
    %4152 = vmatpush1.bf16.msra.mxu0 0
    %4153 = vmatprep.subr.bf16.mxu0 0
    %4154 = vmatpush1.bf16.msra.mxu0 0
    %4155 = vmatprep.subr.bf16.mxu0 0
    %4156 = vmatpush1.bf16.msra.mxu0 0
    %4157 = vmatprep.subr.bf16.mxu0 0
    %4158 = vmatpush1.bf16.msra.mxu0 0
    %4159 = vmatprep.subr.bf16.mxu0 0
    %4160 = vmatpush1.bf16.msra.mxu0 0
    %4161 = vmatprep.subr.bf16.mxu0 0
    %4162 = vmatpush1.bf16.msra.mxu0 0
    %4163 = vmatprep.subr.bf16.mxu0 0
    %4164 = vmatpush1.bf16.msra.mxu0 0
    %4165 = vmatprep.subr.bf16.mxu0 0
    %4166 = vmatpush1.bf16.msra.mxu0 0
    %4167 = vmatprep.subr.bf16.mxu0 0
    %4168 = vmatpush1.bf16.msra.mxu0 0
    %4169 = vmatprep.subr.bf16.mxu0 0
    %4170 = vmatpush1.bf16.msra.mxu0 0
    %4171 = vmatprep.subr.bf16.mxu0 0
    %4172 = vmatpush1.bf16.msra.mxu0 0
    %4173 = vmatprep.subr.bf16.mxu0 0
    %4174 = vmatpush1.bf16.msra.mxu0 0
    %4175 = vmatprep.subr.bf16.mxu0 0
    %4176 = vmatpush1.bf16.msra.mxu0 0
    %4177 = vmatprep.subr.bf16.mxu0 0
    %4178 = vmatpush1.bf16.msra.mxu0 0
    %4179 = vmatprep.subr.bf16.mxu0 0
    %4180 = vmatpush1.bf16.msra.mxu0 0
    %4181 = vmatprep.mubr.bf16.mxu0 0
    %4182 = vmatmul.mubr.bf16.gmra.mrb[0].mxu0 %v4147
    %v4183 = vpop.f32.mrb[0].mxu0
    %v4184 = vadd.f32 %v4135, %v4183
    %v4185 = vpop.f32.mrb[0].mxu0
    %v4186 = vpop.f32.mrb[0].mxu0
    %v4187 = vpop.f32.mrb[0].mxu0
    %4188 = vdwg.mxu0
    %v4189 = vld [vmem:[%s3 + $0x4] sm:$0x1]
    %v4190 = vlaneseq
    %v4191 = vshrl.u32 %v4190, 7
    %v4192 = vsub.s32 0, %v4191
    %v4193 = vrot.slane %v4189, %v4192
    %v4194 = vadd.f32 %v4184, %v4193
    %v4195 = vld [vmem:[%s2 + $0xcc] sm:$0xf]
    %v4196 = vld [vmem:[%s2 + $0xd0] sm:$0xf]
    %v4197 = vld [vmem:[%s2 + $0xd4] sm:$0xf]
    %v4198 = vld [vmem:[%s2 + $0xd8] sm:$0xf]
    %v4199 = vpack.c.bf16 %v4194, %v4194
    %v4204 = vunpack.c.l.b16 %v4195
    %v4205 = vunpack.c.l.b16 %v4196
    %v4206 = vunpack.c.l.b16 %v4197
    %v4207 = vunpack.c.l.b16 %v4198
    %v4208 = vpack.c.b16 %v4205, %v4204
    %v4209 = vpack.c.b16 %v4207, %v4206
    %v4211 = vsel %vm4093, %v4208, 0
    %v4214 = vsel %vm4093, %v4209, 0
    %v4217 = vsel %vm3734, %v4199, 0
    %4219 = vmatprep.subr.bf16.mxu0 0
    %4220 = vmatpush1.bf16.msra.mxu0 %v4217
    %4221 = vmatprep.subr.bf16.mxu0 0
    %4222 = vmatpush1.bf16.msra.mxu0 0
    %4223 = vmatprep.subr.bf16.mxu0 0
    %4224 = vmatpush1.bf16.msra.mxu0 0
    %4225 = vmatprep.subr.bf16.mxu0 0
    %4226 = vmatpush1.bf16.msra.mxu0 0
    %4227 = vmatprep.subr.bf16.mxu0 0
    %4228 = vmatpush1.bf16.msra.mxu0 0
    %4229 = vmatprep.subr.bf16.mxu0 0
    %4230 = vmatpush1.bf16.msra.mxu0 0
    %4231 = vmatprep.subr.bf16.mxu0 0
    %4232 = vmatpush1.bf16.msra.mxu0 0
    %4233 = vmatprep.subr.bf16.mxu0 0
    %4234 = vmatpush1.bf16.msra.mxu0 0
    %4235 = vmatprep.subr.bf16.mxu0 0
    %4236 = vmatpush1.bf16.msra.mxu0 0
    %4237 = vmatprep.subr.bf16.mxu0 0
    %4238 = vmatpush1.bf16.msra.mxu0 0
    %4239 = vmatprep.subr.bf16.mxu0 0
    %4240 = vmatpush1.bf16.msra.mxu0 0
    %4241 = vmatprep.subr.bf16.mxu0 0
    %4242 = vmatpush1.bf16.msra.mxu0 0
    %4243 = vmatprep.subr.bf16.mxu0 0
    %4244 = vmatpush1.bf16.msra.mxu0 0
    %4245 = vmatprep.subr.bf16.mxu0 0
    %4246 = vmatpush1.bf16.msra.mxu0 0
    %4247 = vmatprep.subr.bf16.mxu0 0
    %4248 = vmatpush1.bf16.msra.mxu0 0
    %4249 = vmatprep.subr.bf16.mxu0 0
    %4250 = vmatpush1.bf16.msra.mxu0 0
    %4251 = vmatprep.mubr.bf16.mxu0 0
    %4252 = vmatmul.mubr.bf16.gmra.mrb[0].mxu0 %v4211
    %v4253 = vpop.f32.mrb[0].mxu0
    %v4254 = vadd.f32 0.0, %v4253
    %v4255 = vpop.f32.mrb[0].mxu0
    %v4256 = vpop.f32.mrb[0].mxu0
    %v4257 = vadd.f32 0.0, %v4256
    %v4258 = vpop.f32.mrb[0].mxu0
    %4259 = vmatprep.mubr.bf16.mxu0 0
    %4260 = vmatmul.mubr.bf16.gmra.mrb[0].mxu0 %v4214
    %v4261 = vpop.f32.mrb[0].mxu0
    %v4262 = vadd.f32 0.0, %v4261
    %v4263 = vpop.f32.mrb[0].mxu0
    %v4264 = vpop.f32.mrb[0].mxu0
    %v4265 = vadd.f32 0.0, %v4264
    %v4266 = vpop.f32.mrb[0].mxu0
    %4267 = vdwg.mxu0
    %v4268 = vld [vmem:[%s2 + $0xe8] sm:$0xf]
    %v4269 = vld [vmem:[%s2 + $0xec] sm:$0xf]
    %v4270 = vld [vmem:[%s2 + $0xf0] sm:$0xf]
    %v4271 = vld [vmem:[%s2 + $0xf4] sm:$0xf]
    %v4272 = vld [vmem:[%s2 + $0xf8] sm:$0xf]
    %v4273 = vld [vmem:[%s2 + $0xfc] sm:$0xf]
    %v4274 = vld [vmem:[%s2 + $0x100] sm:$0xf]
    %v4275 = vld [vmem:[%s2 + $0x104] sm:$0xf]
    %v4276 = vld [vmem:[%s2 + $0x108] sm:$0xf]
    %v4277 = vld [vmem:[%s2 + $0x10c] sm:$0xf]
    %v4278 = vld [vmem:[%s2 + $0x110] sm:$0xf]
    %v4279 = vld [vmem:[%s2 + $0x114] sm:$0xf]
    %v4280 = vld [vmem:[%s3 + $0x5] sm:$0x1]
    %v4285 = vunpack.c.l.b16 %v4268
    %v4286 = vunpack.c.l.b16 %v4269
    %v4287 = vunpack.c.l.b16 %v4270
    %v4288 = vunpack.c.l.b16 %v4271
    %v4289 = vpack.c.b16 %v4286, %v4285
    %v4290 = vpack.c.b16 %v4288, %v4287
    %4293 = vmatprep.subr.bf16.mxu0 0
    %4294 = vmatpush1.bf16.msra.mxu0 %v4289
    %4295 = vmatprep.subr.bf16.mxu0 0
    %4296 = vmatpush1.bf16.msra.mxu0 %v4290
    %4297 = vmatprep.subr.bf16.mxu0 0
    %4298 = vmatpush1.bf16.msra.mxu0 0
    %4299 = vmatprep.subr.bf16.mxu0 0
    %4300 = vmatpush1.bf16.msra.mxu0 0
    %4301 = vmatprep.subr.bf16.mxu0 0
    %4302 = vmatpush1.bf16.msra.mxu0 0
    %4303 = vmatprep.subr.bf16.mxu0 0
    %4304 = vmatpush1.bf16.msra.mxu0 0
    %4305 = vmatprep.subr.bf16.mxu0 0
    %4306 = vmatpush1.bf16.msra.mxu0 0
    %4307 = vmatprep.subr.bf16.mxu0 0
    %4308 = vmatpush1.bf16.msra.mxu0 0
    %4309 = vmatprep.subr.bf16.mxu0 0
    %4310 = vmatpush1.bf16.msra.mxu0 0
    %4311 = vmatprep.subr.bf16.mxu0 0
    %4312 = vmatpush1.bf16.msra.mxu0 0
    %4313 = vmatprep.subr.bf16.mxu0 0
    %4314 = vmatpush1.bf16.msra.mxu0 0
    %4315 = vmatprep.subr.bf16.mxu0 0
    %4316 = vmatpush1.bf16.msra.mxu0 0
    %4317 = vmatprep.subr.bf16.mxu0 0
    %4318 = vmatpush1.bf16.msra.mxu0 0
    %4319 = vmatprep.subr.bf16.mxu0 0
    %4320 = vmatpush1.bf16.msra.mxu0 0
    %4321 = vmatprep.subr.bf16.mxu0 0
    %4322 = vmatpush1.bf16.msra.mxu0 0
    %4323 = vmatprep.subr.bf16.mxu0 0
    %4324 = vmatpush1.bf16.msra.mxu0 0
    %4325 = vmatprep.mubr.bf16.mxu0 0
    %4326 = vmatmul.mubr.bf16.gmra.mrb[0].mxu0 %v398
    %v4327 = vpop.f32.mrb[0].mxu0
    %v4328 = vadd.f32 0.0, %v4327
    %v4329 = vpop.f32.mrb[0].mxu0
    %v4330 = vpop.f32.mrb[0].mxu0
    %v4331 = vpop.f32.mrb[0].mxu0
    %4332 = vdwg.mxu0
    %v4333 = vadd.f32 %v4254, %v4328
    %v4334 = vxor.u32 %v4333, 2147483648
    %v4335 = vmul.f32 %v4334, 1.442695
    %v4336 = vpow.pop %v4335
    %v4337 = vadd.f32 %v4336, 1.0
    %v4338 = vrcp.pop %v4337
    %v4339 = vmul.f32 1.0, %v4338
    %v4340 = vmul.f32 %v4339, 2.0
    %v4341 = vsub.f32 %v4340, 1.0
    %v4342 = vmul.f32 %v4339, 0.0
    %4344 = vrot.lane.b32.xlu0 %v4341, 64
    %v4345 = vpop.permute.xlu0 %4344
    %v4347 = vmul.f32 %v4339, %v4345
    %4349 = vrot.lane.b32.xlu0 %v4347, 32
    %v4350 = vpop.permute.xlu0 %4349
    %v4352 = vadd.f32 %v4342, %v4350
    %v4353 = vtanh.pop %v4352
    %4355 = vrot.lane.b32.xlu0 %v4353, 64
    %v4356 = vpop.permute.xlu0 %4355
    %v4358 = vmul.f32 %v4339, %v4356
    %v4359 = vpack.c.bf16 %v4358, %v4358
    %v4364 = vunpack.c.l.b16 %v4276
    %v4365 = vunpack.c.l.b16 %v4277
    %v4366 = vunpack.c.l.b16 %v4278
    %v4367 = vunpack.c.l.b16 %v4279
    %v4368 = vpack.c.b16 %v4365, %v4364
    %v4369 = vpack.c.b16 %v4367, %v4366
    %4372 = vmatprep.subr.bf16.mxu0 0
    %4373 = vmatpush1.bf16.msra.mxu0 %v4368
    %4374 = vmatprep.subr.bf16.mxu0 0
    %4375 = vmatpush1.bf16.msra.mxu0 %v4369
    %4376 = vmatprep.subr.bf16.mxu0 0
    %4377 = vmatpush1.bf16.msra.mxu0 0
    %4378 = vmatprep.subr.bf16.mxu0 0
    %4379 = vmatpush1.bf16.msra.mxu0 0
    %4380 = vmatprep.subr.bf16.mxu0 0
    %4381 = vmatpush1.bf16.msra.mxu0 0
    %4382 = vmatprep.subr.bf16.mxu0 0
    %4383 = vmatpush1.bf16.msra.mxu0 0
    %4384 = vmatprep.subr.bf16.mxu0 0
    %4385 = vmatpush1.bf16.msra.mxu0 0
    %4386 = vmatprep.subr.bf16.mxu0 0
    %4387 = vmatpush1.bf16.msra.mxu0 0
    %4388 = vmatprep.subr.bf16.mxu0 0
    %4389 = vmatpush1.bf16.msra.mxu0 0
    %4390 = vmatprep.subr.bf16.mxu0 0
    %4391 = vmatpush1.bf16.msra.mxu0 0
    %4392 = vmatprep.subr.bf16.mxu0 0
    %4393 = vmatpush1.bf16.msra.mxu0 0
    %4394 = vmatprep.subr.bf16.mxu0 0
    %4395 = vmatpush1.bf16.msra.mxu0 0
    %4396 = vmatprep.subr.bf16.mxu0 0
    %4397 = vmatpush1.bf16.msra.mxu0 0
    %4398 = vmatprep.subr.bf16.mxu0 0
    %4399 = vmatpush1.bf16.msra.mxu0 0
    %4400 = vmatprep.subr.bf16.mxu0 0
    %4401 = vmatpush1.bf16.msra.mxu0 0
    %4402 = vmatprep.subr.bf16.mxu0 0
    %4403 = vmatpush1.bf16.msra.mxu0 0
    %4404 = vmatprep.mubr.bf16.mxu0 0
    %4405 = vmatmul.mubr.bf16.gmra.mrb[0].mxu0 %v398
    %v4406 = vpop.f32.mrb[0].mxu0
    %v4407 = vadd.f32 0.0, %v4406
    %v4408 = vpop.f32.mrb[0].mxu0
    %v4409 = vpop.f32.mrb[0].mxu0
    %v4410 = vpop.f32.mrb[0].mxu0
    %4411 = vdwg.mxu0
    %4413 = vrot.lane.b32.xlu0 %v4359, 32
    %v4414 = vpop.permute.xlu0 %4413
    %v4419 = vunpack.c.l.b16 %v4272
    %v4420 = vunpack.c.l.b16 %v4273
    %v4421 = vunpack.c.l.b16 %v4274
    %v4422 = vunpack.c.l.b16 %v4275
    %v4423 = vpack.c.b16 %v4420, %v4419
    %v4424 = vpack.c.b16 %v4422, %v4421
    %v4428 = vsel %vm396, %v4414, 0
    %4430 = vmatprep.subr.bf16.mxu0 0
    %4431 = vmatpush1.bf16.msra.mxu0 %v4423
    %4432 = vmatprep.subr.bf16.mxu0 0
    %4433 = vmatpush1.bf16.msra.mxu0 %v4424
    %4434 = vmatprep.subr.bf16.mxu0 0
    %4435 = vmatpush1.bf16.msra.mxu0 0
    %4436 = vmatprep.subr.bf16.mxu0 0
    %4437 = vmatpush1.bf16.msra.mxu0 0
    %4438 = vmatprep.subr.bf16.mxu0 0
    %4439 = vmatpush1.bf16.msra.mxu0 0
    %4440 = vmatprep.subr.bf16.mxu0 0
    %4441 = vmatpush1.bf16.msra.mxu0 0
    %4442 = vmatprep.subr.bf16.mxu0 0
    %4443 = vmatpush1.bf16.msra.mxu0 0
    %4444 = vmatprep.subr.bf16.mxu0 0
    %4445 = vmatpush1.bf16.msra.mxu0 0
    %4446 = vmatprep.subr.bf16.mxu0 0
    %4447 = vmatpush1.bf16.msra.mxu0 0
    %4448 = vmatprep.subr.bf16.mxu0 0
    %4449 = vmatpush1.bf16.msra.mxu0 0
    %4450 = vmatprep.subr.bf16.mxu0 0
    %4451 = vmatpush1.bf16.msra.mxu0 0
    %4452 = vmatprep.subr.bf16.mxu0 0
    %4453 = vmatpush1.bf16.msra.mxu0 0
    %4454 = vmatprep.subr.bf16.mxu0 0
    %4455 = vmatpush1.bf16.msra.mxu0 0
    %4456 = vmatprep.subr.bf16.mxu0 0
    %4457 = vmatpush1.bf16.msra.mxu0 0
    %4458 = vmatprep.subr.bf16.mxu0 0
    %4459 = vmatpush1.bf16.msra.mxu0 0
    %4460 = vmatprep.subr.bf16.mxu0 0
    %4461 = vmatpush1.bf16.msra.mxu0 0
    %4462 = vmatprep.mubr.bf16.mxu0 0
    %4463 = vmatmul.mubr.bf16.gmra.mrb[0].mxu0 %v4428
    %v4464 = vpop.f32.mrb[0].mxu0
    %v4465 = vadd.f32 %v4407, %v4464
    %v4466 = vpop.f32.mrb[0].mxu0
    %v4467 = vpop.f32.mrb[0].mxu0
    %v4468 = vpop.f32.mrb[0].mxu0
    %4469 = vdwg.mxu0
    %v4470 = vlaneseq
    %v4471 = vshrl.u32 %v4470, 7
    %v4472 = vsub.s32 0, %v4471
    %v4473 = vrot.slane %v4280, %v4472
    %v4474 = vadd.f32 %v4465, %v4473
    %v4475 = vxor.u32 %v4474, 2147483648
    %v4476 = vmul.f32 %v4475, 1.442695
    %v4477 = vpow.pop %v4476
    %v4478 = vadd.f32 %v4477, 1.0
    %v4479 = vrcp.pop %v4478
    %v4480 = vmul.f32 1.0, %v4479
    %v4481 = vmul.f32 %v4480, 2.0
    %v4482 = vsub.f32 %v4481, 1.0
    %v4483 = vmul.f32 %v4480, 0.0
    %4485 = vrot.lane.b32.xlu0 %v4482, 64
    %v4486 = vpop.permute.xlu0 %4485
    %v4488 = vmul.f32 %v4480, %v4486
    %4490 = vrot.lane.b32.xlu0 %v4488, 32
    %v4491 = vpop.permute.xlu0 %4490
    %v4493 = vadd.f32 %v4483, %v4491
    %v4494 = vtanh.pop %v4493
    %4496 = vrot.lane.b32.xlu0 %v4494, 64
    %v4497 = vpop.permute.xlu0 %4496
    %v4499 = vmul.f32 %v4480, %v4497
    %4500 = vmatprep.subr.bf16.mxu0 0
    %4501 = vmatpush1.bf16.msra.mxu0 %v4289
    %4502 = vmatprep.subr.bf16.mxu0 0
    %4503 = vmatpush1.bf16.msra.mxu0 %v4290
    %4504 = vmatprep.subr.bf16.mxu0 0
    %4505 = vmatpush1.bf16.msra.mxu0 0
    %4506 = vmatprep.subr.bf16.mxu0 0
    %4507 = vmatpush1.bf16.msra.mxu0 0
    %4508 = vmatprep.subr.bf16.mxu0 0
    %4509 = vmatpush1.bf16.msra.mxu0 0
    %4510 = vmatprep.subr.bf16.mxu0 0
    %4511 = vmatpush1.bf16.msra.mxu0 0
    %4512 = vmatprep.subr.bf16.mxu0 0
    %4513 = vmatpush1.bf16.msra.mxu0 0
    %4514 = vmatprep.subr.bf16.mxu0 0
    %4515 = vmatpush1.bf16.msra.mxu0 0
    %4516 = vmatprep.subr.bf16.mxu0 0
    %4517 = vmatpush1.bf16.msra.mxu0 0
    %4518 = vmatprep.subr.bf16.mxu0 0
    %4519 = vmatpush1.bf16.msra.mxu0 0
    %4520 = vmatprep.subr.bf16.mxu0 0
    %4521 = vmatpush1.bf16.msra.mxu0 0
    %4522 = vmatprep.subr.bf16.mxu0 0
    %4523 = vmatpush1.bf16.msra.mxu0 0
    %4524 = vmatprep.subr.bf16.mxu0 0
    %4525 = vmatpush1.bf16.msra.mxu0 0
    %4526 = vmatprep.subr.bf16.mxu0 0
    %4527 = vmatpush1.bf16.msra.mxu0 0
    %4528 = vmatprep.subr.bf16.mxu0 0
    %4529 = vmatpush1.bf16.msra.mxu0 0
    %4530 = vmatprep.subr.bf16.mxu0 0
    %4531 = vmatpush1.bf16.msra.mxu0 0
    %4532 = vmatprep.mubr.bf16.mxu0 0
    %4533 = vmatmul.mubr.bf16.gmra.mrb[0].mxu0 %v4428
    %v4534 = vpop.f32.mrb[0].mxu0
    %v4535 = vadd.f32 0.0, %v4534
    %v4536 = vpop.f32.mrb[0].mxu0
    %v4537 = vpop.f32.mrb[0].mxu0
    %v4538 = vpop.f32.mrb[0].mxu0
    %4539 = vdwg.mxu0
    %v4540 = vadd.f32 %v4257, %v4535
    %v4541 = vxor.u32 %v4540, 2147483648
    %v4542 = vmul.f32 %v4541, 1.442695
    %v4543 = vpow.pop %v4542
    %v4544 = vadd.f32 %v4543, 1.0
    %v4545 = vrcp.pop %v4544
    %v4546 = vmul.f32 1.0, %v4545
    %v4547 = vmul.f32 %v4546, 2.0
    %v4548 = vsub.f32 %v4547, 1.0
    %v4549 = vmul.f32 %v4546, %v4352
    %4551 = vrot.lane.b32.xlu0 %v4548, 64
    %v4552 = vpop.permute.xlu0 %4551
    %v4554 = vmul.f32 %v4546, %v4552
    %4556 = vrot.lane.b32.xlu0 %v4554, 32
    %v4557 = vpop.permute.xlu0 %4556
    %v4559 = vadd.f32 %v4549, %v4557
    %v4560 = vtanh.pop %v4559
    %4562 = vrot.lane.b32.xlu0 %v4560, 64
    %v4563 = vpop.permute.xlu0 %4562
    %v4565 = vmul.f32 %v4546, %v4563
    %v4566 = vpack.c.bf16 %v4565, %v4565
    %v4567 = vpack.c.bf16 %v4499, %v4499
    %4569 = vrot.lane.b32.xlu0 %v4567, 32
    %v4570 = vpop.permute.xlu0 %4569
    %v4572 = vsel %vm396, %v4570, 0
    %4574 = vmatprep.subr.bf16.mxu0 0
    %4575 = vmatpush1.bf16.msra.mxu0 %v4368
    %4576 = vmatprep.subr.bf16.mxu0 0
    %4577 = vmatpush1.bf16.msra.mxu0 %v4369
    %4578 = vmatprep.subr.bf16.mxu0 0
    %4579 = vmatpush1.bf16.msra.mxu0 0
    %4580 = vmatprep.subr.bf16.mxu0 0
    %4581 = vmatpush1.bf16.msra.mxu0 0
    %4582 = vmatprep.subr.bf16.mxu0 0
    %4583 = vmatpush1.bf16.msra.mxu0 0
    %4584 = vmatprep.subr.bf16.mxu0 0
    %4585 = vmatpush1.bf16.msra.mxu0 0
    %4586 = vmatprep.subr.bf16.mxu0 0
    %4587 = vmatpush1.bf16.msra.mxu0 0
    %4588 = vmatprep.subr.bf16.mxu0 0
    %4589 = vmatpush1.bf16.msra.mxu0 0
    %4590 = vmatprep.subr.bf16.mxu0 0
    %4591 = vmatpush1.bf16.msra.mxu0 0
    %4592 = vmatprep.subr.bf16.mxu0 0
    %4593 = vmatpush1.bf16.msra.mxu0 0
    %4594 = vmatprep.subr.bf16.mxu0 0
    %4595 = vmatpush1.bf16.msra.mxu0 0
    %4596 = vmatprep.subr.bf16.mxu0 0
    %4597 = vmatpush1.bf16.msra.mxu0 0
    %4598 = vmatprep.subr.bf16.mxu0 0
    %4599 = vmatpush1.bf16.msra.mxu0 0
    %4600 = vmatprep.subr.bf16.mxu0 0
    %4601 = vmatpush1.bf16.msra.mxu0 0
    %4602 = vmatprep.subr.bf16.mxu0 0
    %4603 = vmatpush1.bf16.msra.mxu0 0
    %4604 = vmatprep.subr.bf16.mxu0 0
    %4605 = vmatpush1.bf16.msra.mxu0 0
    %4606 = vmatprep.mubr.bf16.mxu0 0
    %4607 = vmatmul.mubr.bf16.gmra.mrb[0].mxu0 %v4572
    %v4608 = vpop.f32.mrb[0].mxu0
    %v4609 = vadd.f32 0.0, %v4608
    %v4610 = vpop.f32.mrb[0].mxu0
    %v4611 = vpop.f32.mrb[0].mxu0
    %v4612 = vpop.f32.mrb[0].mxu0
    %4613 = vdwg.mxu0
    %4615 = vrot.lane.b32.xlu0 %v4566, 32
    %v4616 = vpop.permute.xlu0 %4615
    %v4618 = vsel %vm396, %v4616, 0
    %4620 = vmatprep.subr.bf16.mxu0 0
    %4621 = vmatpush1.bf16.msra.mxu0 %v4423
    %4622 = vmatprep.subr.bf16.mxu0 0
    %4623 = vmatpush1.bf16.msra.mxu0 %v4424
    %4624 = vmatprep.subr.bf16.mxu0 0
    %4625 = vmatpush1.bf16.msra.mxu0 0
    %4626 = vmatprep.subr.bf16.mxu0 0
    %4627 = vmatpush1.bf16.msra.mxu0 0
    %4628 = vmatprep.subr.bf16.mxu0 0
    %4629 = vmatpush1.bf16.msra.mxu0 0
    %4630 = vmatprep.subr.bf16.mxu0 0
    %4631 = vmatpush1.bf16.msra.mxu0 0
    %4632 = vmatprep.subr.bf16.mxu0 0
    %4633 = vmatpush1.bf16.msra.mxu0 0
    %4634 = vmatprep.subr.bf16.mxu0 0
    %4635 = vmatpush1.bf16.msra.mxu0 0
    %4636 = vmatprep.subr.bf16.mxu0 0
    %4637 = vmatpush1.bf16.msra.mxu0 0
    %4638 = vmatprep.subr.bf16.mxu0 0
    %4639 = vmatpush1.bf16.msra.mxu0 0
    %4640 = vmatprep.subr.bf16.mxu0 0
    %4641 = vmatpush1.bf16.msra.mxu0 0
    %4642 = vmatprep.subr.bf16.mxu0 0
    %4643 = vmatpush1.bf16.msra.mxu0 0
    %4644 = vmatprep.subr.bf16.mxu0 0
    %4645 = vmatpush1.bf16.msra.mxu0 0
    %4646 = vmatprep.subr.bf16.mxu0 0
    %4647 = vmatpush1.bf16.msra.mxu0 0
    %4648 = vmatprep.subr.bf16.mxu0 0
    %4649 = vmatpush1.bf16.msra.mxu0 0
    %4650 = vmatprep.subr.bf16.mxu0 0
    %4651 = vmatpush1.bf16.msra.mxu0 0
    %4652 = vmatprep.mubr.bf16.mxu0 0
    %4653 = vmatmul.mubr.bf16.gmra.mrb[0].mxu0 %v4618
    %v4654 = vpop.f32.mrb[0].mxu0
    %v4655 = vadd.f32 %v4609, %v4654
    %v4656 = vpop.f32.mrb[0].mxu0
    %v4657 = vpop.f32.mrb[0].mxu0
    %v4658 = vpop.f32.mrb[0].mxu0
    %4659 = vdwg.mxu0
    %v4660 = vadd.f32 %v4655, %v4473
    %v4661 = vxor.u32 %v4660, 2147483648
    %v4662 = vmul.f32 %v4661, 1.442695
    %v4663 = vpow.pop %v4662
    %v4664 = vadd.f32 %v4663, 1.0
    %v4665 = vrcp.pop %v4664
    %v4666 = vmul.f32 1.0, %v4665
    %v4667 = vmul.f32 %v4666, 2.0
    %v4668 = vsub.f32 %v4667, 1.0
    %v4669 = vmul.f32 %v4666, %v4493
    %4671 = vrot.lane.b32.xlu0 %v4668, 64
    %v4672 = vpop.permute.xlu0 %4671
    %v4674 = vmul.f32 %v4666, %v4672
    %4676 = vrot.lane.b32.xlu0 %v4674, 32
    %v4677 = vpop.permute.xlu0 %4676
    %v4679 = vadd.f32 %v4669, %v4677
    %v4680 = vtanh.pop %v4679
    %4682 = vrot.lane.b32.xlu0 %v4680, 64
    %v4683 = vpop.permute.xlu0 %4682
    %v4685 = vmul.f32 %v4666, %v4683
    %4686 = vmatprep.subr.bf16.mxu0 0
    %4687 = vmatpush1.bf16.msra.mxu0 %v4289
    %4688 = vmatprep.subr.bf16.mxu0 0
    %4689 = vmatpush1.bf16.msra.mxu0 %v4290
    %4690 = vmatprep.subr.bf16.mxu0 0
    %4691 = vmatpush1.bf16.msra.mxu0 0
    %4692 = vmatprep.subr.bf16.mxu0 0
    %4693 = vmatpush1.bf16.msra.mxu0 0
    %4694 = vmatprep.subr.bf16.mxu0 0
    %4695 = vmatpush1.bf16.msra.mxu0 0
    %4696 = vmatprep.subr.bf16.mxu0 0
    %4697 = vmatpush1.bf16.msra.mxu0 0
    %4698 = vmatprep.subr.bf16.mxu0 0
    %4699 = vmatpush1.bf16.msra.mxu0 0
    %4700 = vmatprep.subr.bf16.mxu0 0
    %4701 = vmatpush1.bf16.msra.mxu0 0
    %4702 = vmatprep.subr.bf16.mxu0 0
    %4703 = vmatpush1.bf16.msra.mxu0 0
    %4704 = vmatprep.subr.bf16.mxu0 0
    %4705 = vmatpush1.bf16.msra.mxu0 0
    %4706 = vmatprep.subr.bf16.mxu0 0
    %4707 = vmatpush1.bf16.msra.mxu0 0
    %4708 = vmatprep.subr.bf16.mxu0 0
    %4709 = vmatpush1.bf16.msra.mxu0 0
    %4710 = vmatprep.subr.bf16.mxu0 0
    %4711 = vmatpush1.bf16.msra.mxu0 0
    %4712 = vmatprep.subr.bf16.mxu0 0
    %4713 = vmatpush1.bf16.msra.mxu0 0
    %4714 = vmatprep.subr.bf16.mxu0 0
    %4715 = vmatpush1.bf16.msra.mxu0 0
    %4716 = vmatprep.subr.bf16.mxu0 0
    %4717 = vmatpush1.bf16.msra.mxu0 0
    %4718 = vmatprep.mubr.bf16.mxu0 0
    %4719 = vmatmul.mubr.bf16.gmra.mrb[0].mxu0 %v4618
    %v4720 = vpop.f32.mrb[0].mxu0
    %v4721 = vadd.f32 0.0, %v4720
    %v4722 = vpop.f32.mrb[0].mxu0
    %v4723 = vpop.f32.mrb[0].mxu0
    %v4724 = vpop.f32.mrb[0].mxu0
    %4725 = vdwg.mxu0
    %v4726 = vadd.f32 %v4262, %v4721
    %v4727 = vxor.u32 %v4726, 2147483648
    %v4728 = vmul.f32 %v4727, 1.442695
    %v4729 = vpow.pop %v4728
    %v4730 = vadd.f32 %v4729, 1.0
    %v4731 = vrcp.pop %v4730
    %v4732 = vmul.f32 1.0, %v4731
    %v4733 = vmul.f32 %v4732, 2.0
    %v4734 = vsub.f32 %v4733, 1.0
    %v4735 = vmul.f32 %v4732, %v4559
    %4737 = vrot.lane.b32.xlu0 %v4734, 64
    %v4738 = vpop.permute.xlu0 %4737
    %v4740 = vmul.f32 %v4732, %v4738
    %4742 = vrot.lane.b32.xlu0 %v4740, 32
    %v4743 = vpop.permute.xlu0 %4742
    %v4745 = vadd.f32 %v4735, %v4743
    %v4746 = vtanh.pop %v4745
    %4748 = vrot.lane.b32.xlu0 %v4746, 64
    %v4749 = vpop.permute.xlu0 %4748
    %v4751 = vmul.f32 %v4732, %v4749
    %v4752 = vpack.c.bf16 %v4751, %v4751
    %v4753 = vpack.c.bf16 %v4685, %v4685
    %4755 = vrot.lane.b32.xlu0 %v4753, 32
    %v4756 = vpop.permute.xlu0 %4755
    %v4758 = vsel %vm396, %v4756, 0
    %4760 = vmatprep.subr.bf16.mxu0 0
    %4761 = vmatpush1.bf16.msra.mxu0 %v4368
    %4762 = vmatprep.subr.bf16.mxu0 0
    %4763 = vmatpush1.bf16.msra.mxu0 %v4369
    %4764 = vmatprep.subr.bf16.mxu0 0
    %4765 = vmatpush1.bf16.msra.mxu0 0
    %4766 = vmatprep.subr.bf16.mxu0 0
    %4767 = vmatpush1.bf16.msra.mxu0 0
    %4768 = vmatprep.subr.bf16.mxu0 0
    %4769 = vmatpush1.bf16.msra.mxu0 0
    %4770 = vmatprep.subr.bf16.mxu0 0
    %4771 = vmatpush1.bf16.msra.mxu0 0
    %4772 = vmatprep.subr.bf16.mxu0 0
    %4773 = vmatpush1.bf16.msra.mxu0 0
    %4774 = vmatprep.subr.bf16.mxu0 0
    %4775 = vmatpush1.bf16.msra.mxu0 0
    %4776 = vmatprep.subr.bf16.mxu0 0
    %4777 = vmatpush1.bf16.msra.mxu0 0
    %4778 = vmatprep.subr.bf16.mxu0 0
    %4779 = vmatpush1.bf16.msra.mxu0 0
    %4780 = vmatprep.subr.bf16.mxu0 0
    %4781 = vmatpush1.bf16.msra.mxu0 0
    %4782 = vmatprep.subr.bf16.mxu0 0
    %4783 = vmatpush1.bf16.msra.mxu0 0
    %4784 = vmatprep.subr.bf16.mxu0 0
    %4785 = vmatpush1.bf16.msra.mxu0 0
    %4786 = vmatprep.subr.bf16.mxu0 0
    %4787 = vmatpush1.bf16.msra.mxu0 0
    %4788 = vmatprep.subr.bf16.mxu0 0
    %4789 = vmatpush1.bf16.msra.mxu0 0
    %4790 = vmatprep.subr.bf16.mxu0 0
    %4791 = vmatpush1.bf16.msra.mxu0 0
    %4792 = vmatprep.mubr.bf16.mxu0 0
    %4793 = vmatmul.mubr.bf16.gmra.mrb[0].mxu0 %v4758
    %v4794 = vpop.f32.mrb[0].mxu0
    %v4795 = vadd.f32 0.0, %v4794
    %v4796 = vpop.f32.mrb[0].mxu0
    %v4797 = vpop.f32.mrb[0].mxu0
    %v4798 = vpop.f32.mrb[0].mxu0
    %4799 = vdwg.mxu0
    %4801 = vrot.lane.b32.xlu0 %v4752, 32
    %v4802 = vpop.permute.xlu0 %4801
    %v4804 = vsel %vm396, %v4802, 0
    %4806 = vmatprep.subr.bf16.mxu0 0
    %4807 = vmatpush1.bf16.msra.mxu0 %v4423
    %4808 = vmatprep.subr.bf16.mxu0 0
    %4809 = vmatpush1.bf16.msra.mxu0 %v4424
    %4810 = vmatprep.subr.bf16.mxu0 0
    %4811 = vmatpush1.bf16.msra.mxu0 0
    %4812 = vmatprep.subr.bf16.mxu0 0
    %4813 = vmatpush1.bf16.msra.mxu0 0
    %4814 = vmatprep.subr.bf16.mxu0 0
    %4815 = vmatpush1.bf16.msra.mxu0 0
    %4816 = vmatprep.subr.bf16.mxu0 0
    %4817 = vmatpush1.bf16.msra.mxu0 0
    %4818 = vmatprep.subr.bf16.mxu0 0
    %4819 = vmatpush1.bf16.msra.mxu0 0
    %4820 = vmatprep.subr.bf16.mxu0 0
    %4821 = vmatpush1.bf16.msra.mxu0 0
    %4822 = vmatprep.subr.bf16.mxu0 0
    %4823 = vmatpush1.bf16.msra.mxu0 0
    %4824 = vmatprep.subr.bf16.mxu0 0
    %4825 = vmatpush1.bf16.msra.mxu0 0
    %4826 = vmatprep.subr.bf16.mxu0 0
    %4827 = vmatpush1.bf16.msra.mxu0 0
    %4828 = vmatprep.subr.bf16.mxu0 0
    %4829 = vmatpush1.bf16.msra.mxu0 0
    %4830 = vmatprep.subr.bf16.mxu0 0
    %4831 = vmatpush1.bf16.msra.mxu0 0
    %4832 = vmatprep.subr.bf16.mxu0 0
    %4833 = vmatpush1.bf16.msra.mxu0 0
    %4834 = vmatprep.subr.bf16.mxu0 0
    %4835 = vmatpush1.bf16.msra.mxu0 0
    %4836 = vmatprep.subr.bf16.mxu0 0
    %4837 = vmatpush1.bf16.msra.mxu0 0
    %4838 = vmatprep.mubr.bf16.mxu0 0
    %4839 = vmatmul.mubr.bf16.gmra.mrb[0].mxu0 %v4804
    %v4840 = vpop.f32.mrb[0].mxu0
    %v4841 = vadd.f32 %v4795, %v4840
    %v4842 = vpop.f32.mrb[0].mxu0
    %v4843 = vpop.f32.mrb[0].mxu0
    %v4844 = vpop.f32.mrb[0].mxu0
    %4845 = vdwg.mxu0
    %v4846 = vadd.f32 %v4841, %v4473
    %v4847 = vxor.u32 %v4846, 2147483648
    %v4848 = vmul.f32 %v4847, 1.442695
    %v4849 = vpow.pop %v4848
    %v4850 = vadd.f32 %v4849, 1.0
    %v4851 = vrcp.pop %v4850
    %v4852 = vmul.f32 1.0, %v4851
    %v4853 = vmul.f32 %v4852, 2.0
    %v4854 = vsub.f32 %v4853, 1.0
    %v4855 = vmul.f32 %v4852, %v4679
    %4857 = vrot.lane.b32.xlu0 %v4854, 64
    %v4858 = vpop.permute.xlu0 %4857
    %v4860 = vmul.f32 %v4852, %v4858
    %4862 = vrot.lane.b32.xlu0 %v4860, 32
    %v4863 = vpop.permute.xlu0 %4862
    %v4865 = vadd.f32 %v4855, %v4863
    %v4866 = vtanh.pop %v4865
    %4868 = vrot.lane.b32.xlu0 %v4866, 64
    %v4869 = vpop.permute.xlu0 %4868
    %v4871 = vmul.f32 %v4852, %v4869
    %4872 = vmatprep.subr.bf16.mxu0 0
    %4873 = vmatpush1.bf16.msra.mxu0 %v4289
    %4874 = vmatprep.subr.bf16.mxu0 0
    %4875 = vmatpush1.bf16.msra.mxu0 %v4290
    %4876 = vmatprep.subr.bf16.mxu0 0
    %4877 = vmatpush1.bf16.msra.mxu0 0
    %4878 = vmatprep.subr.bf16.mxu0 0
    %4879 = vmatpush1.bf16.msra.mxu0 0
    %4880 = vmatprep.subr.bf16.mxu0 0
    %4881 = vmatpush1.bf16.msra.mxu0 0
    %4882 = vmatprep.subr.bf16.mxu0 0
    %4883 = vmatpush1.bf16.msra.mxu0 0
    %4884 = vmatprep.subr.bf16.mxu0 0
    %4885 = vmatpush1.bf16.msra.mxu0 0
    %4886 = vmatprep.subr.bf16.mxu0 0
    %4887 = vmatpush1.bf16.msra.mxu0 0
    %4888 = vmatprep.subr.bf16.mxu0 0
    %4889 = vmatpush1.bf16.msra.mxu0 0
    %4890 = vmatprep.subr.bf16.mxu0 0
    %4891 = vmatpush1.bf16.msra.mxu0 0
    %4892 = vmatprep.subr.bf16.mxu0 0
    %4893 = vmatpush1.bf16.msra.mxu0 0
    %4894 = vmatprep.subr.bf16.mxu0 0
    %4895 = vmatpush1.bf16.msra.mxu0 0
    %4896 = vmatprep.subr.bf16.mxu0 0
    %4897 = vmatpush1.bf16.msra.mxu0 0
    %4898 = vmatprep.subr.bf16.mxu0 0
    %4899 = vmatpush1.bf16.msra.mxu0 0
    %4900 = vmatprep.subr.bf16.mxu0 0
    %4901 = vmatpush1.bf16.msra.mxu0 0
    %4902 = vmatprep.subr.bf16.mxu0 0
    %4903 = vmatpush1.bf16.msra.mxu0 0
    %4904 = vmatprep.mubr.bf16.mxu0 0
    %4905 = vmatmul.mubr.bf16.gmra.mrb[0].mxu0 %v4804
    %v4906 = vpop.f32.mrb[0].mxu0
    %v4907 = vadd.f32 0.0, %v4906
    %v4908 = vpop.f32.mrb[0].mxu0
    %v4909 = vpop.f32.mrb[0].mxu0
    %v4910 = vpop.f32.mrb[0].mxu0
    %4911 = vdwg.mxu0
    %v4912 = vadd.f32 %v4265, %v4907
    %v4913 = vxor.u32 %v4912, 2147483648
    %v4914 = vmul.f32 %v4913, 1.442695
    %v4915 = vpow.pop %v4914
    %v4916 = vadd.f32 %v4915, 1.0
    %v4917 = vrcp.pop %v4916
    %v4918 = vmul.f32 1.0, %v4917
    %v4919 = vmul.f32 %v4918, 2.0
    %v4920 = vsub.f32 %v4919, 1.0
    %v4921 = vmul.f32 %v4918, %v4745
    %4923 = vrot.lane.b32.xlu0 %v4920, 64
    %v4924 = vpop.permute.xlu0 %4923
    %v4926 = vmul.f32 %v4918, %v4924
    %4928 = vrot.lane.b32.xlu0 %v4926, 32
    %v4929 = vpop.permute.xlu0 %4928
    %v4931 = vadd.f32 %v4921, %v4929
    %v4932 = vtanh.pop %v4931
    %4934 = vrot.lane.b32.xlu0 %v4932, 64
    %v4935 = vpop.permute.xlu0 %4934
    %v4937 = vmul.f32 %v4918, %v4935
    %v4938 = vpack.c.bf16 %v4937, %v4937
    %v4939 = vpack.c.bf16 %v4871, %v4871
    %4941 = vrot.lane.b32.xlu0 %v4939, 32
    %v4942 = vpop.permute.xlu0 %4941
    %v4944 = vsel %vm396, %v4942, 0
    %4946 = vmatprep.subr.bf16.mxu0 0
    %4947 = vmatpush1.bf16.msra.mxu0 %v4368
    %4948 = vmatprep.subr.bf16.mxu0 0
    %4949 = vmatpush1.bf16.msra.mxu0 %v4369
    %4950 = vmatprep.subr.bf16.mxu0 0
    %4951 = vmatpush1.bf16.msra.mxu0 0
    %4952 = vmatprep.subr.bf16.mxu0 0
    %4953 = vmatpush1.bf16.msra.mxu0 0
    %4954 = vmatprep.subr.bf16.mxu0 0
    %4955 = vmatpush1.bf16.msra.mxu0 0
    %4956 = vmatprep.subr.bf16.mxu0 0
    %4957 = vmatpush1.bf16.msra.mxu0 0
    %4958 = vmatprep.subr.bf16.mxu0 0
    %4959 = vmatpush1.bf16.msra.mxu0 0
    %4960 = vmatprep.subr.bf16.mxu0 0
    %4961 = vmatpush1.bf16.msra.mxu0 0
    %4962 = vmatprep.subr.bf16.mxu0 0
    %4963 = vmatpush1.bf16.msra.mxu0 0
    %4964 = vmatprep.subr.bf16.mxu0 0
    %4965 = vmatpush1.bf16.msra.mxu0 0
    %4966 = vmatprep.subr.bf16.mxu0 0
    %4967 = vmatpush1.bf16.msra.mxu0 0
    %4968 = vmatprep.subr.bf16.mxu0 0
    %4969 = vmatpush1.bf16.msra.mxu0 0
    %4970 = vmatprep.subr.bf16.mxu0 0
    %4971 = vmatpush1.bf16.msra.mxu0 0
    %4972 = vmatprep.subr.bf16.mxu0 0
    %4973 = vmatpush1.bf16.msra.mxu0 0
    %4974 = vmatprep.subr.bf16.mxu0 0
    %4975 = vmatpush1.bf16.msra.mxu0 0
    %4976 = vmatprep.subr.bf16.mxu0 0
    %4977 = vmatpush1.bf16.msra.mxu0 0
    %4978 = vmatprep.mubr.bf16.mxu0 0
    %4979 = vmatmul.mubr.bf16.gmra.mrb[0].mxu0 %v4944
    %v4980 = vpop.f32.mrb[0].mxu0
    %v4981 = vadd.f32 0.0, %v4980
    %v4982 = vpop.f32.mrb[0].mxu0
    %v4983 = vpop.f32.mrb[0].mxu0
    %v4984 = vpop.f32.mrb[0].mxu0
    %4985 = vdwg.mxu0
    %4987 = vrot.lane.b32.xlu0 %v4938, 32
    %v4988 = vpop.permute.xlu0 %4987
    %v4990 = vsel %vm396, %v4988, 0
    %4992 = vmatprep.subr.bf16.mxu0 0
    %4993 = vmatpush1.bf16.msra.mxu0 %v4423
    %4994 = vmatprep.subr.bf16.mxu0 0
    %4995 = vmatpush1.bf16.msra.mxu0 %v4424
    %4996 = vmatprep.subr.bf16.mxu0 0
    %4997 = vmatpush1.bf16.msra.mxu0 0
    %4998 = vmatprep.subr.bf16.mxu0 0
    %4999 = vmatpush1.bf16.msra.mxu0 0
    %5000 = vmatprep.subr.bf16.mxu0 0
    %5001 = vmatpush1.bf16.msra.mxu0 0
    %5002 = vmatprep.subr.bf16.mxu0 0
    %5003 = vmatpush1.bf16.msra.mxu0 0
    %5004 = vmatprep.subr.bf16.mxu0 0
    %5005 = vmatpush1.bf16.msra.mxu0 0
    %5006 = vmatprep.subr.bf16.mxu0 0
    %5007 = vmatpush1.bf16.msra.mxu0 0
    %5008 = vmatprep.subr.bf16.mxu0 0
    %5009 = vmatpush1.bf16.msra.mxu0 0
    %5010 = vmatprep.subr.bf16.mxu0 0
    %5011 = vmatpush1.bf16.msra.mxu0 0
    %5012 = vmatprep.subr.bf16.mxu0 0
    %5013 = vmatpush1.bf16.msra.mxu0 0
    %5014 = vmatprep.subr.bf16.mxu0 0
    %5015 = vmatpush1.bf16.msra.mxu0 0
    %5016 = vmatprep.subr.bf16.mxu0 0
    %5017 = vmatpush1.bf16.msra.mxu0 0
    %5018 = vmatprep.subr.bf16.mxu0 0
    %5019 = vmatpush1.bf16.msra.mxu0 0
    %5020 = vmatprep.subr.bf16.mxu0 0
    %5021 = vmatpush1.bf16.msra.mxu0 0
    %5022 = vmatprep.subr.bf16.mxu0 0
    %5023 = vmatpush1.bf16.msra.mxu0 0
    %5024 = vmatprep.mubr.bf16.mxu0 0
    %5025 = vmatmul.mubr.bf16.gmra.mrb[0].mxu0 %v4990
    %v5026 = vpop.f32.mrb[0].mxu0
    %v5027 = vadd.f32 %v4981, %v5026
    %v5028 = vpop.f32.mrb[0].mxu0
    %v5029 = vpop.f32.mrb[0].mxu0
    %v5030 = vpop.f32.mrb[0].mxu0
    %5031 = vdwg.mxu0
    %v5032 = vadd.f32 %v5027, %v4473
    %v5033 = vxor.u32 %v5032, 2147483648
    %v5034 = vmul.f32 %v5033, 1.442695
    %v5035 = vpow.pop %v5034
    %v5036 = vadd.f32 %v5035, 1.0
    %v5037 = vrcp.pop %v5036
    %v5038 = vmul.f32 1.0, %v5037
    %v5039 = vmul.f32 %v5038, 2.0
    %v5040 = vsub.f32 %v5039, 1.0
    %v5041 = vmul.f32 %v5038, %v4865
    %5043 = vrot.lane.b32.xlu0 %v5040, 64
    %v5044 = vpop.permute.xlu0 %5043
    %v5046 = vmul.f32 %v5038, %v5044
    %5048 = vrot.lane.b32.xlu0 %v5046, 32
    %v5049 = vpop.permute.xlu0 %5048
    %v5051 = vadd.f32 %v5041, %v5049
    %v5052 = vtanh.pop %v5051
    %5054 = vrot.lane.b32.xlu0 %v5052, 64
    %v5055 = vpop.permute.xlu0 %5054
    %v5057 = vmul.f32 %v5038, %v5055
    %5059 = vrot.lane.b32.xlu0 %v4937, 32
    %v5060 = vpop.permute.xlu0 %5059
    %v5062 = vrot.slane %v4937, 1
    %5063 = vrot.lane.b32.xlu0 %v5062, 64
    %v5064 = vpop.permute.xlu0 %5063
    %v5066 = vsel %vm396, %v5060, %v5064
    %5068 = vrot.lane.b32.xlu0 %v5057, 32
    %v5069 = vpop.permute.xlu0 %5068
    %v5071 = vrot.slane %v5057, 1
    %5072 = vrot.lane.b32.xlu0 %v5071, 64
    %v5073 = vpop.permute.xlu0 %5072
    %v5075 = vsel %vm396, %v5069, %v5073
    %v5077 = vrot.slane %v5075, 7
    %vm5079 = vcmask 1040384
    %v5080 = vsel %vm5079, %v5066, %v5077
    %5082 = vrot.lane.b32.xlu0 %v4931, 96
    %v5083 = vpop.permute.xlu0 %5082
    %v5085 = vrot.slane %v4931, 1
    %v5087 = vsel %vm396, %v5083, %v5085
    %5089 = vrot.lane.b32.xlu0 %v5051, 96
    %v5090 = vpop.permute.xlu0 %5089
    %v5092 = vrot.slane %v5051, 1
    %v5094 = vsel %vm396, %v5090, %v5092
    %v5096 = vrot.slane %v5094, 7
    %v5098 = vsel %vm5079, %v5087, %v5096
    %v5099 = vld [vmem:[%s2 + $0x118] sm:$0xf]
    %v5100 = vld [vmem:[%s2 + $0x11c] sm:$0xf]
    %v5101 = vld [vmem:[%s2 + $0x120] sm:$0xf]
    %v5102 = vld [vmem:[%s2 + $0x124] sm:$0xf]
    %v5103 = vld [vmem:[%s2 + $0x128] sm:$0xf]
    %v5104 = vld [vmem:[%s2 + $0x12c] sm:$0xf]
    %v5105 = vld [vmem:[%s2 + $0x130] sm:$0xf]
    %v5106 = vld [vmem:[%s2 + $0x134] sm:$0xf]
    %v5107 = vpack.c.bf16 %v5080, %v5080
    %v5108 = vld [vmem:[%s2 + $0x138] sm:$0xf]
    %v5109 = vld [vmem:[%s2 + $0x13c] sm:$0xf]
    %v5110 = vld [vmem:[%s2 + $0x140] sm:$0xf]
    %v5111 = vld [vmem:[%s2 + $0x144] sm:$0xf]
    %v5112 = vld [vmem:[%s2 + $0x148] sm:$0xf]
    %v5113 = vld [vmem:[%s2 + $0x14c] sm:$0xf]
    %v5114 = vld [vmem:[%s2 + $0x150] sm:$0xf]
    %v5115 = vld [vmem:[%s2 + $0x154] sm:$0xf]
    %v5116 = vpack.c.bf16 %v5098, %v5098
    %v5125 = vunpack.c.l.b16 %v5108
    %v5126 = vunpack.c.l.b16 %v5109
    %v5127 = vunpack.c.l.b16 %v5110
    %v5128 = vunpack.c.l.b16 %v5111
    %v5129 = vunpack.c.l.b16 %v5112
    %v5130 = vunpack.c.l.b16 %v5113
    %v5131 = vunpack.c.l.b16 %v5114
    %v5132 = vunpack.c.l.b16 %v5115
    %v5133 = vpack.c.b16 %v5126, %v5125
    %v5134 = vpack.c.b16 %v5128, %v5127
    %v5135 = vpack.c.b16 %v5130, %v5129
    %v5136 = vpack.c.b16 %v5132, %v5131
    %vm5141 = vcmask 523264
    %v5143 = vsel %vm5141, %v5116, 0
    %5145 = vmatprep.subr.bf16.mxu0 0
    %5146 = vmatpush1.bf16.msra.mxu0 %v5133
    %5147 = vmatprep.subr.bf16.mxu0 0
    %5148 = vmatpush1.bf16.msra.mxu0 %v5134
    %5149 = vmatprep.subr.bf16.mxu0 0
    %5150 = vmatpush1.bf16.msra.mxu0 %v5135
    %5151 = vmatprep.subr.bf16.mxu0 0
    %5152 = vmatpush1.bf16.msra.mxu0 %v5136
    %5153 = vmatprep.subr.bf16.mxu0 0
    %5154 = vmatpush1.bf16.msra.mxu0 0
    %5155 = vmatprep.subr.bf16.mxu0 0
    %5156 = vmatpush1.bf16.msra.mxu0 0
    %5157 = vmatprep.subr.bf16.mxu0 0
    %5158 = vmatpush1.bf16.msra.mxu0 0
    %5159 = vmatprep.subr.bf16.mxu0 0
    %5160 = vmatpush1.bf16.msra.mxu0 0
    %5161 = vmatprep.subr.bf16.mxu0 0
    %5162 = vmatpush1.bf16.msra.mxu0 0
    %5163 = vmatprep.subr.bf16.mxu0 0
    %5164 = vmatpush1.bf16.msra.mxu0 0
    %5165 = vmatprep.subr.bf16.mxu0 0
    %5166 = vmatpush1.bf16.msra.mxu0 0
    %5167 = vmatprep.subr.bf16.mxu0 0
    %5168 = vmatpush1.bf16.msra.mxu0 0
    %5169 = vmatprep.subr.bf16.mxu0 0
    %5170 = vmatpush1.bf16.msra.mxu0 0
    %5171 = vmatprep.subr.bf16.mxu0 0
    %5172 = vmatpush1.bf16.msra.mxu0 0
    %5173 = vmatprep.subr.bf16.mxu0 0
    %5174 = vmatpush1.bf16.msra.mxu0 0
    %5175 = vmatprep.subr.bf16.mxu0 0
    %5176 = vmatpush1.bf16.msra.mxu0 0
    %5177 = vmatprep.mubr.bf16.mxu0 0
    %5178 = vmatmul.mubr.bf16.gmra.mrb[0].mxu0 %v5143
    %v5179 = vpop.f32.mrb[0].mxu0
    %v5180 = vadd.f32 0.0, %v5179
    %v5181 = vpop.f32.mrb[0].mxu0
    %v5182 = vpop.f32.mrb[0].mxu0
    %v5183 = vpop.f32.mrb[0].mxu0
    %5184 = vdwg.mxu0
    %v5193 = vunpack.c.l.b16 %v5099
    %v5194 = vunpack.c.l.b16 %v5100
    %v5195 = vunpack.c.l.b16 %v5101
    %v5196 = vunpack.c.l.b16 %v5102
    %v5197 = vunpack.c.l.b16 %v5103
    %v5198 = vunpack.c.l.b16 %v5104
    %v5199 = vunpack.c.l.b16 %v5105
    %v5200 = vunpack.c.l.b16 %v5106
    %v5201 = vpack.c.b16 %v5194, %v5193
    %v5202 = vpack.c.b16 %v5196, %v5195
    %v5203 = vpack.c.b16 %v5198, %v5197
    %v5204 = vpack.c.b16 %v5200, %v5199
    %v5210 = vsel %vm5141, %v5107, 0
    %5212 = vmatprep.subr.bf16.mxu0 0
    %5213 = vmatpush1.bf16.msra.mxu0 %v5201
    %5214 = vmatprep.subr.bf16.mxu0 0
    %5215 = vmatpush1.bf16.msra.mxu0 %v5202
    %5216 = vmatprep.subr.bf16.mxu0 0
    %5217 = vmatpush1.bf16.msra.mxu0 %v5203
    %5218 = vmatprep.subr.bf16.mxu0 0
    %5219 = vmatpush1.bf16.msra.mxu0 %v5204
    %5220 = vmatprep.subr.bf16.mxu0 0
    %5221 = vmatpush1.bf16.msra.mxu0 0
    %5222 = vmatprep.subr.bf16.mxu0 0
    %5223 = vmatpush1.bf16.msra.mxu0 0
    %5224 = vmatprep.subr.bf16.mxu0 0
    %5225 = vmatpush1.bf16.msra.mxu0 0
    %5226 = vmatprep.subr.bf16.mxu0 0
    %5227 = vmatpush1.bf16.msra.mxu0 0
    %5228 = vmatprep.subr.bf16.mxu0 0
    %5229 = vmatpush1.bf16.msra.mxu0 0
    %5230 = vmatprep.subr.bf16.mxu0 0
    %5231 = vmatpush1.bf16.msra.mxu0 0
    %5232 = vmatprep.subr.bf16.mxu0 0
    %5233 = vmatpush1.bf16.msra.mxu0 0
    %5234 = vmatprep.subr.bf16.mxu0 0
    %5235 = vmatpush1.bf16.msra.mxu0 0
    %5236 = vmatprep.subr.bf16.mxu0 0
    %5237 = vmatpush1.bf16.msra.mxu0 0
    %5238 = vmatprep.subr.bf16.mxu0 0
    %5239 = vmatpush1.bf16.msra.mxu0 0
    %5240 = vmatprep.subr.bf16.mxu0 0
    %5241 = vmatpush1.bf16.msra.mxu0 0
    %5242 = vmatprep.subr.bf16.mxu0 0
    %5243 = vmatpush1.bf16.msra.mxu0 0
    %5244 = vmatprep.mubr.bf16.mxu0 0
    %5245 = vmatmul.mubr.bf16.gmra.mrb[0].mxu0 %v5210
    %v5246 = vpop.f32.mrb[0].mxu0
    %v5247 = vadd.f32 %v5180, %v5246
    %v5248 = vpop.f32.mrb[0].mxu0
    %v5249 = vpop.f32.mrb[0].mxu0
    %v5250 = vpop.f32.mrb[0].mxu0
    %5251 = vdwg.mxu0
    %v5252 = vld [vmem:[%s3 + $0x6] sm:$0x1]
    %v5253 = vlaneseq
    %v5254 = vshrl.u32 %v5253, 7
    %v5255 = vsub.s32 0, %v5254
    %v5256 = vrot.slane %v5252, %v5255
    %v5257 = vadd.f32 %v5247, %v5256
    %v5258 = vmax.f32 %v5257, 0.0
    %v5259 = vld [vmem:[%s2 + $0x158] sm:$0xf]
    %v5260 = vld [vmem:[%s2 + $0x15c] sm:$0xf]
    %v5261 = vld [vmem:[%s2 + $0x160] sm:$0xf]
    %v5262 = vld [vmem:[%s2 + $0x164] sm:$0xf]
    %v5263 = vld [vmem:[%s2 + $0x168] sm:$0xf]
    %v5264 = vld [vmem:[%s2 + $0x16c] sm:$0xf]
    %v5265 = vld [vmem:[%s2 + $0x170] sm:$0xf]
    %v5266 = vld [vmem:[%s2 + $0x174] sm:$0xf]
    %v5267 = vpack.c.bf16 %v5258, %v5258
    %v5268 = vld [vmem:[%s3 + $0x7] sm:$0x1]
    %v5269 = vlaneseq
    %v5270 = vshrl.u32 %v5269, 7
    %v5271 = vsub.s32 0, %v5270
    %v5272 = vrot.slane %v5268, %v5271
    %v5281 = vunpack.c.l.b16 %v5259
    %v5282 = vunpack.c.l.b16 %v5260
    %v5283 = vunpack.c.l.b16 %v5261
    %v5284 = vunpack.c.l.b16 %v5262
    %v5285 = vunpack.c.l.b16 %v5263
    %v5286 = vunpack.c.l.b16 %v5264
    %v5287 = vunpack.c.l.b16 %v5265
    %v5288 = vunpack.c.l.b16 %v5266
    %v5289 = vpack.c.b16 %v5282, %v5281
    %v5290 = vpack.c.b16 %v5284, %v5283
    %v5291 = vpack.c.b16 %v5286, %v5285
    %v5292 = vpack.c.b16 %v5288, %v5287
    %v5298 = vsel %vm5141, %v5267, 0
    %5300 = vmatprep.subr.bf16.mxu0 0
    %5301 = vmatpush1.bf16.msra.mxu0 %v5289
    %5302 = vmatprep.subr.bf16.mxu0 0
    %5303 = vmatpush1.bf16.msra.mxu0 %v5290
    %5304 = vmatprep.subr.bf16.mxu0 0
    %5305 = vmatpush1.bf16.msra.mxu0 %v5291
    %5306 = vmatprep.subr.bf16.mxu0 0
    %5307 = vmatpush1.bf16.msra.mxu0 %v5292
    %5308 = vmatprep.subr.bf16.mxu0 0
    %5309 = vmatpush1.bf16.msra.mxu0 0
    %5310 = vmatprep.subr.bf16.mxu0 0
    %5311 = vmatpush1.bf16.msra.mxu0 0
    %5312 = vmatprep.subr.bf16.mxu0 0
    %5313 = vmatpush1.bf16.msra.mxu0 0
    %5314 = vmatprep.subr.bf16.mxu0 0
    %5315 = vmatpush1.bf16.msra.mxu0 0
    %5316 = vmatprep.subr.bf16.mxu0 0
    %5317 = vmatpush1.bf16.msra.mxu0 0
    %5318 = vmatprep.subr.bf16.mxu0 0
    %5319 = vmatpush1.bf16.msra.mxu0 0
    %5320 = vmatprep.subr.bf16.mxu0 0
    %5321 = vmatpush1.bf16.msra.mxu0 0
    %5322 = vmatprep.subr.bf16.mxu0 0
    %5323 = vmatpush1.bf16.msra.mxu0 0
    %5324 = vmatprep.subr.bf16.mxu0 0
    %5325 = vmatpush1.bf16.msra.mxu0 0
    %5326 = vmatprep.subr.bf16.mxu0 0
    %5327 = vmatpush1.bf16.msra.mxu0 0
    %5328 = vmatprep.subr.bf16.mxu0 0
    %5329 = vmatpush1.bf16.msra.mxu0 0
    %5330 = vmatprep.subr.bf16.mxu0 0
    %5331 = vmatpush1.bf16.msra.mxu0 0
    %5332 = vmatprep.mubr.bf16.mxu0 0
    %5333 = vmatmul.mubr.bf16.gmra.mrb[0].mxu0 %v5298
    %v5334 = vpop.f32.mrb[0].mxu0
    %v5335 = vadd.f32 %v5272, %v5334
    %v5336 = vpop.f32.mrb[0].mxu0
    %v5337 = vpop.f32.mrb[0].mxu0
    %v5338 = vpop.f32.mrb[0].mxu0
    %5339 = vdwg.mxu0
    %vm5340 = vcmask 9216
    %v5341 = vsel %vm5340, %v5335, -inf
    %5342 = vmax.xlane.f32.xlu0 %v5341
    %v5343 = vpop.xlane.xlu0 %5342
    %v5344 = vsub.f32 %v5335, %v5343
    %v5345 = vmul.f32 %v5344, 1.442695
    %v5346 = vpow.pop %v5345
    %v5347 = vsel %vm5340, %v5346, 0.0
    %5348 = vadd.xlane.f32.xlu0 %v5347
    %v5349 = vpop.xlane.xlu0 %5348
    %v5350 = vlog2.pop %v5349
    %v5351 = vmul.f32 %v5350, 0.6931472
    %v5352 = vadd.f32 %v5343, %v5351
    %v5353 = vsub.f32 %v5335, %v5352
    %5354 = vst.msk [vmem:[#allocation3] sm:$0x3] %vm5340, %v5353
    // Predicated region
    $region18: #{_lambda_.1} parent=1 // pred_check
      _
    $region19: #{_lambda_.1} parent=1 // pred_check_branch
      %5356 = sbr.rel (0) target = $region21
    $region20: #{_lambda_.1} parent=1 // pred_region
      %s5358 = ssub.s32 32, 32
      %5359 = vsyncadd [#allocation4], %s5358
      %s5361 = sshll.u32 [#allocation3], 4
      %s5362 = int_to_ptr.vmem [resolvable:$true] %s5361
      %5364 = dma.vmem_to_hbm [thread:$0]  %s5362, 32, %s4, [#allocation4]
    $region21: #{_lambda_.1} parent=1 // pred_fallthru
      _
    // Predicated region
    $region22: #{_lambda_.1} parent=1 // pred_check
      _
    $region23: #{_lambda_.1} parent=1 // pred_check_branch
      %5366 = sbr.rel (0) target = $region25
    $region24: #{_lambda_.1} parent=1 // pred_region
      %5367 = dma.done [#allocation4], 32
    $region25: #{_lambda_.1} parent=1 // pred_fallthru
      _
    %5368 = vsyncpa [#allocation4], 1

</llo_original>
